<compile_context>
chip_gen: v5e
topology: v5e:2x2
jax: 0.10.0
libtpu: 0.0.40
codegen_flags: <defaults>
</compile_context>

<pallas_src>
import functools
import math

import jax
import jax.numpy as jnp
from jax import lax
from jax.experimental import pallas as pl
from jax.experimental.pallas import tpu as pltpu


def roberta_attention_kernel(
    x_ref,        # [S, H]   one batch element of hidden_states
    mask_ref,     # [1, S]   additive attention mask (0 keep, large-negative mask)
    wq_ref, bq_ref,
    wk_ref, bk_ref,
    wv_ref, bv_ref,
    wo_ref, bo_ref,
    gamma_ref, beta_ref,
    out_ref,      # [S, H]
    *, num_heads, head_dim, eps,
):
    x = x_ref[...]
    x_f32 = x.astype(jnp.float32)

    # ---- Q / K / V projections (MXU, f32 accumulate) -----------------------
    q = jnp.dot(x, wq_ref[...], preferred_element_type=jnp.float32) + bq_ref[...]
    k = jnp.dot(x, wk_ref[...], preferred_element_type=jnp.float32) + bk_ref[...]
    v = jnp.dot(x, wv_ref[...], preferred_element_type=jnp.float32) + bv_ref[...]

    scale = 1.0 / math.sqrt(head_dim)
    mask = mask_ref[...]                       # [1, S] -> broadcasts over query rows

    # ---- per-head attention (num_heads is small & static -> unrolled) ------
    ctx_parts = []
    for h in range(num_heads):
        lo = h * head_dim
        qh = q[:, lo:lo + head_dim]            # [S, hd]
        kh = k[:, lo:lo + head_dim]            # [S, hd]
        vh = v[:, lo:lo + head_dim]            # [S, hd]

        # scores = qh @ kh.T  (contract on head_dim; no explicit transpose)
        s = lax.dot_general(
            qh, kh, (((1,), (1,)), ((), ())),
            preferred_element_type=jnp.float32,
        ) * scale                              # [S, S]
        s = s + mask

        # numerically-stable softmax; reciprocal goes to the EUP slot
        s = s - jnp.max(s, axis=-1, keepdims=True)
        p = jnp.exp(s)
        p = p * pl.reciprocal(jnp.sum(p, axis=-1, keepdims=True), approx=True)
        # attention-probs dropout: identity at inference

        ctx_parts.append(
            jnp.dot(p, vh, preferred_element_type=jnp.float32)   # [S, hd]
        )

    ctx = jnp.concatenate(ctx_parts, axis=-1)  # [S, H]  (heads merged on lanes)

    # ---- output projection + residual + LayerNorm --------------------------
    o = jnp.dot(ctx.astype(x.dtype), wo_ref[...],
                preferred_element_type=jnp.float32) + bo_ref[...]
    # hidden dropout: identity at inference
    z = o + x_f32
    mu = jnp.mean(z, axis=-1, keepdims=True)
    zc = z - mu
    var = jnp.mean(zc * zc, axis=-1, keepdims=True)
    zn = zc * lax.rsqrt(var + eps)
    y = zn * gamma_ref[...] + beta_ref[...]

    out_ref[...] = y.astype(out_ref.dtype)


def roberta_attention(hidden_states, attention_mask,
                      wq, bq, wk, bk, wv, bv, wo, bo, gamma, beta,
                      *, num_heads, eps=1e-5):
    B, S, H = hidden_states.shape
    assert H % num_heads == 0
    head_dim = H // num_heads

    kernel = functools.partial(
        roberta_attention_kernel,
        num_heads=num_heads, head_dim=head_dim, eps=eps)

    # Per-batch blocks with the batch dim squeezed -> kernel sees [S, H]/[1, S].
    x_spec = pl.BlockSpec((None, S, H), lambda b: (b, 0, 0))
    m_spec = pl.BlockSpec((None, 1, S), lambda b: (b, 0, 0))
    # Weights/biases: constant index_map -> fetched once, stay VMEM-resident.
    w_spec = pl.BlockSpec((H, H), lambda b: (0, 0))
    b_spec = pl.BlockSpec((1, H), lambda b: (0, 0))

    args = (hidden_states, attention_mask,
            wq, bq, wk, bk, wv, bv, wo, bo, gamma, beta)

    out_bytes = B * S * H * jnp.dtype(hidden_states.dtype).itemsize
    cost = pl.CostEstimate(
        flops=B * (8 * S * H * H + 4 * S * S * H),
        transcendentals=B * (num_heads * S * S + S),
        bytes_accessed=sum(int(a.size) * a.dtype.itemsize for a in args) + out_bytes,
    )

    return pl.pallas_call(
        kernel,
        out_shape=jax.ShapeDtypeStruct((B, S, H), hidden_states.dtype),
        grid=(B,),
        in_specs=[x_spec, m_spec,
                  w_spec, b_spec,   # query
                  w_spec, b_spec,   # key
                  w_spec, b_spec,   # value
                  w_spec, b_spec,   # output dense
                  b_spec, b_spec],  # LayerNorm gamma, beta
        out_specs=x_spec,
        compiler_params=pltpu.CompilerParams(
            dimension_semantics=("parallel",),   # v7x: shard batch across 2 TCs
        ),
        cost_estimate=cost,
    )(*args)


def roberta_attention_reference(x, mask, wq, bq, wk, bk, wv, bv, wo, bo,
                                gamma, beta, *, num_heads, eps):
    B, S, H = x.shape
    hd = H // num_heads
    hi = lax.Precision.HIGHEST

    def lin(t, w, b):
        return jnp.einsum("bsh,hk->bsk", t, w, precision=hi) + b

    def split(t):
        return t.reshape(B, S, num_heads, hd).transpose(0, 2, 1, 3)

    q, k, v = split(lin(x, wq, bq)), split(lin(x, wk, bk)), split(lin(x, wv, bv))
    s = jnp.einsum("bnqd,bnkd->bnqk", q, k, precision=hi) / math.sqrt(hd)
    s = s + mask[:, None, :, :]                     # [B,1,1,S]
    p = jax.nn.softmax(s, axis=-1)
    ctx = jnp.einsum("bnqk,bnkd->bnqd", p, v, precision=hi)
    ctx = ctx.transpose(0, 2, 1, 3).reshape(B, S, H)
    o = jnp.einsum("bsh,hk->bsk", ctx, wo, precision=hi) + bo
    z = o + x
    mu = z.mean(-1, keepdims=True)
    var = ((z - mu) ** 2).mean(-1, keepdims=True)
    return (z - mu) / jnp.sqrt(var + eps) * gamma + beta


if __name__ == "__main__":
    # Small RoBERTa-like config: hidden_size=128, num_heads=4, seq_len=128, batch=2.
    B, S, H, NH = 2, 128, 128, 4
    EPS = 1e-5

    key = jax.random.PRNGKey(0)
    ks = jax.random.split(key, 12)

    hidden = jax.random.normal(ks[0], (B, S, H), jnp.float32)

    bound = 1.0 / math.sqrt(H)
    def uni(k, shape):
        return jax.random.uniform(k, shape, jnp.float32, -bound, bound)

    wq, bq = uni(ks[1], (H, H)), uni(ks[2], (1, H))
    wk, bk = uni(ks[3], (H, H)), uni(ks[4], (1, H))
    wv, bv = uni(ks[5], (H, H)), uni(ks[6], (1, H))
    wo, bo = uni(ks[7], (H, H)), uni(ks[8], (1, H))
    gamma = 1.0 + 0.1 * jax.random.normal(ks[9], (1, H), jnp.float32)
    beta = 0.1 * jax.random.normal(ks[10], (1, H), jnp.float32)

    # Additive attention mask (HF convention): 0 = attend, -1e9 = masked.
    # Batch 1 masks its last 32 key positions.
    valid = jnp.ones((B, 1, S), jnp.float32).at[1, 0, S - 32:].set(0.0)
    attn_mask = (1.0 - valid) * (-1e9)

    out = roberta_attention(hidden, attn_mask,
                            wq, bq, wk, bk, wv, bv, wo, bo, gamma, beta,
                            num_heads=NH, eps=EPS)
    out = jax.block_until_ready(out)

    ref = roberta_attention_reference(hidden, attn_mask,
                                      wq, bq, wk, bk, wv, bv, wo, bo,
                                      gamma, beta, num_heads=NH, eps=EPS)

    assert out.shape == (B, S, H)
    max_err = float(jnp.max(jnp.abs(out - ref)))
    assert jnp.allclose(out, ref, atol=3e-2, rtol=3e-2), max_err

    # TODO(synk): output_attentions=True (returning attention_probs) and
    # train-mode dropout RNG are not implemented; this is the inference path.
    print("KERNEL_OK")
</pallas_src>

<mosaic_0001>
module attributes {stable_mosaic.version = 11 : i64} {
  func.func @roberta_attention_kernel(%arg0: i32, %arg1: memref<1x128x128xf32, #tpu.memory_space<vmem>>, %arg2: memref<1x1x128xf32, #tpu.memory_space<vmem>>, %arg3: memref<128x128xf32, #tpu.memory_space<vmem>>, %arg4: memref<1x128xf32, #tpu.memory_space<vmem>>, %arg5: memref<128x128xf32, #tpu.memory_space<vmem>>, %arg6: memref<1x128xf32, #tpu.memory_space<vmem>>, %arg7: memref<128x128xf32, #tpu.memory_space<vmem>>, %arg8: memref<1x128xf32, #tpu.memory_space<vmem>>, %arg9: memref<128x128xf32, #tpu.memory_space<vmem>>, %arg10: memref<1x128xf32, #tpu.memory_space<vmem>>, %arg11: memref<1x128xf32, #tpu.memory_space<vmem>>, %arg12: memref<1x128xf32, #tpu.memory_space<vmem>>, %arg13: memref<1x128x128xf32, #tpu.memory_space<vmem>>) attributes {dimension_semantics = [#tpu.dimension_semantics<parallel>], iteration_bounds = array<i64: 2>, scalar_prefetch = 0 : i64, scratch_operands = 0 : i64, tpu.core_type = #tpu.core_type<tc>, window_params = [{transform_indices = @transform_0, window_bounds = array<i64: 1, 128, 128>}, {transform_indices = @transform_1, window_bounds = array<i64: 1, 1, 128>}, {pipeline_mode = #tpu.pipeline_mode<synchronous>, transform_indices = @transform_2, window_bounds = array<i64: 128, 128>}, {pipeline_mode = #tpu.pipeline_mode<synchronous>, transform_indices = @transform_3, window_bounds = array<i64: 1, 128>}, {pipeline_mode = #tpu.pipeline_mode<synchronous>, transform_indices = @transform_4, window_bounds = array<i64: 128, 128>}, {pipeline_mode = #tpu.pipeline_mode<synchronous>, transform_indices = @transform_5, window_bounds = array<i64: 1, 128>}, {pipeline_mode = #tpu.pipeline_mode<synchronous>, transform_indices = @transform_6, window_bounds = array<i64: 128, 128>}, {pipeline_mode = #tpu.pipeline_mode<synchronous>, transform_indices = @transform_7, window_bounds = array<i64: 1, 128>}, {pipeline_mode = #tpu.pipeline_mode<synchronous>, transform_indices = @transform_8, window_bounds = array<i64: 128, 128>}, {pipeline_mode = #tpu.pipeline_mode<synchronous>, transform_indices = @transform_9, window_bounds = array<i64: 1, 128>}, {pipeline_mode = #tpu.pipeline_mode<synchronous>, transform_indices = @transform_10, window_bounds = array<i64: 1, 128>}, {pipeline_mode = #tpu.pipeline_mode<synchronous>, transform_indices = @transform_11, window_bounds = array<i64: 1, 128>}, {transform_indices = @transform_12, window_bounds = array<i64: 1, 128, 128>}]} {
    %c0 = arith.constant 0 : index
    %c0_0 = arith.constant 0 : index
    %c0_1 = arith.constant 0 : index
    %0 = vector.load %arg1[%c0, %c0_0, %c0_1] : memref<1x128x128xf32, #tpu.memory_space<vmem>>, vector<1x128x128xf32>
    %1 = vector.shape_cast %0 : vector<1x128x128xf32> to vector<128x128xf32>
    %c0_2 = arith.constant 0 : index
    %c0_3 = arith.constant 0 : index
    %2 = vector.load %arg3[%c0_2, %c0_3] : memref<128x128xf32, #tpu.memory_space<vmem>>, vector<128x128xf32>
    %cst = arith.constant dense<0.000000e+00> : vector<128x128xf32>
    %3 = tpu.matmul %1, %2, %cst {dimension_numbers = #tpu.dot_dimension_numbers<[1], [0], [0], [1], [0, 0, 1, 1], [], []>} : vector<128x128xf32>, vector<128x128xf32>, vector<128x128xf32> -> vector<128x128xf32>
    %c0_4 = arith.constant 0 : index
    %c0_5 = arith.constant 0 : index
    %4 = vector.load %arg4[%c0_4, %c0_5] : memref<1x128xf32, #tpu.memory_space<vmem>>, vector<1x128xf32>
    %5 = vector.broadcast %4 : vector<1x128xf32> to vector<128x128xf32>
    %6 = arith.addf %3, %5 : vector<128x128xf32>
    %c0_6 = arith.constant 0 : index
    %c0_7 = arith.constant 0 : index
    %7 = vector.load %arg5[%c0_6, %c0_7] : memref<128x128xf32, #tpu.memory_space<vmem>>, vector<128x128xf32>
    %cst_8 = arith.constant dense<0.000000e+00> : vector<128x128xf32>
    %8 = tpu.matmul %1, %7, %cst_8 {dimension_numbers = #tpu.dot_dimension_numbers<[1], [0], [0], [1], [0, 0, 1, 1], [], []>} : vector<128x128xf32>, vector<128x128xf32>, vector<128x128xf32> -> vector<128x128xf32>
    %c0_9 = arith.constant 0 : index
    %c0_10 = arith.constant 0 : index
    %9 = vector.load %arg6[%c0_9, %c0_10] : memref<1x128xf32, #tpu.memory_space<vmem>>, vector<1x128xf32>
    %10 = vector.broadcast %9 : vector<1x128xf32> to vector<128x128xf32>
    %11 = arith.addf %8, %10 : vector<128x128xf32>
    %c0_11 = arith.constant 0 : index
    %c0_12 = arith.constant 0 : index
    %12 = vector.load %arg7[%c0_11, %c0_12] : memref<128x128xf32, #tpu.memory_space<vmem>>, vector<128x128xf32>
    %cst_13 = arith.constant dense<0.000000e+00> : vector<128x128xf32>
    %13 = tpu.matmul %1, %12, %cst_13 {dimension_numbers = #tpu.dot_dimension_numbers<[1], [0], [0], [1], [0, 0, 1, 1], [], []>} : vector<128x128xf32>, vector<128x128xf32>, vector<128x128xf32> -> vector<128x128xf32>
    %c0_14 = arith.constant 0 : index
    %c0_15 = arith.constant 0 : index
    %14 = vector.load %arg8[%c0_14, %c0_15] : memref<1x128xf32, #tpu.memory_space<vmem>>, vector<1x128xf32>
    %15 = vector.broadcast %14 : vector<1x128xf32> to vector<128x128xf32>
    %16 = arith.addf %13, %15 : vector<128x128xf32>
    %c0_16 = arith.constant 0 : index
    %c0_17 = arith.constant 0 : index
    %c0_18 = arith.constant 0 : index
    %17 = vector.load %arg2[%c0_16, %c0_17, %c0_18] : memref<1x1x128xf32, #tpu.memory_space<vmem>>, vector<1x1x128xf32>
    %18 = vector.shape_cast %17 : vector<1x1x128xf32> to vector<1x128xf32>
    %19 = vector.extract_strided_slice %6 {offsets = [0, 0], sizes = [128, 32], strides = [1, 1]} : vector<128x128xf32> to vector<128x32xf32>
    %20 = vector.extract_strided_slice %11 {offsets = [0, 0], sizes = [128, 32], strides = [1, 1]} : vector<128x128xf32> to vector<128x32xf32>
    %21 = vector.extract_strided_slice %16 {offsets = [0, 0], sizes = [128, 32], strides = [1, 1]} : vector<128x128xf32> to vector<128x32xf32>
    %cst_19 = arith.constant dense<0.000000e+00> : vector<128x128xf32>
    %22 = tpu.matmul %19, %20, %cst_19 {dimension_numbers = #tpu.dot_dimension_numbers<[1], [1], [0], [0], [0, 0, 1, 0], [], []>} : vector<128x32xf32>, vector<128x32xf32>, vector<128x128xf32> -> vector<128x128xf32>
    %cst_20 = arith.constant 0.176776692 : f32
    %23 = vector.broadcast %cst_20 : f32 to vector<128x128xf32>
    %24 = arith.mulf %22, %23 : vector<128x128xf32>
    %25 = vector.broadcast %18 : vector<1x128xf32> to vector<128x128xf32>
    %26 = arith.addf %24, %25 : vector<128x128xf32>
    %cst_21 = arith.constant dense<0xFF800000> : vector<128xf32>
    %27 = vector.multi_reduction <maximumf>, %26, %cst_21 [1] : vector<128x128xf32> to vector<128xf32>
    %28 = vector.shape_cast %27 : vector<128xf32> to vector<128x1xf32>
    %29 = vector.broadcast %28 : vector<128x1xf32> to vector<128x128xf32>
    %30 = arith.subf %26, %29 : vector<128x128xf32>
    %31 = math.exp %30 : vector<128x128xf32>
    %cst_22 = arith.constant dense<0.000000e+00> : vector<128xf32>
    %32 = vector.multi_reduction <add>, %31, %cst_22 [1] : vector<128x128xf32> to vector<128xf32>
    %33 = vector.shape_cast %32 : vector<128xf32> to vector<128x1xf32>
    %34 = tpu.reciprocal %33 {approx = true} : vector<128x1xf32> -> vector<128x1xf32>
    %35 = vector.broadcast %34 : vector<128x1xf32> to vector<128x128xf32>
    %36 = arith.mulf %31, %35 : vector<128x128xf32>
    %cst_23 = arith.constant dense<0.000000e+00> : vector<128x32xf32>
    %37 = tpu.matmul %36, %21, %cst_23 {dimension_numbers = #tpu.dot_dimension_numbers<[1], [0], [0], [1], [0, 0, 1, 1], [], []>} : vector<128x128xf32>, vector<128x32xf32>, vector<128x32xf32> -> vector<128x32xf32>
    %38 = vector.extract_strided_slice %6 {offsets = [0, 32], sizes = [128, 32], strides = [1, 1]} : vector<128x128xf32> to vector<128x32xf32>
    %39 = vector.extract_strided_slice %11 {offsets = [0, 32], sizes = [128, 32], strides = [1, 1]} : vector<128x128xf32> to vector<128x32xf32>
    %40 = vector.extract_strided_slice %16 {offsets = [0, 32], sizes = [128, 32], strides = [1, 1]} : vector<128x128xf32> to vector<128x32xf32>
    %cst_24 = arith.constant dense<0.000000e+00> : vector<128x128xf32>
    %41 = tpu.matmul %38, %39, %cst_24 {dimension_numbers = #tpu.dot_dimension_numbers<[1], [1], [0], [0], [0, 0, 1, 0], [], []>} : vector<128x32xf32>, vector<128x32xf32>, vector<128x128xf32> -> vector<128x128xf32>
    %cst_25 = arith.constant 0.176776692 : f32
    %42 = vector.broadcast %cst_25 : f32 to vector<128x128xf32>
    %43 = arith.mulf %41, %42 : vector<128x128xf32>
    %44 = vector.broadcast %18 : vector<1x128xf32> to vector<128x128xf32>
    %45 = arith.addf %43, %44 : vector<128x128xf32>
    %cst_26 = arith.constant dense<0xFF800000> : vector<128xf32>
    %46 = vector.multi_reduction <maximumf>, %45, %cst_26 [1] : vector<128x128xf32> to vector<128xf32>
    %47 = vector.shape_cast %46 : vector<128xf32> to vector<128x1xf32>
    %48 = vector.broadcast %47 : vector<128x1xf32> to vector<128x128xf32>
    %49 = arith.subf %45, %48 : vector<128x128xf32>
    %50 = math.exp %49 : vector<128x128xf32>
    %cst_27 = arith.constant dense<0.000000e+00> : vector<128xf32>
    %51 = vector.multi_reduction <add>, %50, %cst_27 [1] : vector<128x128xf32> to vector<128xf32>
    %52 = vector.shape_cast %51 : vector<128xf32> to vector<128x1xf32>
    %53 = tpu.reciprocal %52 {approx = true} : vector<128x1xf32> -> vector<128x1xf32>
    %54 = vector.broadcast %53 : vector<128x1xf32> to vector<128x128xf32>
    %55 = arith.mulf %50, %54 : vector<128x128xf32>
    %cst_28 = arith.constant dense<0.000000e+00> : vector<128x32xf32>
    %56 = tpu.matmul %55, %40, %cst_28 {dimension_numbers = #tpu.dot_dimension_numbers<[1], [0], [0], [1], [0, 0, 1, 1], [], []>} : vector<128x128xf32>, vector<128x32xf32>, vector<128x32xf32> -> vector<128x32xf32>
    %57 = vector.extract_strided_slice %6 {offsets = [0, 64], sizes = [128, 32], strides = [1, 1]} : vector<128x128xf32> to vector<128x32xf32>
    %58 = vector.extract_strided_slice %11 {offsets = [0, 64], sizes = [128, 32], strides = [1, 1]} : vector<128x128xf32> to vector<128x32xf32>
    %59 = vector.extract_strided_slice %16 {offsets = [0, 64], sizes = [128, 32], strides = [1, 1]} : vector<128x128xf32> to vector<128x32xf32>
    %cst_29 = arith.constant dense<0.000000e+00> : vector<128x128xf32>
    %60 = tpu.matmul %57, %58, %cst_29 {dimension_numbers = #tpu.dot_dimension_numbers<[1], [1], [0], [0], [0, 0, 1, 0], [], []>} : vector<128x32xf32>, vector<128x32xf32>, vector<128x128xf32> -> vector<128x128xf32>
    %cst_30 = arith.constant 0.176776692 : f32
    %61 = vector.broadcast %cst_30 : f32 to vector<128x128xf32>
    %62 = arith.mulf %60, %61 : vector<128x128xf32>
    %63 = vector.broadcast %18 : vector<1x128xf32> to vector<128x128xf32>
    %64 = arith.addf %62, %63 : vector<128x128xf32>
    %cst_31 = arith.constant dense<0xFF800000> : vector<128xf32>
    %65 = vector.multi_reduction <maximumf>, %64, %cst_31 [1] : vector<128x128xf32> to vector<128xf32>
    %66 = vector.shape_cast %65 : vector<128xf32> to vector<128x1xf32>
    %67 = vector.broadcast %66 : vector<128x1xf32> to vector<128x128xf32>
    %68 = arith.subf %64, %67 : vector<128x128xf32>
    %69 = math.exp %68 : vector<128x128xf32>
    %cst_32 = arith.constant dense<0.000000e+00> : vector<128xf32>
    %70 = vector.multi_reduction <add>, %69, %cst_32 [1] : vector<128x128xf32> to vector<128xf32>
    %71 = vector.shape_cast %70 : vector<128xf32> to vector<128x1xf32>
    %72 = tpu.reciprocal %71 {approx = true} : vector<128x1xf32> -> vector<128x1xf32>
    %73 = vector.broadcast %72 : vector<128x1xf32> to vector<128x128xf32>
    %74 = arith.mulf %69, %73 : vector<128x128xf32>
    %cst_33 = arith.constant dense<0.000000e+00> : vector<128x32xf32>
    %75 = tpu.matmul %74, %59, %cst_33 {dimension_numbers = #tpu.dot_dimension_numbers<[1], [0], [0], [1], [0, 0, 1, 1], [], []>} : vector<128x128xf32>, vector<128x32xf32>, vector<128x32xf32> -> vector<128x32xf32>
    %76 = vector.extract_strided_slice %6 {offsets = [0, 96], sizes = [128, 32], strides = [1, 1]} : vector<128x128xf32> to vector<128x32xf32>
    %77 = vector.extract_strided_slice %11 {offsets = [0, 96], sizes = [128, 32], strides = [1, 1]} : vector<128x128xf32> to vector<128x32xf32>
    %78 = vector.extract_strided_slice %16 {offsets = [0, 96], sizes = [128, 32], strides = [1, 1]} : vector<128x128xf32> to vector<128x32xf32>
    %cst_34 = arith.constant dense<0.000000e+00> : vector<128x128xf32>
    %79 = tpu.matmul %76, %77, %cst_34 {dimension_numbers = #tpu.dot_dimension_numbers<[1], [1], [0], [0], [0, 0, 1, 0], [], []>} : vector<128x32xf32>, vector<128x32xf32>, vector<128x128xf32> -> vector<128x128xf32>
    %cst_35 = arith.constant 0.176776692 : f32
    %80 = vector.broadcast %cst_35 : f32 to vector<128x128xf32>
    %81 = arith.mulf %79, %80 : vector<128x128xf32>
    %82 = vector.broadcast %18 : vector<1x128xf32> to vector<128x128xf32>
    %83 = arith.addf %81, %82 : vector<128x128xf32>
    %cst_36 = arith.constant dense<0xFF800000> : vector<128xf32>
    %84 = vector.multi_reduction <maximumf>, %83, %cst_36 [1] : vector<128x128xf32> to vector<128xf32>
    %85 = vector.shape_cast %84 : vector<128xf32> to vector<128x1xf32>
    %86 = vector.broadcast %85 : vector<128x1xf32> to vector<128x128xf32>
    %87 = arith.subf %83, %86 : vector<128x128xf32>
    %88 = math.exp %87 : vector<128x128xf32>
    %cst_37 = arith.constant dense<0.000000e+00> : vector<128xf32>
    %89 = vector.multi_reduction <add>, %88, %cst_37 [1] : vector<128x128xf32> to vector<128xf32>
    %90 = vector.shape_cast %89 : vector<128xf32> to vector<128x1xf32>
    %91 = tpu.reciprocal %90 {approx = true} : vector<128x1xf32> -> vector<128x1xf32>
    %92 = vector.broadcast %91 : vector<128x1xf32> to vector<128x128xf32>
    %93 = arith.mulf %88, %92 : vector<128x128xf32>
    %cst_38 = arith.constant dense<0.000000e+00> : vector<128x32xf32>
    %94 = tpu.matmul %93, %78, %cst_38 {dimension_numbers = #tpu.dot_dimension_numbers<[1], [0], [0], [1], [0, 0, 1, 1], [], []>} : vector<128x128xf32>, vector<128x32xf32>, vector<128x32xf32> -> vector<128x32xf32>
    %95 = tpu.concatenate %37, %56, %75, %94 in 1 : vector<128x32xf32>, vector<128x32xf32>, vector<128x32xf32>, vector<128x32xf32> -> vector<128x128xf32>
    %c0_39 = arith.constant 0 : index
    %c0_40 = arith.constant 0 : index
    %96 = vector.load %arg9[%c0_39, %c0_40] : memref<128x128xf32, #tpu.memory_space<vmem>>, vector<128x128xf32>
    %cst_41 = arith.constant dense<0.000000e+00> : vector<128x128xf32>
    %97 = tpu.matmul %95, %96, %cst_41 {dimension_numbers = #tpu.dot_dimension_numbers<[1], [0], [0], [1], [0, 0, 1, 1], [], []>} : vector<128x128xf32>, vector<128x128xf32>, vector<128x128xf32> -> vector<128x128xf32>
    %c0_42 = arith.constant 0 : index
    %c0_43 = arith.constant 0 : index
    %98 = vector.load %arg10[%c0_42, %c0_43] : memref<1x128xf32, #tpu.memory_space<vmem>>, vector<1x128xf32>
    %99 = vector.broadcast %98 : vector<1x128xf32> to vector<128x128xf32>
    %100 = arith.addf %97, %99 : vector<128x128xf32>
    %101 = arith.addf %100, %1 : vector<128x128xf32>
    %cst_44 = arith.constant dense<0.000000e+00> : vector<128xf32>
    %102 = vector.multi_reduction <add>, %101, %cst_44 [1] : vector<128x128xf32> to vector<128xf32>
    %103 = vector.shape_cast %102 : vector<128xf32> to vector<128x1xf32>
    %cst_45 = arith.constant 1.280000e+02 : f32
    %104 = vector.broadcast %cst_45 : f32 to vector<128x1xf32>
    %105 = arith.divf %103, %104 : vector<128x1xf32>
    %106 = vector.broadcast %105 : vector<128x1xf32> to vector<128x128xf32>
    %107 = arith.subf %101, %106 : vector<128x128xf32>
    %108 = arith.mulf %107, %107 : vector<128x128xf32>
    %cst_46 = arith.constant dense<0.000000e+00> : vector<128xf32>
    %109 = vector.multi_reduction <add>, %108, %cst_46 [1] : vector<128x128xf32> to vector<128xf32>
    %110 = vector.shape_cast %109 : vector<128xf32> to vector<128x1xf32>
    %cst_47 = arith.constant 1.280000e+02 : f32
    %111 = vector.broadcast %cst_47 : f32 to vector<128x1xf32>
    %112 = arith.divf %110, %111 : vector<128x1xf32>
    %cst_48 = arith.constant 9.99999974E-6 : f32
    %113 = vector.broadcast %cst_48 : f32 to vector<128x1xf32>
    %114 = arith.addf %112, %113 : vector<128x1xf32>
    %115 = math.rsqrt %114 : vector<128x1xf32>
    %116 = vector.broadcast %115 : vector<128x1xf32> to vector<128x128xf32>
    %117 = arith.mulf %107, %116 : vector<128x128xf32>
    %c0_49 = arith.constant 0 : index
    %c0_50 = arith.constant 0 : index
    %118 = vector.load %arg11[%c0_49, %c0_50] : memref<1x128xf32, #tpu.memory_space<vmem>>, vector<1x128xf32>
    %119 = vector.broadcast %118 : vector<1x128xf32> to vector<128x128xf32>
    %120 = arith.mulf %117, %119 : vector<128x128xf32>
    %c0_51 = arith.constant 0 : index
    %c0_52 = arith.constant 0 : index
    %121 = vector.load %arg12[%c0_51, %c0_52] : memref<1x128xf32, #tpu.memory_space<vmem>>, vector<1x128xf32>
    %122 = vector.broadcast %121 : vector<1x128xf32> to vector<128x128xf32>
    %123 = arith.addf %120, %122 : vector<128x128xf32>
    %c0_53 = arith.constant 0 : index
    %c0_54 = arith.constant 0 : index
    %c0_55 = arith.constant 0 : index
    %124 = vector.load %arg13[%c0_53, %c0_54, %c0_55] : memref<1x128x128xf32, #tpu.memory_space<vmem>>, vector<1x128x128xf32>
    %125 = vector.shape_cast %124 : vector<1x128x128xf32> to vector<128x128xf32>
    %126 = vector.shape_cast %123 : vector<128x128xf32> to vector<1x128x128xf32>
    tpu.vector_store %arg13[%c0_53, %c0_54, %c0_55], %126 {strides = array<i32>} : memref<1x128x128xf32, #tpu.memory_space<vmem>>, vector<1x128x128xf32>,
    return
  }
  func.func @transform_0(%arg0: i32) -> (i32, i32, i32) {
    %c0_i32 = arith.constant 0 : i32
    %c0_i32_0 = arith.constant 0 : i32
    %c0_i32_1 = arith.constant 0 : i32
    return %arg0, %c0_i32, %c0_i32_0 : i32, i32, i32
  }
  func.func @transform_1(%arg0: i32) -> (i32, i32, i32) {
    %c0_i32 = arith.constant 0 : i32
    %c0_i32_0 = arith.constant 0 : i32
    %c0_i32_1 = arith.constant 0 : i32
    return %arg0, %c0_i32, %c0_i32_0 : i32, i32, i32
  }
  func.func @transform_2(%arg0: i32) -> (i32, i32) {
    %c0_i32 = arith.constant 0 : i32
    %c0_i32_0 = arith.constant 0 : i32
    %c0_i32_1 = arith.constant 0 : i32
    return %c0_i32, %c0_i32_0 : i32, i32
  }
  func.func @transform_3(%arg0: i32) -> (i32, i32) {
    %c0_i32 = arith.constant 0 : i32
    %c0_i32_0 = arith.constant 0 : i32
    %c0_i32_1 = arith.constant 0 : i32
    return %c0_i32, %c0_i32_0 : i32, i32
  }
  func.func @transform_4(%arg0: i32) -> (i32, i32) {
    %c0_i32 = arith.constant 0 : i32
    %c0_i32_0 = arith.constant 0 : i32
    %c0_i32_1 = arith.constant 0 : i32
    return %c0_i32, %c0_i32_0 : i32, i32
  }
  func.func @transform_5(%arg0: i32) -> (i32, i32) {
    %c0_i32 = arith.constant 0 : i32
    %c0_i32_0 = arith.constant 0 : i32
    %c0_i32_1 = arith.constant 0 : i32
    return %c0_i32, %c0_i32_0 : i32, i32
  }
  func.func @transform_6(%arg0: i32) -> (i32, i32) {
    %c0_i32 = arith.constant 0 : i32
    %c0_i32_0 = arith.constant 0 : i32
    %c0_i32_1 = arith.constant 0 : i32
    return %c0_i32, %c0_i32_0 : i32, i32
  }
  func.func @transform_7(%arg0: i32) -> (i32, i32) {
    %c0_i32 = arith.constant 0 : i32
    %c0_i32_0 = arith.constant 0 : i32
    %c0_i32_1 = arith.constant 0 : i32
    return %c0_i32, %c0_i32_0 : i32, i32
  }
  func.func @transform_8(%arg0: i32) -> (i32, i32) {
    %c0_i32 = arith.constant 0 : i32
    %c0_i32_0 = arith.constant 0 : i32
    %c0_i32_1 = arith.constant 0 : i32
    return %c0_i32, %c0_i32_0 : i32, i32
  }
  func.func @transform_9(%arg0: i32) -> (i32, i32) {
    %c0_i32 = arith.constant 0 : i32
    %c0_i32_0 = arith.constant 0 : i32
    %c0_i32_1 = arith.constant 0 : i32
    return %c0_i32, %c0_i32_0 : i32, i32
  }
  func.func @transform_10(%arg0: i32) -> (i32, i32) {
    %c0_i32 = arith.constant 0 : i32
    %c0_i32_0 = arith.constant 0 : i32
    %c0_i32_1 = arith.constant 0 : i32
    return %c0_i32, %c0_i32_0 : i32, i32
  }
  func.func @transform_11(%arg0: i32) -> (i32, i32) {
    %c0_i32 = arith.constant 0 : i32
    %c0_i32_0 = arith.constant 0 : i32
    %c0_i32_1 = arith.constant 0 : i32
    return %c0_i32, %c0_i32_0 : i32, i32
  }
  func.func @transform_12(%arg0: i32) -> (i32, i32, i32) {
    %c0_i32 = arith.constant 0 : i32
    %c0_i32_0 = arith.constant 0 : i32
    %c0_i32_1 = arith.constant 0 : i32
    return %arg0, %c0_i32, %c0_i32_0 : i32, i32, i32
  }
}

</mosaic_0001>

<llo_original>
// kernel: tpu_custom_call.1
$region0: #{tpu_custom_call.1}
  #allocation0 [shape = 'u32[]', space=smem, size = 0x4, offset = 0x4, fixed_abs, tag = 'smem constant byte address 0x4 - core index']
  #allocation1 [shape = 'u32[72,128]{1,0:T(1,128)}', space=vmem, size = 0x9000, scoped, tag = 'internal scratch']
  %s0 = inlined_call_operand.hbm [shape: f32[2,128,128], index: 0, kind: input, shape index: {}]
  %s1 = inlined_call_operand.hbm [shape: f32[2,1,128], index: 1, kind: input, shape index: {}]
  %s2 = inlined_call_operand.hbm [shape: f32[128,128], index: 2, kind: input, shape index: {}]
  %s3 = inlined_call_operand.vmem [shape: f32[1,128], index: 3, kind: input, shape index: {}]
  %s4 = inlined_call_operand.hbm [shape: f32[128,128], index: 4, kind: input, shape index: {}]
  %s5 = inlined_call_operand.vmem [shape: f32[1,128], index: 5, kind: input, shape index: {}]
  %s6 = inlined_call_operand.hbm [shape: f32[128,128], index: 6, kind: input, shape index: {}]
  %s7 = inlined_call_operand.vmem [shape: f32[1,128], index: 7, kind: input, shape index: {}]
  %s8 = inlined_call_operand.hbm [shape: f32[128,128], index: 8, kind: input, shape index: {}]
  %s9 = inlined_call_operand.vmem [shape: f32[1,128], index: 9, kind: input, shape index: {}]
  %s10 = inlined_call_operand.vmem [shape: f32[1,128], index: 10, kind: input, shape index: {}]
  %s11 = inlined_call_operand.vmem [shape: f32[1,128], index: 11, kind: input, shape index: {}]
  %s12 = inlined_call_operand.hbm [shape: f32[2,128,128], index: 12, kind: output, shape index: {}]
  %s13 = sld [smem:[#allocation0]]
  $region105: #{tpu_custom_call.1} parent=0
    _
  %s15 = ssub.s32 1, %s13
  %s16 = scalar_select 0, %s15, %s13
  $region1: #{tpu_custom_call.1} parent=0
    #allocation2 [shape = 'u8[131072]{0}', space=vmem, size = 0x20000, scoped, tag = 'input window, operand 0']
    #allocation3 [shape = 's32[2]{0}', space=sflag, size = 0x8, scoped, tag = 'scoped memory for tpu_custom_call.1']
    #allocation4 [shape = 's32[2]{0}', space=sflag, size = 0x8, scoped, tag = 'scoped memory for tpu_custom_call.1']
    #allocation5 [shape = 'u8[1024]{0}', space=vmem, size = 0x400, scoped, tag = 'input window, operand 1']
    #allocation6 [shape = 's32[2]{0}', space=sflag, size = 0x8, scoped, tag = 'scoped memory for tpu_custom_call.1']
    #allocation7 [shape = 'u8[65536]{0}', space=vmem, size = 0x10000, scoped, tag = 'input window, operand 2, single buffered']
    #allocation8 [shape = 'u8[65536]{0}', space=vmem, size = 0x10000, scoped, tag = 'input window, operand 4, single buffered']
    #allocation9 [shape = 's32[1]{0}', space=sflag, size = 0x4, scoped, tag = 'scoped memory for tpu_custom_call.1']
    #allocation10 [shape = 'u8[65536]{0}', space=vmem, size = 0x10000, scoped, tag = 'input window, operand 6, single buffered']
    #allocation11 [shape = 'u8[65536]{0}', space=vmem, size = 0x10000, scoped, tag = 'input window, operand 8, single buffered']
    #allocation12 [shape = 's32[1]{0}', space=sflag, size = 0x4, scoped, tag = 'scoped memory for tpu_custom_call.1']
    #allocation13 [shape = 'u8[131072]{0}', space=vmem, size = 0x20000, scoped, tag = 'output window, operand 0']
    %17 = vsyncpa [#allocation3], 0
    %s18 = scalar_lea.sflag [#allocation3], 1
    %19 = vsyncpa %s18, 0
    %20 = vsyncpa [#allocation6], 0
    %s21 = scalar_lea.sflag [#allocation6], 1
    %22 = vsyncpa %s21, 0
    %23 = vsyncpa [#allocation9], 0
    %24 = vsyncpa [#allocation12], 0
    %25 = vsyncpa [#allocation4], 0
    %s26 = scalar_lea.sflag [#allocation4], 1
    %27 = vsyncpa %s26, 0
    loop: start=0, step=1, limit=4
    $region2: #{tpu_custom_call.1} parent=1 // loop_pre_header
      _
    $region3: #{tpu_custom_call.1} parent=1 // loop_header
      %s29 = sphi 0, %s33
      %p30 = scmp.ge.s32.totalorder %s29, 4
      %s39 = sphi 0, %s41
      %s42 = sphi 0, %s39
      %s43 = sphi 0, %s42
      %s59 = sphi 0, %s43
      %s65 = sphi 0, %s67
      %s68 = sphi 0, %s65
      %s69 = sphi 0, %s68
      %s85 = sphi 0, %s69
      %s89 = sphi 0, %s89
      %s91 = sphi 0, %s89
      %s92 = sphi 0, %s91
      %s106 = sphi 0, %s92
      %s110 = sphi 0, %s110
      %s112 = sphi 0, %s110
      %s113 = sphi 0, %s112
      %s127 = sphi 0, %s113
      %s131 = sphi 0, %s131
      %s133 = sphi 0, %s131
      %s134 = sphi 0, %s133
      %s148 = sphi 0, %s134
      %s152 = sphi 0, %s152
      %s154 = sphi 0, %s152
      %s155 = sphi 0, %s154
      %s169 = sphi 0, %s155
      %s173 = sphi 0, %s173
      %s175 = sphi 0, %s173
      %s176 = sphi 0, %s175
      %s190 = sphi 0, %s176
      %s194 = sphi 0, %s194
      %s196 = sphi 0, %s194
      %s197 = sphi 0, %s196
      %s211 = sphi 0, %s197
      %s215 = sphi 0, %s215
      %s217 = sphi 0, %s215
      %s218 = sphi 0, %s217
      %s232 = sphi 0, %s218
      %s236 = sphi 0, %s236
      %s238 = sphi 0, %s236
      %s239 = sphi 0, %s238
      %s253 = sphi 0, %s239
      %s257 = sphi 0, %s257
      %s259 = sphi 0, %s257
      %s260 = sphi 0, %s259
      %s274 = sphi 0, %s260
      %s278 = sphi 0, %s278
      %s280 = sphi 0, %s278
      %s281 = sphi 0, %s280
      %s295 = sphi 0, %s281
      %s301 = sphi 0, %s303
      %s304 = sphi 0, %s301
      %s305 = sphi 0, %s304
      %s321 = sphi 0, %s305
    $region4: #{tpu_custom_call.1} parent=1 // loop_header_branch
      %32 = sbr.rel (%p30) target = $region8
    $region5: #{tpu_custom_call.1} parent=1 // loop_body
      %s34 = ssub.s32 %s29, 1
      %s35 = ssub.s32 %s29, 2
      %s36 = sadd.s32 %s29, 1
      %s37 = ssub.s32 %s29, %s36
      %p38 = scmp.eq.s32.totalorder %s37, 0
      %s40 = sadd.s32 %s39, 1
      %s41 = scalar_select %p38, %s39, %s40
      %p44 = pneg %p38
      %p45 = scmp.eq.s32.totalorder %s29, 1
      %p46 = por %p44, %p45
      %p47 = scmp.ne.s32.totalorder %s39, %s42
      %p48 = scmp.eq.s32.totalorder %s29, 0
      %p49 = por %p47, %p48
      %p50 = scmp.ne.s32.totalorder %s39, %s42
      %p51 = scmp.eq.s32.totalorder %s34, 1
      %p52 = por %p50, %p51
      %p53 = scmp.ne.s32.totalorder %s42, %s43
      %p54 = scmp.eq.s32.totalorder %s34, 0
      %p55 = por %p53, %p54
      %p56 = scmp.ne.s32.totalorder %s42, %s43
      %p57 = scmp.eq.s32.totalorder %s35, 1
      %p58 = por %p56, %p57
      %p60 = scmp.ne.s32.totalorder %s43, %s59
      %p61 = scmp.eq.s32.totalorder %s35, 0
      %p62 = por %p60, %p61
      %s63 = ssub.s32 %s29, %s36
      %p64 = scmp.eq.s32.totalorder %s63, 0
      %s66 = sadd.s32 %s65, 1
      %s67 = scalar_select %p64, %s65, %s66
      %p70 = pneg %p64
      %p71 = scmp.eq.s32.totalorder %s29, 1
      %p72 = por %p70, %p71
      %p73 = scmp.ne.s32.totalorder %s65, %s68
      %p74 = scmp.eq.s32.totalorder %s29, 0
      %p75 = por %p73, %p74
      %p76 = scmp.ne.s32.totalorder %s65, %s68
      %p77 = scmp.eq.s32.totalorder %s34, 1
      %p78 = por %p76, %p77
      %p79 = scmp.ne.s32.totalorder %s68, %s69
      %p80 = scmp.eq.s32.totalorder %s34, 0
      %p81 = por %p79, %p80
      %p82 = scmp.ne.s32.totalorder %s68, %s69
      %p83 = scmp.eq.s32.totalorder %s35, 1
      %p84 = por %p82, %p83
      %p86 = scmp.ne.s32.totalorder %s69, %s85
      %p87 = scmp.eq.s32.totalorder %s35, 0
      %p88 = por %p86, %p87
      %s90 = sadd.s32 %s89, 1
      %p93 = scmp.eq.s32.totalorder %s29, 1
      %p94 = scmp.ne.s32.totalorder %s89, %s91
      %p95 = scmp.eq.s32.totalorder %s29, 0
      %p96 = por %p94, %p95
      %p97 = scmp.ne.s32.totalorder %s89, %s91
      %p98 = scmp.eq.s32.totalorder %s34, 1
      %p99 = por %p97, %p98
      %p100 = scmp.ne.s32.totalorder %s91, %s92
      %p101 = scmp.eq.s32.totalorder %s34, 0
      %p102 = por %p100, %p101
      %p103 = scmp.ne.s32.totalorder %s91, %s92
      %p104 = scmp.eq.s32.totalorder %s35, 1
      %p105 = por %p103, %p104
      %p107 = scmp.ne.s32.totalorder %s92, %s106
      %p108 = scmp.eq.s32.totalorder %s35, 0
      %p109 = por %p107, %p108
      %s111 = sadd.s32 %s110, 1
      %p114 = scmp.eq.s32.totalorder %s29, 1
      %p115 = scmp.ne.s32.totalorder %s110, %s112
      %p116 = scmp.eq.s32.totalorder %s29, 0
      %p117 = por %p115, %p116
      %p118 = scmp.ne.s32.totalorder %s110, %s112
      %p119 = scmp.eq.s32.totalorder %s34, 1
      %p120 = por %p118, %p119
      %p121 = scmp.ne.s32.totalorder %s112, %s113
      %p122 = scmp.eq.s32.totalorder %s34, 0
      %p123 = por %p121, %p122
      %p124 = scmp.ne.s32.totalorder %s112, %s113
      %p125 = scmp.eq.s32.totalorder %s35, 1
      %p126 = por %p124, %p125
      %p128 = scmp.ne.s32.totalorder %s113, %s127
      %p129 = scmp.eq.s32.totalorder %s35, 0
      %p130 = por %p128, %p129
      %s132 = sadd.s32 %s131, 1
      %p135 = scmp.eq.s32.totalorder %s29, 1
      %p136 = scmp.ne.s32.totalorder %s131, %s133
      %p137 = scmp.eq.s32.totalorder %s29, 0
      %p138 = por %p136, %p137
      %p139 = scmp.ne.s32.totalorder %s131, %s133
      %p140 = scmp.eq.s32.totalorder %s34, 1
      %p141 = por %p139, %p140
      %p142 = scmp.ne.s32.totalorder %s133, %s134
      %p143 = scmp.eq.s32.totalorder %s34, 0
      %p144 = por %p142, %p143
      %p145 = scmp.ne.s32.totalorder %s133, %s134
      %p146 = scmp.eq.s32.totalorder %s35, 1
      %p147 = por %p145, %p146
      %p149 = scmp.ne.s32.totalorder %s134, %s148
      %p150 = scmp.eq.s32.totalorder %s35, 0
      %p151 = por %p149, %p150
      %s153 = sadd.s32 %s152, 1
      %p156 = scmp.eq.s32.totalorder %s29, 1
      %p157 = scmp.ne.s32.totalorder %s152, %s154
      %p158 = scmp.eq.s32.totalorder %s29, 0
      %p159 = por %p157, %p158
      %p160 = scmp.ne.s32.totalorder %s152, %s154
      %p161 = scmp.eq.s32.totalorder %s34, 1
      %p162 = por %p160, %p161
      %p163 = scmp.ne.s32.totalorder %s154, %s155
      %p164 = scmp.eq.s32.totalorder %s34, 0
      %p165 = por %p163, %p164
      %p166 = scmp.ne.s32.totalorder %s154, %s155
      %p167 = scmp.eq.s32.totalorder %s35, 1
      %p168 = por %p166, %p167
      %p170 = scmp.ne.s32.totalorder %s155, %s169
      %p171 = scmp.eq.s32.totalorder %s35, 0
      %p172 = por %p170, %p171
      %s174 = sadd.s32 %s173, 1
      %p177 = scmp.eq.s32.totalorder %s29, 1
      %p178 = scmp.ne.s32.totalorder %s173, %s175
      %p179 = scmp.eq.s32.totalorder %s29, 0
      %p180 = por %p178, %p179
      %p181 = scmp.ne.s32.totalorder %s173, %s175
      %p182 = scmp.eq.s32.totalorder %s34, 1
      %p183 = por %p181, %p182
      %p184 = scmp.ne.s32.totalorder %s175, %s176
      %p185 = scmp.eq.s32.totalorder %s34, 0
      %p186 = por %p184, %p185
      %p187 = scmp.ne.s32.totalorder %s175, %s176
      %p188 = scmp.eq.s32.totalorder %s35, 1
      %p189 = por %p187, %p188
      %p191 = scmp.ne.s32.totalorder %s176, %s190
      %p192 = scmp.eq.s32.totalorder %s35, 0
      %p193 = por %p191, %p192
      %s195 = sadd.s32 %s194, 1
      %p198 = scmp.eq.s32.totalorder %s29, 1
      %p199 = scmp.ne.s32.totalorder %s194, %s196
      %p200 = scmp.eq.s32.totalorder %s29, 0
      %p201 = por %p199, %p200
      %p202 = scmp.ne.s32.totalorder %s194, %s196
      %p203 = scmp.eq.s32.totalorder %s34, 1
      %p204 = por %p202, %p203
      %p205 = scmp.ne.s32.totalorder %s196, %s197
      %p206 = scmp.eq.s32.totalorder %s34, 0
      %p207 = por %p205, %p206
      %p208 = scmp.ne.s32.totalorder %s196, %s197
      %p209 = scmp.eq.s32.totalorder %s35, 1
      %p210 = por %p208, %p209
      %p212 = scmp.ne.s32.totalorder %s197, %s211
      %p213 = scmp.eq.s32.totalorder %s35, 0
      %p214 = por %p212, %p213
      %s216 = sadd.s32 %s215, 1
      %p219 = scmp.eq.s32.totalorder %s29, 1
      %p220 = scmp.ne.s32.totalorder %s215, %s217
      %p221 = scmp.eq.s32.totalorder %s29, 0
      %p222 = por %p220, %p221
      %p223 = scmp.ne.s32.totalorder %s215, %s217
      %p224 = scmp.eq.s32.totalorder %s34, 1
      %p225 = por %p223, %p224
      %p226 = scmp.ne.s32.totalorder %s217, %s218
      %p227 = scmp.eq.s32.totalorder %s34, 0
      %p228 = por %p226, %p227
      %p229 = scmp.ne.s32.totalorder %s217, %s218
      %p230 = scmp.eq.s32.totalorder %s35, 1
      %p231 = por %p229, %p230
      %p233 = scmp.ne.s32.totalorder %s218, %s232
      %p234 = scmp.eq.s32.totalorder %s35, 0
      %p235 = por %p233, %p234
      %s237 = sadd.s32 %s236, 1
      %p240 = scmp.eq.s32.totalorder %s29, 1
      %p241 = scmp.ne.s32.totalorder %s236, %s238
      %p242 = scmp.eq.s32.totalorder %s29, 0
      %p243 = por %p241, %p242
      %p244 = scmp.ne.s32.totalorder %s236, %s238
      %p245 = scmp.eq.s32.totalorder %s34, 1
      %p246 = por %p244, %p245
      %p247 = scmp.ne.s32.totalorder %s238, %s239
      %p248 = scmp.eq.s32.totalorder %s34, 0
      %p249 = por %p247, %p248
      %p250 = scmp.ne.s32.totalorder %s238, %s239
      %p251 = scmp.eq.s32.totalorder %s35, 1
      %p252 = por %p250, %p251
      %p254 = scmp.ne.s32.totalorder %s239, %s253
      %p255 = scmp.eq.s32.totalorder %s35, 0
      %p256 = por %p254, %p255
      %s258 = sadd.s32 %s257, 1
      %p261 = scmp.eq.s32.totalorder %s29, 1
      %p262 = scmp.ne.s32.totalorder %s257, %s259
      %p263 = scmp.eq.s32.totalorder %s29, 0
      %p264 = por %p262, %p263
      %p265 = scmp.ne.s32.totalorder %s257, %s259
      %p266 = scmp.eq.s32.totalorder %s34, 1
      %p267 = por %p265, %p266
      %p268 = scmp.ne.s32.totalorder %s259, %s260
      %p269 = scmp.eq.s32.totalorder %s34, 0
      %p270 = por %p268, %p269
      %p271 = scmp.ne.s32.totalorder %s259, %s260
      %p272 = scmp.eq.s32.totalorder %s35, 1
      %p273 = por %p271, %p272
      %p275 = scmp.ne.s32.totalorder %s260, %s274
      %p276 = scmp.eq.s32.totalorder %s35, 0
      %p277 = por %p275, %p276
      %s279 = sadd.s32 %s278, 1
      %p282 = scmp.eq.s32.totalorder %s29, 1
      %p283 = scmp.ne.s32.totalorder %s278, %s280
      %p284 = scmp.eq.s32.totalorder %s29, 0
      %p285 = por %p283, %p284
      %p286 = scmp.ne.s32.totalorder %s278, %s280
      %p287 = scmp.eq.s32.totalorder %s34, 1
      %p288 = por %p286, %p287
      %p289 = scmp.ne.s32.totalorder %s280, %s281
      %p290 = scmp.eq.s32.totalorder %s34, 0
      %p291 = por %p289, %p290
      %p292 = scmp.ne.s32.totalorder %s280, %s281
      %p293 = scmp.eq.s32.totalorder %s35, 1
      %p294 = por %p292, %p293
      %p296 = scmp.ne.s32.totalorder %s281, %s295
      %p297 = scmp.eq.s32.totalorder %s35, 0
      %p298 = por %p296, %p297
      %s299 = ssub.s32 %s29, %s36
      %p300 = scmp.eq.s32.totalorder %s299, 0
      %s302 = sadd.s32 %s301, 1
      %s303 = scalar_select %p300, %s301, %s302
      %p306 = pneg %p300
      %p307 = scmp.eq.s32.totalorder %s29, 1
      %p308 = por %p306, %p307
      %p309 = scmp.ne.s32.totalorder %s301, %s304
      %p310 = scmp.eq.s32.totalorder %s29, 0
      %p311 = por %p309, %p310
      %p312 = scmp.ne.s32.totalorder %s301, %s304
      %p313 = scmp.eq.s32.totalorder %s34, 1
      %p314 = por %p312, %p313
      %p315 = scmp.ne.s32.totalorder %s304, %s305
      %p316 = scmp.eq.s32.totalorder %s34, 0
      %p317 = por %p315, %p316
      %p318 = scmp.ne.s32.totalorder %s304, %s305
      %p319 = scmp.eq.s32.totalorder %s35, 1
      %p320 = por %p318, %p319
      %p322 = scmp.ne.s32.totalorder %s305, %s321
      %p323 = scmp.eq.s32.totalorder %s35, 0
      %p324 = por %p322, %p323
      %p325 = scmp.le.s32.totalorder 1, %s29
      %p326 = scmp.lt.s32.totalorder %s29, 3
      %p327 = pnand %p325, %p326
      %p328 = pneg %p327
      // Predicated region
      $region9: #{tpu_custom_call.1} parent=5 // pred_check
        _
      $region10: #{tpu_custom_call.1} parent=5 // pred_check_branch
        %330 = sbr.rel (%p327) target = $region12
      $region11: #{tpu_custom_call.1} parent=5 // pred_region
        %s331 = ssub.s32 %s29, 1
        // Predicated region
        $region13: #{tpu_custom_call.1} parent=11 // pred_check
          %p332 = pneg %p102
        $region14: #{tpu_custom_call.1} parent=11 // pred_check_branch
          %334 = sbr.rel (%p332) target = $region16
        $region15: #{tpu_custom_call.1} parent=11 // pred_region
          %336 = vsyncadd [#allocation6], 0
          %s337 = sshll.u32 %s2, 4
          %s338 = int_to_ptr.hbm [resolvable:$true] %s337
          %s339 = sshll.u32 [#allocation7], 4
          %s340 = int_to_ptr.vmem [resolvable:$true] %s339
          %345 = dma.hbm_to_vmem [thread:$0]  %s338, 2048, %s340, [#allocation6], 128, 128, 8
        $region16: #{tpu_custom_call.1} parent=11 // pred_fallthru
          _
        // Predicated region
        $region17: #{tpu_custom_call.1} parent=11 // pred_check
          %p346 = pneg %p123
        $region18: #{tpu_custom_call.1} parent=11 // pred_check_branch
          %348 = sbr.rel (%p346) target = $region20
        $region19: #{tpu_custom_call.1} parent=11 // pred_region
          _
        $region20: #{tpu_custom_call.1} parent=11 // pred_fallthru
          _
        // Predicated region
        $region21: #{tpu_custom_call.1} parent=11 // pred_check
          %p349 = pneg %p144
        $region22: #{tpu_custom_call.1} parent=11 // pred_check_branch
          %351 = sbr.rel (%p349) target = $region24
        $region23: #{tpu_custom_call.1} parent=11 // pred_region
          %353 = vsyncadd [#allocation9], 0
          %s354 = sshll.u32 %s4, 4
          %s355 = int_to_ptr.hbm [resolvable:$true] %s354
          %s356 = sshll.u32 [#allocation8], 4
          %s357 = int_to_ptr.vmem [resolvable:$true] %s356
          %362 = dma.hbm_to_vmem [thread:$0]  %s355, 2048, %s357, [#allocation9], 128, 128, 8
        $region24: #{tpu_custom_call.1} parent=11 // pred_fallthru
          _
        // Predicated region
        $region25: #{tpu_custom_call.1} parent=11 // pred_check
          %p363 = pneg %p165
        $region26: #{tpu_custom_call.1} parent=11 // pred_check_branch
          %365 = sbr.rel (%p363) target = $region28
        $region27: #{tpu_custom_call.1} parent=11 // pred_region
          _
        $region28: #{tpu_custom_call.1} parent=11 // pred_fallthru
          _
        // Predicated region
        $region29: #{tpu_custom_call.1} parent=11 // pred_check
          %p366 = pneg %p186
        $region30: #{tpu_custom_call.1} parent=11 // pred_check_branch
          %368 = sbr.rel (%p366) target = $region32
        $region31: #{tpu_custom_call.1} parent=11 // pred_region
          %370 = vsyncadd [#allocation9], 0
          %s371 = sshll.u32 %s6, 4
          %s372 = int_to_ptr.hbm [resolvable:$true] %s371
          %s373 = sshll.u32 [#allocation10], 4
          %s374 = int_to_ptr.vmem [resolvable:$true] %s373
          %379 = dma.hbm_to_vmem [thread:$0]  %s372, 2048, %s374, [#allocation9], 128, 128, 8
        $region32: #{tpu_custom_call.1} parent=11 // pred_fallthru
          _
        // Predicated region
        $region33: #{tpu_custom_call.1} parent=11 // pred_check
          %p380 = pneg %p207
        $region34: #{tpu_custom_call.1} parent=11 // pred_check_branch
          %382 = sbr.rel (%p380) target = $region36
        $region35: #{tpu_custom_call.1} parent=11 // pred_region
          _
        $region36: #{tpu_custom_call.1} parent=11 // pred_fallthru
          _
        // Predicated region
        $region37: #{tpu_custom_call.1} parent=11 // pred_check
          %p383 = pneg %p228
        $region38: #{tpu_custom_call.1} parent=11 // pred_check_branch
          %385 = sbr.rel (%p383) target = $region40
        $region39: #{tpu_custom_call.1} parent=11 // pred_region
          %387 = vsyncadd [#allocation12], 0
          %s388 = sshll.u32 %s8, 4
          %s389 = int_to_ptr.hbm [resolvable:$true] %s388
          %s390 = sshll.u32 [#allocation11], 4
          %s391 = int_to_ptr.vmem [resolvable:$true] %s390
          %396 = dma.hbm_to_vmem [thread:$0]  %s389, 2048, %s391, [#allocation12], 128, 128, 8
        $region40: #{tpu_custom_call.1} parent=11 // pred_fallthru
          _
        // Predicated region
        $region41: #{tpu_custom_call.1} parent=11 // pred_check
          %p397 = pneg %p249
        $region42: #{tpu_custom_call.1} parent=11 // pred_check_branch
          %399 = sbr.rel (%p397) target = $region44
        $region43: #{tpu_custom_call.1} parent=11 // pred_region
          _
        $region44: #{tpu_custom_call.1} parent=11 // pred_fallthru
          _
        // Predicated region
        $region45: #{tpu_custom_call.1} parent=11 // pred_check
          %p400 = pneg %p270
        $region46: #{tpu_custom_call.1} parent=11 // pred_check_branch
          %402 = sbr.rel (%p400) target = $region48
        $region47: #{tpu_custom_call.1} parent=11 // pred_region
          _
        $region48: #{tpu_custom_call.1} parent=11 // pred_fallthru
          _
        // Predicated region
        $region49: #{tpu_custom_call.1} parent=11 // pred_check
          %p403 = pneg %p291
        $region50: #{tpu_custom_call.1} parent=11 // pred_check_branch
          %405 = sbr.rel (%p403) target = $region52
        $region51: #{tpu_custom_call.1} parent=11 // pred_region
          _
        $region52: #{tpu_custom_call.1} parent=11 // pred_fallthru
          _
      $region12: #{tpu_custom_call.1} parent=5 // pred_fallthru
        _
      %p406 = scmp.lt.s32.totalorder %s29, 2
      // Predicated region
      $region53: #{tpu_custom_call.1} parent=5 // pred_check
        %p407 = pneg %p406
      $region54: #{tpu_custom_call.1} parent=5 // pred_check_branch
        %409 = sbr.rel (%p407) target = $region56
      $region55: #{tpu_custom_call.1} parent=5 // pred_region
        // Predicated region
        $region57: #{tpu_custom_call.1} parent=55 // pred_check
          %p410 = pneg %p49
        $region58: #{tpu_custom_call.1} parent=55 // pred_check_branch
          %412 = sbr.rel (%p410) target = $region60
        $region59: #{tpu_custom_call.1} parent=55 // pred_region
          %s413 = sand.u32 %s39, 1
          %s414 = scalar_lea.sflag [#allocation3], %s413
          %s415 = sand.u32 %s39, 1
          %s416 = smul.addr %s415, 128
          %s417 = scalar_lea.vmem [#allocation2], %s416
          %419 = vsyncadd %s414, 0
          %s420 = smul.addr %s29, 16
          %s421 = smul.addr %s420, 8
          %s422 = scalar_lea.hbm %s0, %s421
          %s423 = sshll.u32 %s422, 4
          %s424 = int_to_ptr.hbm [resolvable:$true] %s423
          %s425 = sshll.u32 %s417, 4
          %s426 = int_to_ptr.vmem [resolvable:$true] %s425
          %431 = dma.hbm_to_vmem [thread:$0]  %s424, 2048, %s426, %s414, 128, 128, 8
        $region60: #{tpu_custom_call.1} parent=55 // pred_fallthru
          _
        // Predicated region
        $region61: #{tpu_custom_call.1} parent=55 // pred_check
          %p432 = pneg %p75
        $region62: #{tpu_custom_call.1} parent=55 // pred_check_branch
          %434 = sbr.rel (%p432) target = $region64
        $region63: #{tpu_custom_call.1} parent=55 // pred_region
          %s435 = sand.u32 %s29, 1
          %s436 = scalar_lea.sflag [#allocation6], %s435
          %s437 = sand.u32 %s65, 1
          %s438 = scalar_lea.vmem [#allocation5], %s437
          %440 = vsyncadd %s436, 0
          %s441 = scalar_lea.hbm %s1, %s29
          %s443 = sshll.u32 %s441, 4
          %s444 = int_to_ptr.hbm [resolvable:$true] %s443
          %s445 = sshll.u32 %s438, 4
          %s446 = int_to_ptr.vmem [resolvable:$true] %s445
          %448 = dma.hbm_to_vmem [thread:$0]  %s444, 16, %s446, %s436
        $region64: #{tpu_custom_call.1} parent=55 // pred_fallthru
          _
      $region56: #{tpu_custom_call.1} parent=5 // pred_fallthru
        _
      %p449 = scmp.le.s32.totalorder 1, %s29
      %p450 = scmp.lt.s32.totalorder %s29, 3
      %p451 = pnand %p449, %p450
      %p452 = pneg %p451
      // Predicated region
      $region65: #{tpu_custom_call.1} parent=5 // pred_check
        _
      $region66: #{tpu_custom_call.1} parent=5 // pred_check_branch
        %454 = sbr.rel (%p451) target = $region68
      $region67: #{tpu_custom_call.1} parent=5 // pred_region
        %s455 = ssub.s32 %s29, 1
        %s456 = sand.u32 %s42, 1
        %s457 = scalar_lea.sflag [#allocation3], %s456
        %s458 = sand.u32 %s42, 1
        %s459 = smul.addr %s458, 128
        %s460 = scalar_lea.vmem [#allocation2], %s459
        // Predicated region
        $region69: #{tpu_custom_call.1} parent=67 // pred_check
          %p461 = pneg %p55
        $region70: #{tpu_custom_call.1} parent=67 // pred_check_branch
          %463 = sbr.rel (%p461) target = $region72
        $region71: #{tpu_custom_call.1} parent=67 // pred_region
          %465 = dma.done %s457, 2048
        $region72: #{tpu_custom_call.1} parent=67 // pred_fallthru
          _
        %s466 = sand.u32 %s34, 1
        %s467 = scalar_lea.sflag [#allocation6], %s466
        %s468 = sand.u32 %s68, 1
        %s469 = scalar_lea.vmem [#allocation5], %s468
        // Predicated region
        $region73: #{tpu_custom_call.1} parent=67 // pred_check
          %p470 = pneg %p81
        $region74: #{tpu_custom_call.1} parent=67 // pred_check_branch
          %472 = sbr.rel (%p470) target = $region76
        $region75: #{tpu_custom_call.1} parent=67 // pred_region
          %474 = dma.done %s467, 16
        $region76: #{tpu_custom_call.1} parent=67 // pred_fallthru
          _
        // Predicated region
        $region77: #{tpu_custom_call.1} parent=67 // pred_check
          %p475 = pneg %p102
        $region78: #{tpu_custom_call.1} parent=67 // pred_check_branch
          %477 = sbr.rel (%p475) target = $region80
        $region79: #{tpu_custom_call.1} parent=67 // pred_region
          %479 = dma.done [#allocation6], 2048
        $region80: #{tpu_custom_call.1} parent=67 // pred_fallthru
          _
        // Predicated region
        $region81: #{tpu_custom_call.1} parent=67 // pred_check
          %p480 = pneg %p144
        $region82: #{tpu_custom_call.1} parent=67 // pred_check_branch
          %482 = sbr.rel (%p480) target = $region84
        $region83: #{tpu_custom_call.1} parent=67 // pred_region
          %484 = dma.done [#allocation9], 2048
        $region84: #{tpu_custom_call.1} parent=67 // pred_fallthru
          _
        // Predicated region
        $region85: #{tpu_custom_call.1} parent=67 // pred_check
          %p485 = pneg %p186
        $region86: #{tpu_custom_call.1} parent=67 // pred_check_branch
          %487 = sbr.rel (%p485) target = $region88
        $region87: #{tpu_custom_call.1} parent=67 // pred_region
          %489 = dma.done [#allocation9], 2048
        $region88: #{tpu_custom_call.1} parent=67 // pred_fallthru
          _
        // Predicated region
        $region89: #{tpu_custom_call.1} parent=67 // pred_check
          %p490 = pneg %p228
        $region90: #{tpu_custom_call.1} parent=67 // pred_check_branch
          %492 = sbr.rel (%p490) target = $region92
        $region91: #{tpu_custom_call.1} parent=67 // pred_region
          %494 = dma.done [#allocation12], 2048
        $region92: #{tpu_custom_call.1} parent=67 // pred_fallthru
          _
        %s495 = sand.u32 %s42, 1
        %s496 = scalar_lea.sflag [#allocation3], %s495
        %s497 = sand.u32 %s42, 1
        %s498 = smul.addr %s497, 128
        %s499 = scalar_lea.vmem [#allocation2], %s498
        %p500 = pneg %p55
        %p501 = pneg %p52
        %s502 = sand.u32 %s34, 1
        %s503 = scalar_lea.sflag [#allocation6], %s502
        %s504 = sand.u32 %s68, 1
        %s505 = scalar_lea.vmem [#allocation5], %s504
        %p506 = pneg %p81
        %p507 = pneg %p78
        %p508 = pneg %p102
        %p509 = pneg %p99
        %p510 = pneg %p123
        %p511 = pneg %p120
        %p512 = pneg %p144
        %p513 = pneg %p141
        %p514 = pneg %p165
        %p515 = pneg %p162
        %p516 = pneg %p186
        %p517 = pneg %p183
        %p518 = pneg %p207
        %p519 = pneg %p204
        %p520 = pneg %p228
        %p521 = pneg %p225
        %p522 = pneg %p249
        %p523 = pneg %p246
        %p524 = pneg %p270
        %p525 = pneg %p267
        %p526 = pneg %p291
        %p527 = pneg %p288
        %p528 = pneg %p317
        %p529 = pneg %p314
        %s530 = sand.u32 %s304, 1
        %s531 = scalar_lea.sflag [#allocation4], %s530
        %s532 = sand.u32 %s304, 1
        %s533 = smul.addr %s532, 128
        %s534 = scalar_lea.vmem [#allocation13], %s533
        %v535 = vld [vmem:[%s460] sm:$0xff]
        %v536 = vld [vmem:[%s460 + $0x8] sm:$0xff]
        %v537 = vld [vmem:[%s460 + $0x10] sm:$0xff]
        %v538 = vld [vmem:[%s460 + $0x18] sm:$0xff]
        %v539 = vld [vmem:[%s460 + $0x20] sm:$0xff]
        %v540 = vld [vmem:[%s460 + $0x28] sm:$0xff]
        %v541 = vld [vmem:[%s460 + $0x30] sm:$0xff]
        %v542 = vld [vmem:[%s460 + $0x38] sm:$0xff]
        %v543 = vld [vmem:[%s460 + $0x40] sm:$0xff]
        %v544 = vld [vmem:[%s460 + $0x48] sm:$0xff]
        %v545 = vld [vmem:[%s460 + $0x50] sm:$0xff]
        %v546 = vld [vmem:[%s460 + $0x58] sm:$0xff]
        %v547 = vld [vmem:[%s460 + $0x60] sm:$0xff]
        %v548 = vld [vmem:[%s460 + $0x68] sm:$0xff]
        %v549 = vld [vmem:[%s460 + $0x70] sm:$0xff]
        %v550 = vld [vmem:[%s460 + $0x78] sm:$0xff]
        %v551 = vld [vmem:[#allocation7] sm:$0xff]
        %v552 = vld [vmem:[#allocation7 + $0x8] sm:$0xff]
        %v553 = vld [vmem:[#allocation7 + $0x10] sm:$0xff]
        %v554 = vld [vmem:[#allocation7 + $0x18] sm:$0xff]
        %v555 = vld [vmem:[#allocation7 + $0x20] sm:$0xff]
        %v556 = vld [vmem:[#allocation7 + $0x28] sm:$0xff]
        %v557 = vld [vmem:[#allocation7 + $0x30] sm:$0xff]
        %v558 = vld [vmem:[#allocation7 + $0x38] sm:$0xff]
        %v559 = vld [vmem:[#allocation7 + $0x40] sm:$0xff]
        %v560 = vld [vmem:[#allocation7 + $0x48] sm:$0xff]
        %v561 = vld [vmem:[#allocation7 + $0x50] sm:$0xff]
        %v562 = vld [vmem:[#allocation7 + $0x58] sm:$0xff]
        %v563 = vld [vmem:[#allocation7 + $0x60] sm:$0xff]
        %v564 = vld [vmem:[#allocation7 + $0x68] sm:$0xff]
        %v565 = vld [vmem:[#allocation7 + $0x70] sm:$0xff]
        %v566 = vld [vmem:[#allocation7 + $0x78] sm:$0xff]
        %v567 = vld [vmem:[%s3] sm:$0x1]
        %v569 = vperm.slane %v567, 0
        %571 = vmatpush.msra.mxu0 %v566
        %572 = vmatpush.msra.mxu0 %v565
        %573 = vmatpush.msra.mxu0 %v564
        %574 = vmatpush.msra.mxu0 %v563
        %575 = vmatpush.msra.mxu0 %v562
        %576 = vmatpush.msra.mxu0 %v561
        %577 = vmatpush.msra.mxu0 %v560
        %578 = vmatpush.msra.mxu0 %v559
        %579 = vmatpush.msra.mxu0 %v558
        %580 = vmatpush.msra.mxu0 %v557
        %581 = vmatpush.msra.mxu0 %v556
        %582 = vmatpush.msra.mxu0 %v555
        %583 = vmatpush.msra.mxu0 %v554
        %584 = vmatpush.msra.mxu0 %v553
        %585 = vmatpush.msra.mxu0 %v552
        %586 = vmatpush.msra.mxu0 %v551
        %587 = vmatmul.f32.gmra.mxu0 %v535
        %v588 = vpop.f32.mrf.mxu0
        %v589 = vadd.f32 %v569, %v588
        %590 = vmatmul.f32.gmra.mxu0 %v536
        %v591 = vpop.f32.mrf.mxu0
        %v592 = vadd.f32 %v569, %v591
        %593 = vmatmul.f32.gmra.mxu0 %v537
        %v594 = vpop.f32.mrf.mxu0
        %v595 = vadd.f32 %v569, %v594
        %596 = vmatmul.f32.gmra.mxu0 %v538
        %v597 = vpop.f32.mrf.mxu0
        %v598 = vadd.f32 %v569, %v597
        %599 = vmatmul.f32.gmra.mxu0 %v539
        %v600 = vpop.f32.mrf.mxu0
        %v601 = vadd.f32 %v569, %v600
        %602 = vmatmul.f32.gmra.mxu0 %v540
        %v603 = vpop.f32.mrf.mxu0
        %v604 = vadd.f32 %v569, %v603
        %605 = vmatmul.f32.gmra.mxu0 %v541
        %v606 = vpop.f32.mrf.mxu0
        %v607 = vadd.f32 %v569, %v606
        %608 = vmatmul.f32.gmra.mxu0 %v542
        %v609 = vpop.f32.mrf.mxu0
        %v610 = vadd.f32 %v569, %v609
        %611 = vmatmul.f32.gmra.mxu0 %v543
        %v612 = vpop.f32.mrf.mxu0
        %v613 = vadd.f32 %v569, %v612
        %614 = vmatmul.f32.gmra.mxu0 %v544
        %v615 = vpop.f32.mrf.mxu0
        %v616 = vadd.f32 %v569, %v615
        %617 = vmatmul.f32.gmra.mxu0 %v545
        %v618 = vpop.f32.mrf.mxu0
        %v619 = vadd.f32 %v569, %v618
        %620 = vmatmul.f32.gmra.mxu0 %v546
        %v621 = vpop.f32.mrf.mxu0
        %v622 = vadd.f32 %v569, %v621
        %623 = vmatmul.f32.gmra.mxu0 %v547
        %v624 = vpop.f32.mrf.mxu0
        %v625 = vadd.f32 %v569, %v624
        %626 = vmatmul.f32.gmra.mxu0 %v548
        %v627 = vpop.f32.mrf.mxu0
        %v628 = vadd.f32 %v569, %v627
        %629 = vmatmul.f32.gmra.mxu0 %v549
        %v630 = vpop.f32.mrf.mxu0
        %v631 = vadd.f32 %v569, %v630
        %632 = vmatmul.f32.gmra.mxu0 %v550
        %v633 = vpop.f32.mrf.mxu0
        %v634 = vadd.f32 %v569, %v633
        %635 = vdwg.mxu0
        %v636 = vld [vmem:[#allocation8] sm:$0xff]
        %v637 = vld [vmem:[#allocation8 + $0x8] sm:$0xff]
        %v638 = vld [vmem:[#allocation8 + $0x10] sm:$0xff]
        %v639 = vld [vmem:[#allocation8 + $0x18] sm:$0xff]
        %v640 = vld [vmem:[#allocation8 + $0x20] sm:$0xff]
        %v641 = vld [vmem:[#allocation8 + $0x28] sm:$0xff]
        %v642 = vld [vmem:[#allocation8 + $0x30] sm:$0xff]
        %v643 = vld [vmem:[#allocation8 + $0x38] sm:$0xff]
        %v644 = vld [vmem:[#allocation8 + $0x40] sm:$0xff]
        %v645 = vld [vmem:[#allocation8 + $0x48] sm:$0xff]
        %v646 = vld [vmem:[#allocation8 + $0x50] sm:$0xff]
        %v647 = vld [vmem:[#allocation8 + $0x58] sm:$0xff]
        %v648 = vld [vmem:[#allocation8 + $0x60] sm:$0xff]
        %v649 = vld [vmem:[#allocation8 + $0x68] sm:$0xff]
        %v650 = vld [vmem:[#allocation8 + $0x70] sm:$0xff]
        %v651 = vld [vmem:[#allocation8 + $0x78] sm:$0xff]
        %v652 = vld [vmem:[%s5] sm:$0x1]
        %v654 = vperm.slane %v652, 0
        %656 = vmatpush.msra.mxu0 %v651
        %657 = vmatpush.msra.mxu0 %v650
        %658 = vmatpush.msra.mxu0 %v649
        %659 = vmatpush.msra.mxu0 %v648
        %660 = vmatpush.msra.mxu0 %v647
        %661 = vmatpush.msra.mxu0 %v646
        %662 = vmatpush.msra.mxu0 %v645
        %663 = vmatpush.msra.mxu0 %v644
        %664 = vmatpush.msra.mxu0 %v643
        %665 = vmatpush.msra.mxu0 %v642
        %666 = vmatpush.msra.mxu0 %v641
        %667 = vmatpush.msra.mxu0 %v640
        %668 = vmatpush.msra.mxu0 %v639
        %669 = vmatpush.msra.mxu0 %v638
        %670 = vmatpush.msra.mxu0 %v637
        %671 = vmatpush.msra.mxu0 %v636
        %672 = vmatmul.f32.gmra.mxu0 %v535
        %v673 = vpop.f32.mrf.mxu0
        %v674 = vadd.f32 %v654, %v673
        %675 = vmatmul.f32.gmra.mxu0 %v536
        %v676 = vpop.f32.mrf.mxu0
        %v677 = vadd.f32 %v654, %v676
        %678 = vmatmul.f32.gmra.mxu0 %v537
        %v679 = vpop.f32.mrf.mxu0
        %v680 = vadd.f32 %v654, %v679
        %681 = vmatmul.f32.gmra.mxu0 %v538
        %v682 = vpop.f32.mrf.mxu0
        %v683 = vadd.f32 %v654, %v682
        %684 = vmatmul.f32.gmra.mxu0 %v539
        %v685 = vpop.f32.mrf.mxu0
        %v686 = vadd.f32 %v654, %v685
        %687 = vmatmul.f32.gmra.mxu0 %v540
        %v688 = vpop.f32.mrf.mxu0
        %v689 = vadd.f32 %v654, %v688
        %690 = vmatmul.f32.gmra.mxu0 %v541
        %v691 = vpop.f32.mrf.mxu0
        %v692 = vadd.f32 %v654, %v691
        %693 = vmatmul.f32.gmra.mxu0 %v542
        %v694 = vpop.f32.mrf.mxu0
        %v695 = vadd.f32 %v654, %v694
        %696 = vmatmul.f32.gmra.mxu0 %v543
        %v697 = vpop.f32.mrf.mxu0
        %v698 = vadd.f32 %v654, %v697
        %699 = vmatmul.f32.gmra.mxu0 %v544
        %v700 = vpop.f32.mrf.mxu0
        %v701 = vadd.f32 %v654, %v700
        %702 = vmatmul.f32.gmra.mxu0 %v545
        %v703 = vpop.f32.mrf.mxu0
        %v704 = vadd.f32 %v654, %v703
        %705 = vmatmul.f32.gmra.mxu0 %v546
        %v706 = vpop.f32.mrf.mxu0
        %v707 = vadd.f32 %v654, %v706
        %708 = vmatmul.f32.gmra.mxu0 %v547
        %v709 = vpop.f32.mrf.mxu0
        %v710 = vadd.f32 %v654, %v709
        %711 = vmatmul.f32.gmra.mxu0 %v548
        %v712 = vpop.f32.mrf.mxu0
        %v713 = vadd.f32 %v654, %v712
        %714 = vmatmul.f32.gmra.mxu0 %v549
        %v715 = vpop.f32.mrf.mxu0
        %v716 = vadd.f32 %v654, %v715
        %717 = vmatmul.f32.gmra.mxu0 %v550
        %v718 = vpop.f32.mrf.mxu0
        %v719 = vadd.f32 %v654, %v718
        %720 = vdwg.mxu0
        %v721 = vld [vmem:[#allocation10] sm:$0xff]
        %v722 = vld [vmem:[#allocation10 + $0x8] sm:$0xff]
        %v723 = vld [vmem:[#allocation10 + $0x10] sm:$0xff]
        %v724 = vld [vmem:[#allocation10 + $0x18] sm:$0xff]
        %v725 = vld [vmem:[#allocation10 + $0x20] sm:$0xff]
        %v726 = vld [vmem:[#allocation10 + $0x28] sm:$0xff]
        %v727 = vld [vmem:[#allocation10 + $0x30] sm:$0xff]
        %v728 = vld [vmem:[#allocation10 + $0x38] sm:$0xff]
        %v729 = vld [vmem:[#allocation10 + $0x40] sm:$0xff]
        %v730 = vld [vmem:[#allocation10 + $0x48] sm:$0xff]
        %v731 = vld [vmem:[#allocation10 + $0x50] sm:$0xff]
        %v732 = vld [vmem:[#allocation10 + $0x58] sm:$0xff]
        %v733 = vld [vmem:[#allocation10 + $0x60] sm:$0xff]
        %v734 = vld [vmem:[#allocation10 + $0x68] sm:$0xff]
        %v735 = vld [vmem:[#allocation10 + $0x70] sm:$0xff]
        %v736 = vld [vmem:[#allocation10 + $0x78] sm:$0xff]
        %v737 = vld [vmem:[%s7] sm:$0x1]
        %v739 = vperm.slane %v737, 0
        %741 = vmatpush.msra.mxu0 %v736
        %742 = vmatpush.msra.mxu0 %v735
        %743 = vmatpush.msra.mxu0 %v734
        %744 = vmatpush.msra.mxu0 %v733
        %745 = vmatpush.msra.mxu0 %v732
        %746 = vmatpush.msra.mxu0 %v731
        %747 = vmatpush.msra.mxu0 %v730
        %748 = vmatpush.msra.mxu0 %v729
        %749 = vmatpush.msra.mxu0 %v728
        %750 = vmatpush.msra.mxu0 %v727
        %751 = vmatpush.msra.mxu0 %v726
        %752 = vmatpush.msra.mxu0 %v725
        %753 = vmatpush.msra.mxu0 %v724
        %754 = vmatpush.msra.mxu0 %v723
        %755 = vmatpush.msra.mxu0 %v722
        %756 = vmatpush.msra.mxu0 %v721
        %757 = vmatmul.f32.gmra.mxu0 %v535
        %v758 = vpop.f32.mrf.mxu0
        %v759 = vadd.f32 %v739, %v758
        %760 = vmatmul.f32.gmra.mxu0 %v536
        %v761 = vpop.f32.mrf.mxu0
        %v762 = vadd.f32 %v739, %v761
        %763 = vmatmul.f32.gmra.mxu0 %v537
        %v764 = vpop.f32.mrf.mxu0
        %v765 = vadd.f32 %v739, %v764
        %766 = vmatmul.f32.gmra.mxu0 %v538
        %v767 = vpop.f32.mrf.mxu0
        %v768 = vadd.f32 %v739, %v767
        %769 = vmatmul.f32.gmra.mxu0 %v539
        %v770 = vpop.f32.mrf.mxu0
        %v771 = vadd.f32 %v739, %v770
        %772 = vmatmul.f32.gmra.mxu0 %v540
        %v773 = vpop.f32.mrf.mxu0
        %v774 = vadd.f32 %v739, %v773
        %775 = vmatmul.f32.gmra.mxu0 %v541
        %v776 = vpop.f32.mrf.mxu0
        %v777 = vadd.f32 %v739, %v776
        %778 = vmatmul.f32.gmra.mxu0 %v542
        %v779 = vpop.f32.mrf.mxu0
        %v780 = vadd.f32 %v739, %v779
        %781 = vmatmul.f32.gmra.mxu0 %v543
        %v782 = vpop.f32.mrf.mxu0
        %v783 = vadd.f32 %v739, %v782
        %784 = vmatmul.f32.gmra.mxu0 %v544
        %v785 = vpop.f32.mrf.mxu0
        %v786 = vadd.f32 %v739, %v785
        %787 = vmatmul.f32.gmra.mxu0 %v545
        %v788 = vpop.f32.mrf.mxu0
        %v789 = vadd.f32 %v739, %v788
        %790 = vmatmul.f32.gmra.mxu0 %v546
        %v791 = vpop.f32.mrf.mxu0
        %v792 = vadd.f32 %v739, %v791
        %793 = vmatmul.f32.gmra.mxu0 %v547
        %v794 = vpop.f32.mrf.mxu0
        %v795 = vadd.f32 %v739, %v794
        %796 = vmatmul.f32.gmra.mxu0 %v548
        %v797 = vpop.f32.mrf.mxu0
        %v798 = vadd.f32 %v739, %v797
        %799 = vmatmul.f32.gmra.mxu0 %v549
        %v800 = vpop.f32.mrf.mxu0
        %v801 = vadd.f32 %v739, %v800
        %802 = vmatmul.f32.gmra.mxu0 %v550
        %v803 = vpop.f32.mrf.mxu0
        %v804 = vadd.f32 %v739, %v803
        %805 = vdwg.mxu0
        %v806 = vld [vmem:[%s469] sm:$0x1]
        %vm807 = vcmask 261120
        %v809 = vsel %vm807, %v589, 0
        %v812 = vsel %vm807, %v592, 0
        %v815 = vsel %vm807, %v595, 0
        %v818 = vsel %vm807, %v598, 0
        %v821 = vsel %vm807, %v601, 0
        %v824 = vsel %vm807, %v604, 0
        %v827 = vsel %vm807, %v607, 0
        %v830 = vsel %vm807, %v610, 0
        %v833 = vsel %vm807, %v613, 0
        %v836 = vsel %vm807, %v616, 0
        %v839 = vsel %vm807, %v619, 0
        %v842 = vsel %vm807, %v622, 0
        %v845 = vsel %vm807, %v625, 0
        %v848 = vsel %vm807, %v628, 0
        %v851 = vsel %vm807, %v631, 0
        %v854 = vsel %vm807, %v634, 0
        %v857 = vsel %vm807, %v674, 0
        %v860 = vsel %vm807, %v677, 0
        %v863 = vsel %vm807, %v680, 0
        %v866 = vsel %vm807, %v683, 0
        %v869 = vsel %vm807, %v686, 0
        %v872 = vsel %vm807, %v689, 0
        %v875 = vsel %vm807, %v692, 0
        %v878 = vsel %vm807, %v695, 0
        %v881 = vsel %vm807, %v698, 0
        %v884 = vsel %vm807, %v701, 0
        %v887 = vsel %vm807, %v704, 0
        %v890 = vsel %vm807, %v707, 0
        %v893 = vsel %vm807, %v710, 0
        %v896 = vsel %vm807, %v713, 0
        %v899 = vsel %vm807, %v716, 0
        %v902 = vsel %vm807, %v719, 0
        %904 = vmatpush.xpose.msra.mxu0 %v902
        %905 = vmatpush.xpose.msra.mxu0 %v899
        %906 = vmatpush.xpose.msra.mxu0 %v896
        %907 = vmatpush.xpose.msra.mxu0 %v893
        %908 = vmatpush.xpose.msra.mxu0 %v890
        %909 = vmatpush.xpose.msra.mxu0 %v887
        %910 = vmatpush.xpose.msra.mxu0 %v884
        %911 = vmatpush.xpose.msra.mxu0 %v881
        %912 = vmatpush.xpose.msra.mxu0 %v878
        %913 = vmatpush.xpose.msra.mxu0 %v875
        %914 = vmatpush.xpose.msra.mxu0 %v872
        %915 = vmatpush.xpose.msra.mxu0 %v869
        %916 = vmatpush.xpose.msra.mxu0 %v866
        %917 = vmatpush.xpose.msra.mxu0 %v863
        %918 = vmatpush.xpose.msra.mxu0 %v860
        %919 = vmatpush.xpose.msra.mxu0 %v857
        %920 = vmatmul.f32.gmra.mxu0 %v809
        %v921 = vpop.f32.mrf.mxu0
        %v922 = vadd.f32 0.0, %v921
        %923 = vmatmul.f32.gmra.mxu0 %v812
        %v924 = vpop.f32.mrf.mxu0
        %v925 = vadd.f32 0.0, %v924
        %926 = vmatmul.f32.gmra.mxu0 %v815
        %v927 = vpop.f32.mrf.mxu0
        %v928 = vadd.f32 0.0, %v927
        %929 = vmatmul.f32.gmra.mxu0 %v818
        %v930 = vpop.f32.mrf.mxu0
        %v931 = vadd.f32 0.0, %v930
        %932 = vmatmul.f32.gmra.mxu0 %v821
        %v933 = vpop.f32.mrf.mxu0
        %v934 = vadd.f32 0.0, %v933
        %935 = vmatmul.f32.gmra.mxu0 %v824
        %v936 = vpop.f32.mrf.mxu0
        %v937 = vadd.f32 0.0, %v936
        %938 = vmatmul.f32.gmra.mxu0 %v827
        %v939 = vpop.f32.mrf.mxu0
        %v940 = vadd.f32 0.0, %v939
        %941 = vmatmul.f32.gmra.mxu0 %v830
        %v942 = vpop.f32.mrf.mxu0
        %v943 = vadd.f32 0.0, %v942
        %944 = vmatmul.f32.gmra.mxu0 %v833
        %v945 = vpop.f32.mrf.mxu0
        %v946 = vadd.f32 0.0, %v945
        %947 = vmatmul.f32.gmra.mxu0 %v836
        %v948 = vpop.f32.mrf.mxu0
        %v949 = vadd.f32 0.0, %v948
        %950 = vmatmul.f32.gmra.mxu0 %v839
        %v951 = vpop.f32.mrf.mxu0
        %v952 = vadd.f32 0.0, %v951
        %953 = vmatmul.f32.gmra.mxu0 %v842
        %v954 = vpop.f32.mrf.mxu0
        %v955 = vadd.f32 0.0, %v954
        %956 = vmatmul.f32.gmra.mxu0 %v845
        %v957 = vpop.f32.mrf.mxu0
        %v958 = vadd.f32 0.0, %v957
        %959 = vmatmul.f32.gmra.mxu0 %v848
        %v960 = vpop.f32.mrf.mxu0
        %v961 = vadd.f32 0.0, %v960
        %962 = vmatmul.f32.gmra.mxu0 %v851
        %v963 = vpop.f32.mrf.mxu0
        %v964 = vadd.f32 0.0, %v963
        %965 = vmatmul.f32.gmra.mxu0 %v854
        %v966 = vpop.f32.mrf.mxu0
        %v967 = vadd.f32 0.0, %v966
        %968 = vdwg.mxu0
        %v969 = vmul.f32 %v922, 0.17677669
        %v970 = vmul.f32 %v925, 0.17677669
        %v971 = vmul.f32 %v928, 0.17677669
        %v972 = vmul.f32 %v931, 0.17677669
        %v973 = vmul.f32 %v934, 0.17677669
        %v974 = vmul.f32 %v937, 0.17677669
        %v975 = vmul.f32 %v940, 0.17677669
        %v976 = vmul.f32 %v943, 0.17677669
        %v977 = vmul.f32 %v946, 0.17677669
        %v978 = vmul.f32 %v949, 0.17677669
        %v979 = vmul.f32 %v952, 0.17677669
        %v980 = vmul.f32 %v955, 0.17677669
        %v981 = vmul.f32 %v958, 0.17677669
        %v982 = vmul.f32 %v961, 0.17677669
        %v983 = vmul.f32 %v964, 0.17677669
        %v984 = vmul.f32 %v967, 0.17677669
        %v986 = vperm.slane %v806, 0
        %v988 = vadd.f32 %v969, %v986
        %v989 = vadd.f32 %v970, %v986
        %v990 = vadd.f32 %v971, %v986
        %v991 = vadd.f32 %v972, %v986
        %v992 = vadd.f32 %v973, %v986
        %v993 = vadd.f32 %v974, %v986
        %v994 = vadd.f32 %v975, %v986
        %v995 = vadd.f32 %v976, %v986
        %v996 = vadd.f32 %v977, %v986
        %v997 = vadd.f32 %v978, %v986
        %v998 = vadd.f32 %v979, %v986
        %v999 = vadd.f32 %v980, %v986
        %v1000 = vadd.f32 %v981, %v986
        %v1001 = vadd.f32 %v982, %v986
        %v1002 = vadd.f32 %v983, %v986
        %v1003 = vadd.f32 %v984, %v986
        %1004 = vmax.xlane.f32.xlu0 %v988
        %v1005 = vpop.xlane.xlu0 %1004
        %1006 = vmax.xlane.f32.xlu0 %v989
        %v1007 = vpop.xlane.xlu0 %1006
        %1008 = vmax.xlane.f32.xlu0 %v990
        %v1009 = vpop.xlane.xlu0 %1008
        %1010 = vmax.xlane.f32.xlu0 %v991
        %v1011 = vpop.xlane.xlu0 %1010
        %1012 = vmax.xlane.f32.xlu0 %v992
        %v1013 = vpop.xlane.xlu0 %1012
        %1014 = vmax.xlane.f32.xlu0 %v993
        %v1015 = vpop.xlane.xlu0 %1014
        %1016 = vmax.xlane.f32.xlu0 %v994
        %v1017 = vpop.xlane.xlu0 %1016
        %1018 = vmax.xlane.f32.xlu0 %v995
        %v1019 = vpop.xlane.xlu0 %1018
        %1020 = vmax.xlane.f32.xlu0 %v996
        %v1021 = vpop.xlane.xlu0 %1020
        %1022 = vmax.xlane.f32.xlu0 %v997
        %v1023 = vpop.xlane.xlu0 %1022
        %1024 = vmax.xlane.f32.xlu0 %v998
        %v1025 = vpop.xlane.xlu0 %1024
        %1026 = vmax.xlane.f32.xlu0 %v999
        %v1027 = vpop.xlane.xlu0 %1026
        %1028 = vmax.xlane.f32.xlu0 %v1000
        %v1029 = vpop.xlane.xlu0 %1028
        %1030 = vmax.xlane.f32.xlu0 %v1001
        %v1031 = vpop.xlane.xlu0 %1030
        %1032 = vmax.xlane.f32.xlu0 %v1002
        %v1033 = vpop.xlane.xlu0 %1032
        %1034 = vmax.xlane.f32.xlu0 %v1003
        %v1035 = vpop.xlane.xlu0 %1034
        %v1036 = vsub.f32 %v988, %v1005
        %v1037 = vsub.f32 %v989, %v1007
        %v1038 = vsub.f32 %v990, %v1009
        %v1039 = vsub.f32 %v991, %v1011
        %v1040 = vsub.f32 %v992, %v1013
        %v1041 = vsub.f32 %v993, %v1015
        %v1042 = vsub.f32 %v994, %v1017
        %v1043 = vsub.f32 %v995, %v1019
        %v1044 = vsub.f32 %v996, %v1021
        %v1045 = vsub.f32 %v997, %v1023
        %v1046 = vsub.f32 %v998, %v1025
        %v1047 = vsub.f32 %v999, %v1027
        %v1048 = vsub.f32 %v1000, %v1029
        %v1049 = vsub.f32 %v1001, %v1031
        %v1050 = vsub.f32 %v1002, %v1033
        %v1051 = vsub.f32 %v1003, %v1035
        %v1052 = vmul.f32 %v1036, 1.442695
        %v1053 = vpow.pop %v1052
        %v1054 = vmul.f32 %v1037, 1.442695
        %v1055 = vpow.pop %v1054
        %v1056 = vmul.f32 %v1038, 1.442695
        %v1057 = vpow.pop %v1056
        %v1058 = vmul.f32 %v1039, 1.442695
        %v1059 = vpow.pop %v1058
        %v1060 = vmul.f32 %v1040, 1.442695
        %v1061 = vpow.pop %v1060
        %v1062 = vmul.f32 %v1041, 1.442695
        %v1063 = vpow.pop %v1062
        %v1064 = vmul.f32 %v1042, 1.442695
        %v1065 = vpow.pop %v1064
        %v1066 = vmul.f32 %v1043, 1.442695
        %v1067 = vpow.pop %v1066
        %v1068 = vmul.f32 %v1044, 1.442695
        %v1069 = vpow.pop %v1068
        %v1070 = vmul.f32 %v1045, 1.442695
        %v1071 = vpow.pop %v1070
        %v1072 = vmul.f32 %v1046, 1.442695
        %v1073 = vpow.pop %v1072
        %v1074 = vmul.f32 %v1047, 1.442695
        %v1075 = vpow.pop %v1074
        %v1076 = vmul.f32 %v1048, 1.442695
        %v1077 = vpow.pop %v1076
        %v1078 = vmul.f32 %v1049, 1.442695
        %v1079 = vpow.pop %v1078
        %v1080 = vmul.f32 %v1050, 1.442695
        %v1081 = vpow.pop %v1080
        %v1082 = vmul.f32 %v1051, 1.442695
        %v1083 = vpow.pop %v1082
        %1084 = vadd.xlane.f32.xlu0 %v1053
        %v1085 = vpop.xlane.xlu0 %1084
        %1086 = vadd.xlane.f32.xlu0 %v1055
        %v1087 = vpop.xlane.xlu0 %1086
        %1088 = vadd.xlane.f32.xlu0 %v1057
        %v1089 = vpop.xlane.xlu0 %1088
        %1090 = vadd.xlane.f32.xlu0 %v1059
        %v1091 = vpop.xlane.xlu0 %1090
        %1092 = vadd.xlane.f32.xlu0 %v1061
        %v1093 = vpop.xlane.xlu0 %1092
        %1094 = vadd.xlane.f32.xlu0 %v1063
        %v1095 = vpop.xlane.xlu0 %1094
        %1096 = vadd.xlane.f32.xlu0 %v1065
        %v1097 = vpop.xlane.xlu0 %1096
        %1098 = vadd.xlane.f32.xlu0 %v1067
        %v1099 = vpop.xlane.xlu0 %1098
        %1100 = vadd.xlane.f32.xlu0 %v1069
        %v1101 = vpop.xlane.xlu0 %1100
        %1102 = vadd.xlane.f32.xlu0 %v1071
        %v1103 = vpop.xlane.xlu0 %1102
        %1104 = vadd.xlane.f32.xlu0 %v1073
        %v1105 = vpop.xlane.xlu0 %1104
        %1106 = vadd.xlane.f32.xlu0 %v1075
        %v1107 = vpop.xlane.xlu0 %1106
        %1108 = vadd.xlane.f32.xlu0 %v1077
        %v1109 = vpop.xlane.xlu0 %1108
        %1110 = vadd.xlane.f32.xlu0 %v1079
        %v1111 = vpop.xlane.xlu0 %1110
        %1112 = vadd.xlane.f32.xlu0 %v1081
        %v1113 = vpop.xlane.xlu0 %1112
        %1114 = vadd.xlane.f32.xlu0 %v1083
        %v1115 = vpop.xlane.xlu0 %1114
        %v1116 = vrcp.pop %v1085
        %v1117 = vrcp.pop %v1087
        %v1118 = vrcp.pop %v1089
        %v1119 = vrcp.pop %v1091
        %v1120 = vrcp.pop %v1093
        %v1121 = vrcp.pop %v1095
        %v1122 = vrcp.pop %v1097
        %v1123 = vrcp.pop %v1099
        %v1124 = vrcp.pop %v1101
        %v1125 = vrcp.pop %v1103
        %v1126 = vrcp.pop %v1105
        %v1127 = vrcp.pop %v1107
        %v1128 = vrcp.pop %v1109
        %v1129 = vrcp.pop %v1111
        %v1130 = vrcp.pop %v1113
        %v1131 = vrcp.pop %v1115
        %v1132 = vmul.f32 %v1053, %v1116
        %v1133 = vmul.f32 %v1055, %v1117
        %v1134 = vmul.f32 %v1057, %v1118
        %v1135 = vmul.f32 %v1059, %v1119
        %v1136 = vmul.f32 %v1061, %v1120
        %v1137 = vmul.f32 %v1063, %v1121
        %v1138 = vmul.f32 %v1065, %v1122
        %v1139 = vmul.f32 %v1067, %v1123
        %v1140 = vmul.f32 %v1069, %v1124
        %v1141 = vmul.f32 %v1071, %v1125
        %v1142 = vmul.f32 %v1073, %v1126
        %v1143 = vmul.f32 %v1075, %v1127
        %v1144 = vmul.f32 %v1077, %v1128
        %v1145 = vmul.f32 %v1079, %v1129
        %v1146 = vmul.f32 %v1081, %v1130
        %v1147 = vmul.f32 %v1083, %v1131
        %1148 = vmatpush.msra.mxu0 %v804
        %1149 = vmatpush.msra.mxu0 %v801
        %1150 = vmatpush.msra.mxu0 %v798
        %1151 = vmatpush.msra.mxu0 %v795
        %1152 = vmatpush.msra.mxu0 %v792
        %1153 = vmatpush.msra.mxu0 %v789
        %1154 = vmatpush.msra.mxu0 %v786
        %1155 = vmatpush.msra.mxu0 %v783
        %1156 = vmatpush.msra.mxu0 %v780
        %1157 = vmatpush.msra.mxu0 %v777
        %1158 = vmatpush.msra.mxu0 %v774
        %1159 = vmatpush.msra.mxu0 %v771
        %1160 = vmatpush.msra.mxu0 %v768
        %1161 = vmatpush.msra.mxu0 %v765
        %1162 = vmatpush.msra.mxu0 %v762
        %1163 = vmatpush.msra.mxu0 %v759
        %1164 = vmatmul.f32.gmra.mxu0 %v1132
        %v1165 = vpop.f32.mrf.mxu0
        %v1166 = vadd.f32 0.0, %v1165
        %1167 = vmatmul.f32.gmra.mxu0 %v1133
        %v1168 = vpop.f32.mrf.mxu0
        %v1169 = vadd.f32 0.0, %v1168
        %1170 = vmatmul.f32.gmra.mxu0 %v1134
        %v1171 = vpop.f32.mrf.mxu0
        %v1172 = vadd.f32 0.0, %v1171
        %1173 = vmatmul.f32.gmra.mxu0 %v1135
        %v1174 = vpop.f32.mrf.mxu0
        %v1175 = vadd.f32 0.0, %v1174
        %1176 = vmatmul.f32.gmra.mxu0 %v1136
        %v1177 = vpop.f32.mrf.mxu0
        %v1178 = vadd.f32 0.0, %v1177
        %1179 = vmatmul.f32.gmra.mxu0 %v1137
        %v1180 = vpop.f32.mrf.mxu0
        %v1181 = vadd.f32 0.0, %v1180
        %1182 = vmatmul.f32.gmra.mxu0 %v1138
        %v1183 = vpop.f32.mrf.mxu0
        %v1184 = vadd.f32 0.0, %v1183
        %1185 = vmatmul.f32.gmra.mxu0 %v1139
        %v1186 = vpop.f32.mrf.mxu0
        %v1187 = vadd.f32 0.0, %v1186
        %1188 = vmatmul.f32.gmra.mxu0 %v1140
        %v1189 = vpop.f32.mrf.mxu0
        %v1190 = vadd.f32 0.0, %v1189
        %1191 = vmatmul.f32.gmra.mxu0 %v1141
        %v1192 = vpop.f32.mrf.mxu0
        %v1193 = vadd.f32 0.0, %v1192
        %1194 = vmatmul.f32.gmra.mxu0 %v1142
        %v1195 = vpop.f32.mrf.mxu0
        %v1196 = vadd.f32 0.0, %v1195
        %1197 = vmatmul.f32.gmra.mxu0 %v1143
        %v1198 = vpop.f32.mrf.mxu0
        %v1199 = vadd.f32 0.0, %v1198
        %1200 = vmatmul.f32.gmra.mxu0 %v1144
        %v1201 = vpop.f32.mrf.mxu0
        %v1202 = vadd.f32 0.0, %v1201
        %1203 = vmatmul.f32.gmra.mxu0 %v1145
        %v1204 = vpop.f32.mrf.mxu0
        %v1205 = vadd.f32 0.0, %v1204
        %1206 = vmatmul.f32.gmra.mxu0 %v1146
        %v1207 = vpop.f32.mrf.mxu0
        %v1208 = vadd.f32 0.0, %v1207
        %1209 = vmatmul.f32.gmra.mxu0 %v1147
        %v1210 = vpop.f32.mrf.mxu0
        %v1211 = vadd.f32 0.0, %v1210
        %1212 = vdwg.mxu0
        %1213 = vrot.lane.b32.xlu0 %v589, 96
        %v1214 = vpop.permute.xlu0 %1213
        %1215 = vrot.lane.b32.xlu0 %v592, 96
        %v1216 = vpop.permute.xlu0 %1215
        %1217 = vrot.lane.b32.xlu0 %v595, 96
        %v1218 = vpop.permute.xlu0 %1217
        %1219 = vrot.lane.b32.xlu0 %v598, 96
        %v1220 = vpop.permute.xlu0 %1219
        %1221 = vrot.lane.b32.xlu0 %v601, 96
        %v1222 = vpop.permute.xlu0 %1221
        %1223 = vrot.lane.b32.xlu0 %v604, 96
        %v1224 = vpop.permute.xlu0 %1223
        %1225 = vrot.lane.b32.xlu0 %v607, 96
        %v1226 = vpop.permute.xlu0 %1225
        %1227 = vrot.lane.b32.xlu0 %v610, 96
        %v1228 = vpop.permute.xlu0 %1227
        %1229 = vrot.lane.b32.xlu0 %v613, 96
        %v1230 = vpop.permute.xlu0 %1229
        %1231 = vrot.lane.b32.xlu0 %v616, 96
        %v1232 = vpop.permute.xlu0 %1231
        %1233 = vrot.lane.b32.xlu0 %v619, 96
        %v1234 = vpop.permute.xlu0 %1233
        %1235 = vrot.lane.b32.xlu0 %v622, 96
        %v1236 = vpop.permute.xlu0 %1235
        %1237 = vrot.lane.b32.xlu0 %v625, 96
        %v1238 = vpop.permute.xlu0 %1237
        %1239 = vrot.lane.b32.xlu0 %v628, 96
        %v1240 = vpop.permute.xlu0 %1239
        %1241 = vrot.lane.b32.xlu0 %v631, 96
        %v1242 = vpop.permute.xlu0 %1241
        %1243 = vrot.lane.b32.xlu0 %v634, 96
        %v1244 = vpop.permute.xlu0 %1243
        %1245 = vrot.lane.b32.xlu0 %v674, 96
        %v1246 = vpop.permute.xlu0 %1245
        %1247 = vrot.lane.b32.xlu0 %v677, 96
        %v1248 = vpop.permute.xlu0 %1247
        %1249 = vrot.lane.b32.xlu0 %v680, 96
        %v1250 = vpop.permute.xlu0 %1249
        %1251 = vrot.lane.b32.xlu0 %v683, 96
        %v1252 = vpop.permute.xlu0 %1251
        %1253 = vrot.lane.b32.xlu0 %v686, 96
        %v1254 = vpop.permute.xlu0 %1253
        %1255 = vrot.lane.b32.xlu0 %v689, 96
        %v1256 = vpop.permute.xlu0 %1255
        %1257 = vrot.lane.b32.xlu0 %v692, 96
        %v1258 = vpop.permute.xlu0 %1257
        %1259 = vrot.lane.b32.xlu0 %v695, 96
        %v1260 = vpop.permute.xlu0 %1259
        %1261 = vrot.lane.b32.xlu0 %v698, 96
        %v1262 = vpop.permute.xlu0 %1261
        %1263 = vrot.lane.b32.xlu0 %v701, 96
        %v1264 = vpop.permute.xlu0 %1263
        %1265 = vrot.lane.b32.xlu0 %v704, 96
        %v1266 = vpop.permute.xlu0 %1265
        %1267 = vrot.lane.b32.xlu0 %v707, 96
        %v1268 = vpop.permute.xlu0 %1267
        %1269 = vrot.lane.b32.xlu0 %v710, 96
        %v1270 = vpop.permute.xlu0 %1269
        %1271 = vrot.lane.b32.xlu0 %v713, 96
        %v1272 = vpop.permute.xlu0 %1271
        %1273 = vrot.lane.b32.xlu0 %v716, 96
        %v1274 = vpop.permute.xlu0 %1273
        %1275 = vrot.lane.b32.xlu0 %v719, 96
        %v1276 = vpop.permute.xlu0 %1275
        %v1277 = vsel %vm807, %v1214, 0
        %v1279 = vsel %vm807, %v1216, 0
        %v1281 = vsel %vm807, %v1218, 0
        %v1283 = vsel %vm807, %v1220, 0
        %v1285 = vsel %vm807, %v1222, 0
        %v1287 = vsel %vm807, %v1224, 0
        %v1289 = vsel %vm807, %v1226, 0
        %v1291 = vsel %vm807, %v1228, 0
        %v1293 = vsel %vm807, %v1230, 0
        %v1295 = vsel %vm807, %v1232, 0
        %v1297 = vsel %vm807, %v1234, 0
        %v1299 = vsel %vm807, %v1236, 0
        %v1301 = vsel %vm807, %v1238, 0
        %v1303 = vsel %vm807, %v1240, 0
        %v1305 = vsel %vm807, %v1242, 0
        %v1307 = vsel %vm807, %v1244, 0
        %v1309 = vsel %vm807, %v1246, 0
        %v1311 = vsel %vm807, %v1248, 0
        %v1313 = vsel %vm807, %v1250, 0
        %v1315 = vsel %vm807, %v1252, 0
        %v1317 = vsel %vm807, %v1254, 0
        %v1319 = vsel %vm807, %v1256, 0
        %v1321 = vsel %vm807, %v1258, 0
        %v1323 = vsel %vm807, %v1260, 0
        %v1325 = vsel %vm807, %v1262, 0
        %v1327 = vsel %vm807, %v1264, 0
        %v1329 = vsel %vm807, %v1266, 0
        %v1331 = vsel %vm807, %v1268, 0
        %v1333 = vsel %vm807, %v1270, 0
        %v1335 = vsel %vm807, %v1272, 0
        %v1337 = vsel %vm807, %v1274, 0
        %v1339 = vsel %vm807, %v1276, 0
        %1341 = vmatpush.xpose.msra.mxu0 %v1339
        %1342 = vmatpush.xpose.msra.mxu0 %v1337
        %1343 = vmatpush.xpose.msra.mxu0 %v1335
        %1344 = vmatpush.xpose.msra.mxu0 %v1333
        %1345 = vmatpush.xpose.msra.mxu0 %v1331
        %1346 = vmatpush.xpose.msra.mxu0 %v1329
        %1347 = vmatpush.xpose.msra.mxu0 %v1327
        %1348 = vmatpush.xpose.msra.mxu0 %v1325
        %1349 = vmatpush.xpose.msra.mxu0 %v1323
        %1350 = vmatpush.xpose.msra.mxu0 %v1321
        %1351 = vmatpush.xpose.msra.mxu0 %v1319
        %1352 = vmatpush.xpose.msra.mxu0 %v1317
        %1353 = vmatpush.xpose.msra.mxu0 %v1315
        %1354 = vmatpush.xpose.msra.mxu0 %v1313
        %1355 = vmatpush.xpose.msra.mxu0 %v1311
        %1356 = vmatpush.xpose.msra.mxu0 %v1309
        %1357 = vmatmul.f32.gmra.mxu0 %v1277
        %v1358 = vpop.f32.mrf.mxu0
        %v1359 = vadd.f32 0.0, %v1358
        %1360 = vmatmul.f32.gmra.mxu0 %v1279
        %v1361 = vpop.f32.mrf.mxu0
        %v1362 = vadd.f32 0.0, %v1361
        %1363 = vmatmul.f32.gmra.mxu0 %v1281
        %v1364 = vpop.f32.mrf.mxu0
        %v1365 = vadd.f32 0.0, %v1364
        %1366 = vmatmul.f32.gmra.mxu0 %v1283
        %v1367 = vpop.f32.mrf.mxu0
        %v1368 = vadd.f32 0.0, %v1367
        %1369 = vmatmul.f32.gmra.mxu0 %v1285
        %v1370 = vpop.f32.mrf.mxu0
        %v1371 = vadd.f32 0.0, %v1370
        %1372 = vmatmul.f32.gmra.mxu0 %v1287
        %v1373 = vpop.f32.mrf.mxu0
        %v1374 = vadd.f32 0.0, %v1373
        %1375 = vmatmul.f32.gmra.mxu0 %v1289
        %v1376 = vpop.f32.mrf.mxu0
        %v1377 = vadd.f32 0.0, %v1376
        %1378 = vmatmul.f32.gmra.mxu0 %v1291
        %v1379 = vpop.f32.mrf.mxu0
        %v1380 = vadd.f32 0.0, %v1379
        %1381 = vmatmul.f32.gmra.mxu0 %v1293
        %v1382 = vpop.f32.mrf.mxu0
        %v1383 = vadd.f32 0.0, %v1382
        %1384 = vmatmul.f32.gmra.mxu0 %v1295
        %v1385 = vpop.f32.mrf.mxu0
        %v1386 = vadd.f32 0.0, %v1385
        %1387 = vmatmul.f32.gmra.mxu0 %v1297
        %v1388 = vpop.f32.mrf.mxu0
        %v1389 = vadd.f32 0.0, %v1388
        %1390 = vmatmul.f32.gmra.mxu0 %v1299
        %v1391 = vpop.f32.mrf.mxu0
        %v1392 = vadd.f32 0.0, %v1391
        %1393 = vmatmul.f32.gmra.mxu0 %v1301
        %v1394 = vpop.f32.mrf.mxu0
        %v1395 = vadd.f32 0.0, %v1394
        %1396 = vmatmul.f32.gmra.mxu0 %v1303
        %v1397 = vpop.f32.mrf.mxu0
        %v1398 = vadd.f32 0.0, %v1397
        %1399 = vmatmul.f32.gmra.mxu0 %v1305
        %v1400 = vpop.f32.mrf.mxu0
        %v1401 = vadd.f32 0.0, %v1400
        %1402 = vmatmul.f32.gmra.mxu0 %v1307
        %v1403 = vpop.f32.mrf.mxu0
        %v1404 = vadd.f32 0.0, %v1403
        %1405 = vdwg.mxu0
        %v1406 = vmul.f32 %v1359, 0.17677669
        %v1407 = vmul.f32 %v1362, 0.17677669
        %v1408 = vmul.f32 %v1365, 0.17677669
        %v1409 = vmul.f32 %v1368, 0.17677669
        %v1410 = vmul.f32 %v1371, 0.17677669
        %v1411 = vmul.f32 %v1374, 0.17677669
        %v1412 = vmul.f32 %v1377, 0.17677669
        %v1413 = vmul.f32 %v1380, 0.17677669
        %v1414 = vmul.f32 %v1383, 0.17677669
        %v1415 = vmul.f32 %v1386, 0.17677669
        %v1416 = vmul.f32 %v1389, 0.17677669
        %v1417 = vmul.f32 %v1392, 0.17677669
        %v1418 = vmul.f32 %v1395, 0.17677669
        %v1419 = vmul.f32 %v1398, 0.17677669
        %v1420 = vmul.f32 %v1401, 0.17677669
        %v1421 = vmul.f32 %v1404, 0.17677669
        %v1422 = vadd.f32 %v1406, %v986
        %v1423 = vadd.f32 %v1407, %v986
        %v1424 = vadd.f32 %v1408, %v986
        %v1425 = vadd.f32 %v1409, %v986
        %v1426 = vadd.f32 %v1410, %v986
        %v1427 = vadd.f32 %v1411, %v986
        %v1428 = vadd.f32 %v1412, %v986
        %v1429 = vadd.f32 %v1413, %v986
        %v1430 = vadd.f32 %v1414, %v986
        %v1431 = vadd.f32 %v1415, %v986
        %v1432 = vadd.f32 %v1416, %v986
        %v1433 = vadd.f32 %v1417, %v986
        %v1434 = vadd.f32 %v1418, %v986
        %v1435 = vadd.f32 %v1419, %v986
        %v1436 = vadd.f32 %v1420, %v986
        %v1437 = vadd.f32 %v1421, %v986
        %1438 = vmax.xlane.f32.xlu0 %v1422
        %v1439 = vpop.xlane.xlu0 %1438
        %1440 = vmax.xlane.f32.xlu0 %v1423
        %v1441 = vpop.xlane.xlu0 %1440
        %1442 = vmax.xlane.f32.xlu0 %v1424
        %v1443 = vpop.xlane.xlu0 %1442
        %1444 = vmax.xlane.f32.xlu0 %v1425
        %v1445 = vpop.xlane.xlu0 %1444
        %1446 = vmax.xlane.f32.xlu0 %v1426
        %v1447 = vpop.xlane.xlu0 %1446
        %1448 = vmax.xlane.f32.xlu0 %v1427
        %v1449 = vpop.xlane.xlu0 %1448
        %1450 = vmax.xlane.f32.xlu0 %v1428
        %v1451 = vpop.xlane.xlu0 %1450
        %1452 = vmax.xlane.f32.xlu0 %v1429
        %v1453 = vpop.xlane.xlu0 %1452
        %1454 = vmax.xlane.f32.xlu0 %v1430
        %v1455 = vpop.xlane.xlu0 %1454
        %1456 = vmax.xlane.f32.xlu0 %v1431
        %v1457 = vpop.xlane.xlu0 %1456
        %1458 = vmax.xlane.f32.xlu0 %v1432
        %v1459 = vpop.xlane.xlu0 %1458
        %1460 = vmax.xlane.f32.xlu0 %v1433
        %v1461 = vpop.xlane.xlu0 %1460
        %1462 = vmax.xlane.f32.xlu0 %v1434
        %v1463 = vpop.xlane.xlu0 %1462
        %1464 = vmax.xlane.f32.xlu0 %v1435
        %v1465 = vpop.xlane.xlu0 %1464
        %1466 = vmax.xlane.f32.xlu0 %v1436
        %v1467 = vpop.xlane.xlu0 %1466
        %1468 = vmax.xlane.f32.xlu0 %v1437
        %v1469 = vpop.xlane.xlu0 %1468
        %v1470 = vsub.f32 %v1422, %v1439
        %v1471 = vsub.f32 %v1423, %v1441
        %v1472 = vsub.f32 %v1424, %v1443
        %v1473 = vsub.f32 %v1425, %v1445
        %v1474 = vsub.f32 %v1426, %v1447
        %v1475 = vsub.f32 %v1427, %v1449
        %v1476 = vsub.f32 %v1428, %v1451
        %v1477 = vsub.f32 %v1429, %v1453
        %v1478 = vsub.f32 %v1430, %v1455
        %v1479 = vsub.f32 %v1431, %v1457
        %v1480 = vsub.f32 %v1432, %v1459
        %v1481 = vsub.f32 %v1433, %v1461
        %v1482 = vsub.f32 %v1434, %v1463
        %v1483 = vsub.f32 %v1435, %v1465
        %v1484 = vsub.f32 %v1436, %v1467
        %v1485 = vsub.f32 %v1437, %v1469
        %v1486 = vmul.f32 %v1470, 1.442695
        %v1487 = vpow.pop %v1486
        %v1488 = vmul.f32 %v1471, 1.442695
        %v1489 = vpow.pop %v1488
        %v1490 = vmul.f32 %v1472, 1.442695
        %v1491 = vpow.pop %v1490
        %v1492 = vmul.f32 %v1473, 1.442695
        %v1493 = vpow.pop %v1492
        %v1494 = vmul.f32 %v1474, 1.442695
        %v1495 = vpow.pop %v1494
        %v1496 = vmul.f32 %v1475, 1.442695
        %v1497 = vpow.pop %v1496
        %v1498 = vmul.f32 %v1476, 1.442695
        %v1499 = vpow.pop %v1498
        %v1500 = vmul.f32 %v1477, 1.442695
        %v1501 = vpow.pop %v1500
        %v1502 = vmul.f32 %v1478, 1.442695
        %v1503 = vpow.pop %v1502
        %v1504 = vmul.f32 %v1479, 1.442695
        %v1505 = vpow.pop %v1504
        %v1506 = vmul.f32 %v1480, 1.442695
        %v1507 = vpow.pop %v1506
        %v1508 = vmul.f32 %v1481, 1.442695
        %v1509 = vpow.pop %v1508
        %v1510 = vmul.f32 %v1482, 1.442695
        %v1511 = vpow.pop %v1510
        %v1512 = vmul.f32 %v1483, 1.442695
        %v1513 = vpow.pop %v1512
        %v1514 = vmul.f32 %v1484, 1.442695
        %v1515 = vpow.pop %v1514
        %v1516 = vmul.f32 %v1485, 1.442695
        %v1517 = vpow.pop %v1516
        %1518 = vadd.xlane.f32.xlu0 %v1487
        %v1519 = vpop.xlane.xlu0 %1518
        %1520 = vadd.xlane.f32.xlu0 %v1489
        %v1521 = vpop.xlane.xlu0 %1520
        %1522 = vadd.xlane.f32.xlu0 %v1491
        %v1523 = vpop.xlane.xlu0 %1522
        %1524 = vadd.xlane.f32.xlu0 %v1493
        %v1525 = vpop.xlane.xlu0 %1524
        %1526 = vadd.xlane.f32.xlu0 %v1495
        %v1527 = vpop.xlane.xlu0 %1526
        %1528 = vadd.xlane.f32.xlu0 %v1497
        %v1529 = vpop.xlane.xlu0 %1528
        %1530 = vadd.xlane.f32.xlu0 %v1499
        %v1531 = vpop.xlane.xlu0 %1530
        %1532 = vadd.xlane.f32.xlu0 %v1501
        %v1533 = vpop.xlane.xlu0 %1532
        %1534 = vadd.xlane.f32.xlu0 %v1503
        %v1535 = vpop.xlane.xlu0 %1534
        %1536 = vadd.xlane.f32.xlu0 %v1505
        %v1537 = vpop.xlane.xlu0 %1536
        %1538 = vadd.xlane.f32.xlu0 %v1507
        %v1539 = vpop.xlane.xlu0 %1538
        %1540 = vadd.xlane.f32.xlu0 %v1509
        %v1541 = vpop.xlane.xlu0 %1540
        %1542 = vadd.xlane.f32.xlu0 %v1511
        %v1543 = vpop.xlane.xlu0 %1542
        %1544 = vadd.xlane.f32.xlu0 %v1513
        %v1545 = vpop.xlane.xlu0 %1544
        %1546 = vadd.xlane.f32.xlu0 %v1515
        %v1547 = vpop.xlane.xlu0 %1546
        %1548 = vadd.xlane.f32.xlu0 %v1517
        %v1549 = vpop.xlane.xlu0 %1548
        %v1550 = vrcp.pop %v1519
        %v1551 = vrcp.pop %v1521
        %v1552 = vrcp.pop %v1523
        %v1553 = vrcp.pop %v1525
        %v1554 = vrcp.pop %v1527
        %v1555 = vrcp.pop %v1529
        %v1556 = vrcp.pop %v1531
        %v1557 = vrcp.pop %v1533
        %v1558 = vrcp.pop %v1535
        %v1559 = vrcp.pop %v1537
        %v1560 = vrcp.pop %v1539
        %v1561 = vrcp.pop %v1541
        %v1562 = vrcp.pop %v1543
        %v1563 = vrcp.pop %v1545
        %v1564 = vrcp.pop %v1547
        %v1565 = vrcp.pop %v1549
        %v1566 = vmul.f32 %v1487, %v1550
        %v1567 = vmul.f32 %v1489, %v1551
        %v1568 = vmul.f32 %v1491, %v1552
        %v1569 = vmul.f32 %v1493, %v1553
        %v1570 = vmul.f32 %v1495, %v1554
        %v1571 = vmul.f32 %v1497, %v1555
        %v1572 = vmul.f32 %v1499, %v1556
        %v1573 = vmul.f32 %v1501, %v1557
        %v1574 = vmul.f32 %v1503, %v1558
        %v1575 = vmul.f32 %v1505, %v1559
        %v1576 = vmul.f32 %v1507, %v1560
        %v1577 = vmul.f32 %v1509, %v1561
        %v1578 = vmul.f32 %v1511, %v1562
        %v1579 = vmul.f32 %v1513, %v1563
        %v1580 = vmul.f32 %v1515, %v1564
        %v1581 = vmul.f32 %v1517, %v1565
        %1598 = vrot.lane.b32.xlu0 %v759, 96
        %v1599 = vpop.permute.xlu0 %1598
        %1600 = vrot.lane.b32.xlu0 %v762, 96
        %v1601 = vpop.permute.xlu0 %1600
        %1602 = vrot.lane.b32.xlu0 %v765, 96
        %v1603 = vpop.permute.xlu0 %1602
        %1604 = vrot.lane.b32.xlu0 %v768, 96
        %v1605 = vpop.permute.xlu0 %1604
        %1606 = vrot.lane.b32.xlu0 %v771, 96
        %v1607 = vpop.permute.xlu0 %1606
        %1608 = vrot.lane.b32.xlu0 %v774, 96
        %v1609 = vpop.permute.xlu0 %1608
        %1610 = vrot.lane.b32.xlu0 %v777, 96
        %v1611 = vpop.permute.xlu0 %1610
        %1612 = vrot.lane.b32.xlu0 %v780, 96
        %v1613 = vpop.permute.xlu0 %1612
        %1614 = vrot.lane.b32.xlu0 %v783, 96
        %v1615 = vpop.permute.xlu0 %1614
        %1616 = vrot.lane.b32.xlu0 %v786, 96
        %v1617 = vpop.permute.xlu0 %1616
        %1618 = vrot.lane.b32.xlu0 %v789, 96
        %v1619 = vpop.permute.xlu0 %1618
        %1620 = vrot.lane.b32.xlu0 %v792, 96
        %v1621 = vpop.permute.xlu0 %1620
        %1622 = vrot.lane.b32.xlu0 %v795, 96
        %v1623 = vpop.permute.xlu0 %1622
        %1624 = vrot.lane.b32.xlu0 %v798, 96
        %v1625 = vpop.permute.xlu0 %1624
        %1626 = vrot.lane.b32.xlu0 %v801, 96
        %v1627 = vpop.permute.xlu0 %1626
        %1628 = vrot.lane.b32.xlu0 %v804, 96
        %v1629 = vpop.permute.xlu0 %1628
        %1646 = vmatpush.msra.mxu0 %v1629
        %1647 = vmatpush.msra.mxu0 %v1627
        %1648 = vmatpush.msra.mxu0 %v1625
        %1649 = vmatpush.msra.mxu0 %v1623
        %1650 = vmatpush.msra.mxu0 %v1621
        %1651 = vmatpush.msra.mxu0 %v1619
        %1652 = vmatpush.msra.mxu0 %v1617
        %1653 = vmatpush.msra.mxu0 %v1615
        %1654 = vmatpush.msra.mxu0 %v1613
        %1655 = vmatpush.msra.mxu0 %v1611
        %1656 = vmatpush.msra.mxu0 %v1609
        %1657 = vmatpush.msra.mxu0 %v1607
        %1658 = vmatpush.msra.mxu0 %v1605
        %1659 = vmatpush.msra.mxu0 %v1603
        %1660 = vmatpush.msra.mxu0 %v1601
        %1661 = vmatpush.msra.mxu0 %v1599
        %1662 = vmatmul.f32.gmra.mxu0 %v1566
        %v1663 = vpop.f32.mrf.mxu0
        %v1664 = vadd.f32 0.0, %v1663
        %1665 = vmatmul.f32.gmra.mxu0 %v1567
        %v1666 = vpop.f32.mrf.mxu0
        %v1667 = vadd.f32 0.0, %v1666
        %1668 = vmatmul.f32.gmra.mxu0 %v1568
        %v1669 = vpop.f32.mrf.mxu0
        %v1670 = vadd.f32 0.0, %v1669
        %1671 = vmatmul.f32.gmra.mxu0 %v1569
        %v1672 = vpop.f32.mrf.mxu0
        %v1673 = vadd.f32 0.0, %v1672
        %1674 = vmatmul.f32.gmra.mxu0 %v1570
        %v1675 = vpop.f32.mrf.mxu0
        %v1676 = vadd.f32 0.0, %v1675
        %1677 = vmatmul.f32.gmra.mxu0 %v1571
        %v1678 = vpop.f32.mrf.mxu0
        %v1679 = vadd.f32 0.0, %v1678
        %1680 = vmatmul.f32.gmra.mxu0 %v1572
        %v1681 = vpop.f32.mrf.mxu0
        %v1682 = vadd.f32 0.0, %v1681
        %1683 = vmatmul.f32.gmra.mxu0 %v1573
        %v1684 = vpop.f32.mrf.mxu0
        %v1685 = vadd.f32 0.0, %v1684
        %1686 = vmatmul.f32.gmra.mxu0 %v1574
        %v1687 = vpop.f32.mrf.mxu0
        %v1688 = vadd.f32 0.0, %v1687
        %1689 = vmatmul.f32.gmra.mxu0 %v1575
        %v1690 = vpop.f32.mrf.mxu0
        %v1691 = vadd.f32 0.0, %v1690
        %1692 = vmatmul.f32.gmra.mxu0 %v1576
        %v1693 = vpop.f32.mrf.mxu0
        %v1694 = vadd.f32 0.0, %v1693
        %1695 = vmatmul.f32.gmra.mxu0 %v1577
        %v1696 = vpop.f32.mrf.mxu0
        %v1697 = vadd.f32 0.0, %v1696
        %1698 = vmatmul.f32.gmra.mxu0 %v1578
        %v1699 = vpop.f32.mrf.mxu0
        %v1700 = vadd.f32 0.0, %v1699
        %1701 = vmatmul.f32.gmra.mxu0 %v1579
        %v1702 = vpop.f32.mrf.mxu0
        %v1703 = vadd.f32 0.0, %v1702
        %1704 = vmatmul.f32.gmra.mxu0 %v1580
        %v1705 = vpop.f32.mrf.mxu0
        %v1706 = vadd.f32 0.0, %v1705
        %1707 = vmatmul.f32.gmra.mxu0 %v1581
        %v1708 = vpop.f32.mrf.mxu0
        %v1709 = vadd.f32 0.0, %v1708
        %1710 = vdwg.mxu0
        %1711 = vrot.lane.b32.xlu0 %v589, 64
        %v1712 = vpop.permute.xlu0 %1711
        %1713 = vrot.lane.b32.xlu0 %v592, 64
        %v1714 = vpop.permute.xlu0 %1713
        %1715 = vrot.lane.b32.xlu0 %v595, 64
        %v1716 = vpop.permute.xlu0 %1715
        %1717 = vrot.lane.b32.xlu0 %v598, 64
        %v1718 = vpop.permute.xlu0 %1717
        %1719 = vrot.lane.b32.xlu0 %v601, 64
        %v1720 = vpop.permute.xlu0 %1719
        %1721 = vrot.lane.b32.xlu0 %v604, 64
        %v1722 = vpop.permute.xlu0 %1721
        %1723 = vrot.lane.b32.xlu0 %v607, 64
        %v1724 = vpop.permute.xlu0 %1723
        %1725 = vrot.lane.b32.xlu0 %v610, 64
        %v1726 = vpop.permute.xlu0 %1725
        %1727 = vrot.lane.b32.xlu0 %v613, 64
        %v1728 = vpop.permute.xlu0 %1727
        %1729 = vrot.lane.b32.xlu0 %v616, 64
        %v1730 = vpop.permute.xlu0 %1729
        %1731 = vrot.lane.b32.xlu0 %v619, 64
        %v1732 = vpop.permute.xlu0 %1731
        %1733 = vrot.lane.b32.xlu0 %v622, 64
        %v1734 = vpop.permute.xlu0 %1733
        %1735 = vrot.lane.b32.xlu0 %v625, 64
        %v1736 = vpop.permute.xlu0 %1735
        %1737 = vrot.lane.b32.xlu0 %v628, 64
        %v1738 = vpop.permute.xlu0 %1737
        %1739 = vrot.lane.b32.xlu0 %v631, 64
        %v1740 = vpop.permute.xlu0 %1739
        %1741 = vrot.lane.b32.xlu0 %v634, 64
        %v1742 = vpop.permute.xlu0 %1741
        %1743 = vrot.lane.b32.xlu0 %v674, 64
        %v1744 = vpop.permute.xlu0 %1743
        %1745 = vrot.lane.b32.xlu0 %v677, 64
        %v1746 = vpop.permute.xlu0 %1745
        %1747 = vrot.lane.b32.xlu0 %v680, 64
        %v1748 = vpop.permute.xlu0 %1747
        %1749 = vrot.lane.b32.xlu0 %v683, 64
        %v1750 = vpop.permute.xlu0 %1749
        %1751 = vrot.lane.b32.xlu0 %v686, 64
        %v1752 = vpop.permute.xlu0 %1751
        %1753 = vrot.lane.b32.xlu0 %v689, 64
        %v1754 = vpop.permute.xlu0 %1753
        %1755 = vrot.lane.b32.xlu0 %v692, 64
        %v1756 = vpop.permute.xlu0 %1755
        %1757 = vrot.lane.b32.xlu0 %v695, 64
        %v1758 = vpop.permute.xlu0 %1757
        %1759 = vrot.lane.b32.xlu0 %v698, 64
        %v1760 = vpop.permute.xlu0 %1759
        %1761 = vrot.lane.b32.xlu0 %v701, 64
        %v1762 = vpop.permute.xlu0 %1761
        %1763 = vrot.lane.b32.xlu0 %v704, 64
        %v1764 = vpop.permute.xlu0 %1763
        %1765 = vrot.lane.b32.xlu0 %v707, 64
        %v1766 = vpop.permute.xlu0 %1765
        %1767 = vrot.lane.b32.xlu0 %v710, 64
        %v1768 = vpop.permute.xlu0 %1767
        %1769 = vrot.lane.b32.xlu0 %v713, 64
        %v1770 = vpop.permute.xlu0 %1769
        %1771 = vrot.lane.b32.xlu0 %v716, 64
        %v1772 = vpop.permute.xlu0 %1771
        %1773 = vrot.lane.b32.xlu0 %v719, 64
        %v1774 = vpop.permute.xlu0 %1773
        %v1775 = vsel %vm807, %v1712, 0
        %v1777 = vsel %vm807, %v1714, 0
        %v1779 = vsel %vm807, %v1716, 0
        %v1781 = vsel %vm807, %v1718, 0
        %v1783 = vsel %vm807, %v1720, 0
        %v1785 = vsel %vm807, %v1722, 0
        %v1787 = vsel %vm807, %v1724, 0
        %v1789 = vsel %vm807, %v1726, 0
        %v1791 = vsel %vm807, %v1728, 0
        %v1793 = vsel %vm807, %v1730, 0
        %v1795 = vsel %vm807, %v1732, 0
        %v1797 = vsel %vm807, %v1734, 0
        %v1799 = vsel %vm807, %v1736, 0
        %v1801 = vsel %vm807, %v1738, 0
        %v1803 = vsel %vm807, %v1740, 0
        %v1805 = vsel %vm807, %v1742, 0
        %v1807 = vsel %vm807, %v1744, 0
        %v1809 = vsel %vm807, %v1746, 0
        %v1811 = vsel %vm807, %v1748, 0
        %v1813 = vsel %vm807, %v1750, 0
        %v1815 = vsel %vm807, %v1752, 0
        %v1817 = vsel %vm807, %v1754, 0
        %v1819 = vsel %vm807, %v1756, 0
        %v1821 = vsel %vm807, %v1758, 0
        %v1823 = vsel %vm807, %v1760, 0
        %v1825 = vsel %vm807, %v1762, 0
        %v1827 = vsel %vm807, %v1764, 0
        %v1829 = vsel %vm807, %v1766, 0
        %v1831 = vsel %vm807, %v1768, 0
        %v1833 = vsel %vm807, %v1770, 0
        %v1835 = vsel %vm807, %v1772, 0
        %v1837 = vsel %vm807, %v1774, 0
        %1839 = vmatpush.xpose.msra.mxu0 %v1837
        %1840 = vmatpush.xpose.msra.mxu0 %v1835
        %1841 = vmatpush.xpose.msra.mxu0 %v1833
        %1842 = vmatpush.xpose.msra.mxu0 %v1831
        %1843 = vmatpush.xpose.msra.mxu0 %v1829
        %1844 = vmatpush.xpose.msra.mxu0 %v1827
        %1845 = vmatpush.xpose.msra.mxu0 %v1825
        %1846 = vmatpush.xpose.msra.mxu0 %v1823
        %1847 = vmatpush.xpose.msra.mxu0 %v1821
        %1848 = vmatpush.xpose.msra.mxu0 %v1819
        %1849 = vmatpush.xpose.msra.mxu0 %v1817
        %1850 = vmatpush.xpose.msra.mxu0 %v1815
        %1851 = vmatpush.xpose.msra.mxu0 %v1813
        %1852 = vmatpush.xpose.msra.mxu0 %v1811
        %1853 = vmatpush.xpose.msra.mxu0 %v1809
        %1854 = vmatpush.xpose.msra.mxu0 %v1807
        %1855 = vmatmul.f32.gmra.mxu0 %v1775
        %v1856 = vpop.f32.mrf.mxu0
        %v1857 = vadd.f32 0.0, %v1856
        %1858 = vmatmul.f32.gmra.mxu0 %v1777
        %v1859 = vpop.f32.mrf.mxu0
        %v1860 = vadd.f32 0.0, %v1859
        %1861 = vmatmul.f32.gmra.mxu0 %v1779
        %v1862 = vpop.f32.mrf.mxu0
        %v1863 = vadd.f32 0.0, %v1862
        %1864 = vmatmul.f32.gmra.mxu0 %v1781
        %v1865 = vpop.f32.mrf.mxu0
        %v1866 = vadd.f32 0.0, %v1865
        %1867 = vmatmul.f32.gmra.mxu0 %v1783
        %v1868 = vpop.f32.mrf.mxu0
        %v1869 = vadd.f32 0.0, %v1868
        %1870 = vmatmul.f32.gmra.mxu0 %v1785
        %v1871 = vpop.f32.mrf.mxu0
        %v1872 = vadd.f32 0.0, %v1871
        %1873 = vmatmul.f32.gmra.mxu0 %v1787
        %v1874 = vpop.f32.mrf.mxu0
        %v1875 = vadd.f32 0.0, %v1874
        %1876 = vmatmul.f32.gmra.mxu0 %v1789
        %v1877 = vpop.f32.mrf.mxu0
        %v1878 = vadd.f32 0.0, %v1877
        %1879 = vmatmul.f32.gmra.mxu0 %v1791
        %v1880 = vpop.f32.mrf.mxu0
        %v1881 = vadd.f32 0.0, %v1880
        %1882 = vmatmul.f32.gmra.mxu0 %v1793
        %v1883 = vpop.f32.mrf.mxu0
        %v1884 = vadd.f32 0.0, %v1883
        %1885 = vmatmul.f32.gmra.mxu0 %v1795
        %v1886 = vpop.f32.mrf.mxu0
        %v1887 = vadd.f32 0.0, %v1886
        %1888 = vmatmul.f32.gmra.mxu0 %v1797
        %v1889 = vpop.f32.mrf.mxu0
        %v1890 = vadd.f32 0.0, %v1889
        %1891 = vmatmul.f32.gmra.mxu0 %v1799
        %v1892 = vpop.f32.mrf.mxu0
        %v1893 = vadd.f32 0.0, %v1892
        %1894 = vmatmul.f32.gmra.mxu0 %v1801
        %v1895 = vpop.f32.mrf.mxu0
        %v1896 = vadd.f32 0.0, %v1895
        %1897 = vmatmul.f32.gmra.mxu0 %v1803
        %v1898 = vpop.f32.mrf.mxu0
        %v1899 = vadd.f32 0.0, %v1898
        %1900 = vmatmul.f32.gmra.mxu0 %v1805
        %v1901 = vpop.f32.mrf.mxu0
        %v1902 = vadd.f32 0.0, %v1901
        %1903 = vdwg.mxu0
        %v1904 = vmul.f32 %v1857, 0.17677669
        %v1905 = vmul.f32 %v1860, 0.17677669
        %v1906 = vmul.f32 %v1863, 0.17677669
        %v1907 = vmul.f32 %v1866, 0.17677669
        %v1908 = vmul.f32 %v1869, 0.17677669
        %v1909 = vmul.f32 %v1872, 0.17677669
        %v1910 = vmul.f32 %v1875, 0.17677669
        %v1911 = vmul.f32 %v1878, 0.17677669
        %v1912 = vmul.f32 %v1881, 0.17677669
        %v1913 = vmul.f32 %v1884, 0.17677669
        %v1914 = vmul.f32 %v1887, 0.17677669
        %v1915 = vmul.f32 %v1890, 0.17677669
        %v1916 = vmul.f32 %v1893, 0.17677669
        %v1917 = vmul.f32 %v1896, 0.17677669
        %v1918 = vmul.f32 %v1899, 0.17677669
        %v1919 = vmul.f32 %v1902, 0.17677669
        %v1920 = vadd.f32 %v1904, %v986
        %v1921 = vadd.f32 %v1905, %v986
        %v1922 = vadd.f32 %v1906, %v986
        %v1923 = vadd.f32 %v1907, %v986
        %v1924 = vadd.f32 %v1908, %v986
        %v1925 = vadd.f32 %v1909, %v986
        %v1926 = vadd.f32 %v1910, %v986
        %v1927 = vadd.f32 %v1911, %v986
        %v1928 = vadd.f32 %v1912, %v986
        %v1929 = vadd.f32 %v1913, %v986
        %v1930 = vadd.f32 %v1914, %v986
        %v1931 = vadd.f32 %v1915, %v986
        %v1932 = vadd.f32 %v1916, %v986
        %v1933 = vadd.f32 %v1917, %v986
        %v1934 = vadd.f32 %v1918, %v986
        %v1935 = vadd.f32 %v1919, %v986
        %1936 = vmax.xlane.f32.xlu0 %v1920
        %v1937 = vpop.xlane.xlu0 %1936
        %1938 = vmax.xlane.f32.xlu0 %v1921
        %v1939 = vpop.xlane.xlu0 %1938
        %1940 = vmax.xlane.f32.xlu0 %v1922
        %v1941 = vpop.xlane.xlu0 %1940
        %1942 = vmax.xlane.f32.xlu0 %v1923
        %v1943 = vpop.xlane.xlu0 %1942
        %1944 = vmax.xlane.f32.xlu0 %v1924
        %v1945 = vpop.xlane.xlu0 %1944
        %1946 = vmax.xlane.f32.xlu0 %v1925
        %v1947 = vpop.xlane.xlu0 %1946
        %1948 = vmax.xlane.f32.xlu0 %v1926
        %v1949 = vpop.xlane.xlu0 %1948
        %1950 = vmax.xlane.f32.xlu0 %v1927
        %v1951 = vpop.xlane.xlu0 %1950
        %1952 = vmax.xlane.f32.xlu0 %v1928
        %v1953 = vpop.xlane.xlu0 %1952
        %1954 = vmax.xlane.f32.xlu0 %v1929
        %v1955 = vpop.xlane.xlu0 %1954
        %1956 = vmax.xlane.f32.xlu0 %v1930
        %v1957 = vpop.xlane.xlu0 %1956
        %1958 = vmax.xlane.f32.xlu0 %v1931
        %v1959 = vpop.xlane.xlu0 %1958
        %1960 = vmax.xlane.f32.xlu0 %v1932
        %v1961 = vpop.xlane.xlu0 %1960
        %1962 = vmax.xlane.f32.xlu0 %v1933
        %v1963 = vpop.xlane.xlu0 %1962
        %1964 = vmax.xlane.f32.xlu0 %v1934
        %v1965 = vpop.xlane.xlu0 %1964
        %1966 = vmax.xlane.f32.xlu0 %v1935
        %v1967 = vpop.xlane.xlu0 %1966
        %v1968 = vsub.f32 %v1920, %v1937
        %v1969 = vsub.f32 %v1921, %v1939
        %v1970 = vsub.f32 %v1922, %v1941
        %v1971 = vsub.f32 %v1923, %v1943
        %v1972 = vsub.f32 %v1924, %v1945
        %v1973 = vsub.f32 %v1925, %v1947
        %v1974 = vsub.f32 %v1926, %v1949
        %v1975 = vsub.f32 %v1927, %v1951
        %v1976 = vsub.f32 %v1928, %v1953
        %v1977 = vsub.f32 %v1929, %v1955
        %v1978 = vsub.f32 %v1930, %v1957
        %v1979 = vsub.f32 %v1931, %v1959
        %v1980 = vsub.f32 %v1932, %v1961
        %v1981 = vsub.f32 %v1933, %v1963
        %v1982 = vsub.f32 %v1934, %v1965
        %v1983 = vsub.f32 %v1935, %v1967
        %v1984 = vmul.f32 %v1968, 1.442695
        %v1985 = vpow.pop %v1984
        %v1986 = vmul.f32 %v1969, 1.442695
        %v1987 = vpow.pop %v1986
        %v1988 = vmul.f32 %v1970, 1.442695
        %v1989 = vpow.pop %v1988
        %v1990 = vmul.f32 %v1971, 1.442695
        %v1991 = vpow.pop %v1990
        %v1992 = vmul.f32 %v1972, 1.442695
        %v1993 = vpow.pop %v1992
        %v1994 = vmul.f32 %v1973, 1.442695
        %v1995 = vpow.pop %v1994
        %v1996 = vmul.f32 %v1974, 1.442695
        %v1997 = vpow.pop %v1996
        %v1998 = vmul.f32 %v1975, 1.442695
        %v1999 = vpow.pop %v1998
        %v2000 = vmul.f32 %v1976, 1.442695
        %v2001 = vpow.pop %v2000
        %v2002 = vmul.f32 %v1977, 1.442695
        %v2003 = vpow.pop %v2002
        %v2004 = vmul.f32 %v1978, 1.442695
        %v2005 = vpow.pop %v2004
        %v2006 = vmul.f32 %v1979, 1.442695
        %v2007 = vpow.pop %v2006
        %v2008 = vmul.f32 %v1980, 1.442695
        %v2009 = vpow.pop %v2008
        %v2010 = vmul.f32 %v1981, 1.442695
        %v2011 = vpow.pop %v2010
        %v2012 = vmul.f32 %v1982, 1.442695
        %v2013 = vpow.pop %v2012
        %v2014 = vmul.f32 %v1983, 1.442695
        %v2015 = vpow.pop %v2014
        %2016 = vadd.xlane.f32.xlu0 %v1985
        %v2017 = vpop.xlane.xlu0 %2016
        %2018 = vadd.xlane.f32.xlu0 %v1987
        %v2019 = vpop.xlane.xlu0 %2018
        %2020 = vadd.xlane.f32.xlu0 %v1989
        %v2021 = vpop.xlane.xlu0 %2020
        %2022 = vadd.xlane.f32.xlu0 %v1991
        %v2023 = vpop.xlane.xlu0 %2022
        %2024 = vadd.xlane.f32.xlu0 %v1993
        %v2025 = vpop.xlane.xlu0 %2024
        %2026 = vadd.xlane.f32.xlu0 %v1995
        %v2027 = vpop.xlane.xlu0 %2026
        %2028 = vadd.xlane.f32.xlu0 %v1997
        %v2029 = vpop.xlane.xlu0 %2028
        %2030 = vadd.xlane.f32.xlu0 %v1999
        %v2031 = vpop.xlane.xlu0 %2030
        %2032 = vadd.xlane.f32.xlu0 %v2001
        %v2033 = vpop.xlane.xlu0 %2032
        %2034 = vadd.xlane.f32.xlu0 %v2003
        %v2035 = vpop.xlane.xlu0 %2034
        %2036 = vadd.xlane.f32.xlu0 %v2005
        %v2037 = vpop.xlane.xlu0 %2036
        %2038 = vadd.xlane.f32.xlu0 %v2007
        %v2039 = vpop.xlane.xlu0 %2038
        %2040 = vadd.xlane.f32.xlu0 %v2009
        %v2041 = vpop.xlane.xlu0 %2040
        %2042 = vadd.xlane.f32.xlu0 %v2011
        %v2043 = vpop.xlane.xlu0 %2042
        %2044 = vadd.xlane.f32.xlu0 %v2013
        %v2045 = vpop.xlane.xlu0 %2044
        %2046 = vadd.xlane.f32.xlu0 %v2015
        %v2047 = vpop.xlane.xlu0 %2046
        %v2048 = vrcp.pop %v2017
        %v2049 = vrcp.pop %v2019
        %v2050 = vrcp.pop %v2021
        %v2051 = vrcp.pop %v2023
        %v2052 = vrcp.pop %v2025
        %v2053 = vrcp.pop %v2027
        %v2054 = vrcp.pop %v2029
        %v2055 = vrcp.pop %v2031
        %v2056 = vrcp.pop %v2033
        %v2057 = vrcp.pop %v2035
        %v2058 = vrcp.pop %v2037
        %v2059 = vrcp.pop %v2039
        %v2060 = vrcp.pop %v2041
        %v2061 = vrcp.pop %v2043
        %v2062 = vrcp.pop %v2045
        %v2063 = vrcp.pop %v2047
        %v2064 = vmul.f32 %v1985, %v2048
        %v2065 = vmul.f32 %v1987, %v2049
        %v2066 = vmul.f32 %v1989, %v2050
        %v2067 = vmul.f32 %v1991, %v2051
        %v2068 = vmul.f32 %v1993, %v2052
        %v2069 = vmul.f32 %v1995, %v2053
        %v2070 = vmul.f32 %v1997, %v2054
        %v2071 = vmul.f32 %v1999, %v2055
        %v2072 = vmul.f32 %v2001, %v2056
        %v2073 = vmul.f32 %v2003, %v2057
        %v2074 = vmul.f32 %v2005, %v2058
        %v2075 = vmul.f32 %v2007, %v2059
        %v2076 = vmul.f32 %v2009, %v2060
        %v2077 = vmul.f32 %v2011, %v2061
        %v2078 = vmul.f32 %v2013, %v2062
        %v2079 = vmul.f32 %v2015, %v2063
        %2080 = vrot.lane.b32.xlu0 %v759, 64
        %v2081 = vpop.permute.xlu0 %2080
        %2082 = vrot.lane.b32.xlu0 %v762, 64
        %v2083 = vpop.permute.xlu0 %2082
        %2084 = vrot.lane.b32.xlu0 %v765, 64
        %v2085 = vpop.permute.xlu0 %2084
        %2086 = vrot.lane.b32.xlu0 %v768, 64
        %v2087 = vpop.permute.xlu0 %2086
        %2088 = vrot.lane.b32.xlu0 %v771, 64
        %v2089 = vpop.permute.xlu0 %2088
        %2090 = vrot.lane.b32.xlu0 %v774, 64
        %v2091 = vpop.permute.xlu0 %2090
        %2092 = vrot.lane.b32.xlu0 %v777, 64
        %v2093 = vpop.permute.xlu0 %2092
        %2094 = vrot.lane.b32.xlu0 %v780, 64
        %v2095 = vpop.permute.xlu0 %2094
        %2096 = vrot.lane.b32.xlu0 %v783, 64
        %v2097 = vpop.permute.xlu0 %2096
        %2098 = vrot.lane.b32.xlu0 %v786, 64
        %v2099 = vpop.permute.xlu0 %2098
        %2100 = vrot.lane.b32.xlu0 %v789, 64
        %v2101 = vpop.permute.xlu0 %2100
        %2102 = vrot.lane.b32.xlu0 %v792, 64
        %v2103 = vpop.permute.xlu0 %2102
        %2104 = vrot.lane.b32.xlu0 %v795, 64
        %v2105 = vpop.permute.xlu0 %2104
        %2106 = vrot.lane.b32.xlu0 %v798, 64
        %v2107 = vpop.permute.xlu0 %2106
        %2108 = vrot.lane.b32.xlu0 %v801, 64
        %v2109 = vpop.permute.xlu0 %2108
        %2110 = vrot.lane.b32.xlu0 %v804, 64
        %v2111 = vpop.permute.xlu0 %2110
        %2128 = vmatpush.msra.mxu0 %v2111
        %2129 = vmatpush.msra.mxu0 %v2109
        %2130 = vmatpush.msra.mxu0 %v2107
        %2131 = vmatpush.msra.mxu0 %v2105
        %2132 = vmatpush.msra.mxu0 %v2103
        %2133 = vmatpush.msra.mxu0 %v2101
        %2134 = vmatpush.msra.mxu0 %v2099
        %2135 = vmatpush.msra.mxu0 %v2097
        %2136 = vmatpush.msra.mxu0 %v2095
        %2137 = vmatpush.msra.mxu0 %v2093
        %2138 = vmatpush.msra.mxu0 %v2091
        %2139 = vmatpush.msra.mxu0 %v2089
        %2140 = vmatpush.msra.mxu0 %v2087
        %2141 = vmatpush.msra.mxu0 %v2085
        %2142 = vmatpush.msra.mxu0 %v2083
        %2143 = vmatpush.msra.mxu0 %v2081
        %2144 = vmatmul.f32.gmra.mxu0 %v2064
        %v2145 = vpop.f32.mrf.mxu0
        %v2146 = vadd.f32 0.0, %v2145
        %2147 = vmatmul.f32.gmra.mxu0 %v2065
        %v2148 = vpop.f32.mrf.mxu0
        %v2149 = vadd.f32 0.0, %v2148
        %2150 = vmatmul.f32.gmra.mxu0 %v2066
        %v2151 = vpop.f32.mrf.mxu0
        %v2152 = vadd.f32 0.0, %v2151
        %2153 = vmatmul.f32.gmra.mxu0 %v2067
        %v2154 = vpop.f32.mrf.mxu0
        %v2155 = vadd.f32 0.0, %v2154
        %2156 = vmatmul.f32.gmra.mxu0 %v2068
        %v2157 = vpop.f32.mrf.mxu0
        %v2158 = vadd.f32 0.0, %v2157
        %2159 = vmatmul.f32.gmra.mxu0 %v2069
        %v2160 = vpop.f32.mrf.mxu0
        %v2161 = vadd.f32 0.0, %v2160
        %2162 = vmatmul.f32.gmra.mxu0 %v2070
        %v2163 = vpop.f32.mrf.mxu0
        %v2164 = vadd.f32 0.0, %v2163
        %2165 = vmatmul.f32.gmra.mxu0 %v2071
        %v2166 = vpop.f32.mrf.mxu0
        %v2167 = vadd.f32 0.0, %v2166
        %2168 = vmatmul.f32.gmra.mxu0 %v2072
        %v2169 = vpop.f32.mrf.mxu0
        %v2170 = vadd.f32 0.0, %v2169
        %2171 = vmatmul.f32.gmra.mxu0 %v2073
        %v2172 = vpop.f32.mrf.mxu0
        %v2173 = vadd.f32 0.0, %v2172
        %2174 = vmatmul.f32.gmra.mxu0 %v2074
        %v2175 = vpop.f32.mrf.mxu0
        %v2176 = vadd.f32 0.0, %v2175
        %2177 = vmatmul.f32.gmra.mxu0 %v2075
        %v2178 = vpop.f32.mrf.mxu0
        %v2179 = vadd.f32 0.0, %v2178
        %2180 = vmatmul.f32.gmra.mxu0 %v2076
        %v2181 = vpop.f32.mrf.mxu0
        %v2182 = vadd.f32 0.0, %v2181
        %2183 = vmatmul.f32.gmra.mxu0 %v2077
        %v2184 = vpop.f32.mrf.mxu0
        %v2185 = vadd.f32 0.0, %v2184
        %2186 = vmatmul.f32.gmra.mxu0 %v2078
        %v2187 = vpop.f32.mrf.mxu0
        %v2188 = vadd.f32 0.0, %v2187
        %2189 = vmatmul.f32.gmra.mxu0 %v2079
        %v2190 = vpop.f32.mrf.mxu0
        %v2191 = vadd.f32 0.0, %v2190
        %2192 = vdwg.mxu0
        %2193 = vrot.lane.b32.xlu0 %v589, 32
        %v2194 = vpop.permute.xlu0 %2193
        %2195 = vrot.lane.b32.xlu0 %v592, 32
        %v2196 = vpop.permute.xlu0 %2195
        %2197 = vrot.lane.b32.xlu0 %v595, 32
        %v2198 = vpop.permute.xlu0 %2197
        %2199 = vrot.lane.b32.xlu0 %v598, 32
        %v2200 = vpop.permute.xlu0 %2199
        %2201 = vrot.lane.b32.xlu0 %v601, 32
        %v2202 = vpop.permute.xlu0 %2201
        %2203 = vrot.lane.b32.xlu0 %v604, 32
        %v2204 = vpop.permute.xlu0 %2203
        %2205 = vrot.lane.b32.xlu0 %v607, 32
        %v2206 = vpop.permute.xlu0 %2205
        %2207 = vrot.lane.b32.xlu0 %v610, 32
        %v2208 = vpop.permute.xlu0 %2207
        %2209 = vrot.lane.b32.xlu0 %v613, 32
        %v2210 = vpop.permute.xlu0 %2209
        %2211 = vrot.lane.b32.xlu0 %v616, 32
        %v2212 = vpop.permute.xlu0 %2211
        %2213 = vrot.lane.b32.xlu0 %v619, 32
        %v2214 = vpop.permute.xlu0 %2213
        %2215 = vrot.lane.b32.xlu0 %v622, 32
        %v2216 = vpop.permute.xlu0 %2215
        %2217 = vrot.lane.b32.xlu0 %v625, 32
        %v2218 = vpop.permute.xlu0 %2217
        %2219 = vrot.lane.b32.xlu0 %v628, 32
        %v2220 = vpop.permute.xlu0 %2219
        %2221 = vrot.lane.b32.xlu0 %v631, 32
        %v2222 = vpop.permute.xlu0 %2221
        %2223 = vrot.lane.b32.xlu0 %v634, 32
        %v2224 = vpop.permute.xlu0 %2223
        %2225 = vrot.lane.b32.xlu0 %v674, 32
        %v2226 = vpop.permute.xlu0 %2225
        %2227 = vrot.lane.b32.xlu0 %v677, 32
        %v2228 = vpop.permute.xlu0 %2227
        %2229 = vrot.lane.b32.xlu0 %v680, 32
        %v2230 = vpop.permute.xlu0 %2229
        %2231 = vrot.lane.b32.xlu0 %v683, 32
        %v2232 = vpop.permute.xlu0 %2231
        %2233 = vrot.lane.b32.xlu0 %v686, 32
        %v2234 = vpop.permute.xlu0 %2233
        %2235 = vrot.lane.b32.xlu0 %v689, 32
        %v2236 = vpop.permute.xlu0 %2235
        %2237 = vrot.lane.b32.xlu0 %v692, 32
        %v2238 = vpop.permute.xlu0 %2237
        %2239 = vrot.lane.b32.xlu0 %v695, 32
        %v2240 = vpop.permute.xlu0 %2239
        %2241 = vrot.lane.b32.xlu0 %v698, 32
        %v2242 = vpop.permute.xlu0 %2241
        %2243 = vrot.lane.b32.xlu0 %v701, 32
        %v2244 = vpop.permute.xlu0 %2243
        %2245 = vrot.lane.b32.xlu0 %v704, 32
        %v2246 = vpop.permute.xlu0 %2245
        %2247 = vrot.lane.b32.xlu0 %v707, 32
        %v2248 = vpop.permute.xlu0 %2247
        %2249 = vrot.lane.b32.xlu0 %v710, 32
        %v2250 = vpop.permute.xlu0 %2249
        %2251 = vrot.lane.b32.xlu0 %v713, 32
        %v2252 = vpop.permute.xlu0 %2251
        %2253 = vrot.lane.b32.xlu0 %v716, 32
        %v2254 = vpop.permute.xlu0 %2253
        %2255 = vrot.lane.b32.xlu0 %v719, 32
        %v2256 = vpop.permute.xlu0 %2255
        %v2257 = vsel %vm807, %v2194, 0
        %v2259 = vsel %vm807, %v2196, 0
        %v2261 = vsel %vm807, %v2198, 0
        %v2263 = vsel %vm807, %v2200, 0
        %v2265 = vsel %vm807, %v2202, 0
        %v2267 = vsel %vm807, %v2204, 0
        %v2269 = vsel %vm807, %v2206, 0
        %v2271 = vsel %vm807, %v2208, 0
        %v2273 = vsel %vm807, %v2210, 0
        %v2275 = vsel %vm807, %v2212, 0
        %v2277 = vsel %vm807, %v2214, 0
        %v2279 = vsel %vm807, %v2216, 0
        %v2281 = vsel %vm807, %v2218, 0
        %v2283 = vsel %vm807, %v2220, 0
        %v2285 = vsel %vm807, %v2222, 0
        %v2287 = vsel %vm807, %v2224, 0
        %v2289 = vsel %vm807, %v2226, 0
        %v2291 = vsel %vm807, %v2228, 0
        %v2293 = vsel %vm807, %v2230, 0
        %v2295 = vsel %vm807, %v2232, 0
        %v2297 = vsel %vm807, %v2234, 0
        %v2299 = vsel %vm807, %v2236, 0
        %v2301 = vsel %vm807, %v2238, 0
        %v2303 = vsel %vm807, %v2240, 0
        %v2305 = vsel %vm807, %v2242, 0
        %v2307 = vsel %vm807, %v2244, 0
        %v2309 = vsel %vm807, %v2246, 0
        %v2311 = vsel %vm807, %v2248, 0
        %v2313 = vsel %vm807, %v2250, 0
        %v2315 = vsel %vm807, %v2252, 0
        %v2317 = vsel %vm807, %v2254, 0
        %v2319 = vsel %vm807, %v2256, 0
        %2321 = vmatpush.xpose.msra.mxu0 %v2319
        %2322 = vmatpush.xpose.msra.mxu0 %v2317
        %2323 = vmatpush.xpose.msra.mxu0 %v2315
        %2324 = vmatpush.xpose.msra.mxu0 %v2313
        %2325 = vmatpush.xpose.msra.mxu0 %v2311
        %2326 = vmatpush.xpose.msra.mxu0 %v2309
        %2327 = vmatpush.xpose.msra.mxu0 %v2307
        %2328 = vmatpush.xpose.msra.mxu0 %v2305
        %2329 = vmatpush.xpose.msra.mxu0 %v2303
        %2330 = vmatpush.xpose.msra.mxu0 %v2301
        %2331 = vmatpush.xpose.msra.mxu0 %v2299
        %2332 = vmatpush.xpose.msra.mxu0 %v2297
        %2333 = vmatpush.xpose.msra.mxu0 %v2295
        %2334 = vmatpush.xpose.msra.mxu0 %v2293
        %2335 = vmatpush.xpose.msra.mxu0 %v2291
        %2336 = vmatpush.xpose.msra.mxu0 %v2289
        %2337 = vmatmul.f32.gmra.mxu0 %v2257
        %v2338 = vpop.f32.mrf.mxu0
        %v2339 = vadd.f32 0.0, %v2338
        %2340 = vmatmul.f32.gmra.mxu0 %v2259
        %v2341 = vpop.f32.mrf.mxu0
        %v2342 = vadd.f32 0.0, %v2341
        %2343 = vmatmul.f32.gmra.mxu0 %v2261
        %v2344 = vpop.f32.mrf.mxu0
        %v2345 = vadd.f32 0.0, %v2344
        %2346 = vmatmul.f32.gmra.mxu0 %v2263
        %v2347 = vpop.f32.mrf.mxu0
        %v2348 = vadd.f32 0.0, %v2347
        %2349 = vmatmul.f32.gmra.mxu0 %v2265
        %v2350 = vpop.f32.mrf.mxu0
        %v2351 = vadd.f32 0.0, %v2350
        %2352 = vmatmul.f32.gmra.mxu0 %v2267
        %v2353 = vpop.f32.mrf.mxu0
        %v2354 = vadd.f32 0.0, %v2353
        %2355 = vmatmul.f32.gmra.mxu0 %v2269
        %v2356 = vpop.f32.mrf.mxu0
        %v2357 = vadd.f32 0.0, %v2356
        %2358 = vmatmul.f32.gmra.mxu0 %v2271
        %v2359 = vpop.f32.mrf.mxu0
        %v2360 = vadd.f32 0.0, %v2359
        %2361 = vmatmul.f32.gmra.mxu0 %v2273
        %v2362 = vpop.f32.mrf.mxu0
        %v2363 = vadd.f32 0.0, %v2362
        %2364 = vmatmul.f32.gmra.mxu0 %v2275
        %v2365 = vpop.f32.mrf.mxu0
        %v2366 = vadd.f32 0.0, %v2365
        %2367 = vmatmul.f32.gmra.mxu0 %v2277
        %v2368 = vpop.f32.mrf.mxu0
        %v2369 = vadd.f32 0.0, %v2368
        %2370 = vmatmul.f32.gmra.mxu0 %v2279
        %v2371 = vpop.f32.mrf.mxu0
        %v2372 = vadd.f32 0.0, %v2371
        %2373 = vmatmul.f32.gmra.mxu0 %v2281
        %v2374 = vpop.f32.mrf.mxu0
        %v2375 = vadd.f32 0.0, %v2374
        %2376 = vmatmul.f32.gmra.mxu0 %v2283
        %v2377 = vpop.f32.mrf.mxu0
        %v2378 = vadd.f32 0.0, %v2377
        %2379 = vmatmul.f32.gmra.mxu0 %v2285
        %v2380 = vpop.f32.mrf.mxu0
        %v2381 = vadd.f32 0.0, %v2380
        %2382 = vmatmul.f32.gmra.mxu0 %v2287
        %v2383 = vpop.f32.mrf.mxu0
        %v2384 = vadd.f32 0.0, %v2383
        %2385 = vdwg.mxu0
        %v2386 = vmul.f32 %v2339, 0.17677669
        %v2387 = vmul.f32 %v2342, 0.17677669
        %v2388 = vmul.f32 %v2345, 0.17677669
        %v2389 = vmul.f32 %v2348, 0.17677669
        %v2390 = vmul.f32 %v2351, 0.17677669
        %v2391 = vmul.f32 %v2354, 0.17677669
        %v2392 = vmul.f32 %v2357, 0.17677669
        %v2393 = vmul.f32 %v2360, 0.17677669
        %v2394 = vmul.f32 %v2363, 0.17677669
        %v2395 = vmul.f32 %v2366, 0.17677669
        %v2396 = vmul.f32 %v2369, 0.17677669
        %v2397 = vmul.f32 %v2372, 0.17677669
        %v2398 = vmul.f32 %v2375, 0.17677669
        %v2399 = vmul.f32 %v2378, 0.17677669
        %v2400 = vmul.f32 %v2381, 0.17677669
        %v2401 = vmul.f32 %v2384, 0.17677669
        %v2402 = vadd.f32 %v2386, %v986
        %v2403 = vadd.f32 %v2387, %v986
        %v2404 = vadd.f32 %v2388, %v986
        %v2405 = vadd.f32 %v2389, %v986
        %v2406 = vadd.f32 %v2390, %v986
        %v2407 = vadd.f32 %v2391, %v986
        %v2408 = vadd.f32 %v2392, %v986
        %v2409 = vadd.f32 %v2393, %v986
        %v2410 = vadd.f32 %v2394, %v986
        %v2411 = vadd.f32 %v2395, %v986
        %v2412 = vadd.f32 %v2396, %v986
        %v2413 = vadd.f32 %v2397, %v986
        %v2414 = vadd.f32 %v2398, %v986
        %v2415 = vadd.f32 %v2399, %v986
        %v2416 = vadd.f32 %v2400, %v986
        %v2417 = vadd.f32 %v2401, %v986
        %2418 = vmax.xlane.f32.xlu0 %v2402
        %v2419 = vpop.xlane.xlu0 %2418
        %2420 = vmax.xlane.f32.xlu0 %v2403
        %v2421 = vpop.xlane.xlu0 %2420
        %2422 = vmax.xlane.f32.xlu0 %v2404
        %v2423 = vpop.xlane.xlu0 %2422
        %2424 = vmax.xlane.f32.xlu0 %v2405
        %v2425 = vpop.xlane.xlu0 %2424
        %2426 = vmax.xlane.f32.xlu0 %v2406
        %v2427 = vpop.xlane.xlu0 %2426
        %2428 = vmax.xlane.f32.xlu0 %v2407
        %v2429 = vpop.xlane.xlu0 %2428
        %2430 = vmax.xlane.f32.xlu0 %v2408
        %v2431 = vpop.xlane.xlu0 %2430
        %2432 = vmax.xlane.f32.xlu0 %v2409
        %v2433 = vpop.xlane.xlu0 %2432
        %2434 = vmax.xlane.f32.xlu0 %v2410
        %v2435 = vpop.xlane.xlu0 %2434
        %2436 = vmax.xlane.f32.xlu0 %v2411
        %v2437 = vpop.xlane.xlu0 %2436
        %2438 = vmax.xlane.f32.xlu0 %v2412
        %v2439 = vpop.xlane.xlu0 %2438
        %2440 = vmax.xlane.f32.xlu0 %v2413
        %v2441 = vpop.xlane.xlu0 %2440
        %2442 = vmax.xlane.f32.xlu0 %v2414
        %v2443 = vpop.xlane.xlu0 %2442
        %2444 = vmax.xlane.f32.xlu0 %v2415
        %v2445 = vpop.xlane.xlu0 %2444
        %2446 = vmax.xlane.f32.xlu0 %v2416
        %v2447 = vpop.xlane.xlu0 %2446
        %2448 = vmax.xlane.f32.xlu0 %v2417
        %v2449 = vpop.xlane.xlu0 %2448
        %v2450 = vsub.f32 %v2402, %v2419
        %v2451 = vsub.f32 %v2403, %v2421
        %v2452 = vsub.f32 %v2404, %v2423
        %v2453 = vsub.f32 %v2405, %v2425
        %v2454 = vsub.f32 %v2406, %v2427
        %v2455 = vsub.f32 %v2407, %v2429
        %v2456 = vsub.f32 %v2408, %v2431
        %v2457 = vsub.f32 %v2409, %v2433
        %v2458 = vsub.f32 %v2410, %v2435
        %v2459 = vsub.f32 %v2411, %v2437
        %v2460 = vsub.f32 %v2412, %v2439
        %v2461 = vsub.f32 %v2413, %v2441
        %v2462 = vsub.f32 %v2414, %v2443
        %v2463 = vsub.f32 %v2415, %v2445
        %v2464 = vsub.f32 %v2416, %v2447
        %v2465 = vsub.f32 %v2417, %v2449
        %v2466 = vmul.f32 %v2450, 1.442695
        %v2467 = vpow.pop %v2466
        %v2468 = vmul.f32 %v2451, 1.442695
        %v2469 = vpow.pop %v2468
        %v2470 = vmul.f32 %v2452, 1.442695
        %v2471 = vpow.pop %v2470
        %v2472 = vmul.f32 %v2453, 1.442695
        %v2473 = vpow.pop %v2472
        %v2474 = vmul.f32 %v2454, 1.442695
        %v2475 = vpow.pop %v2474
        %v2476 = vmul.f32 %v2455, 1.442695
        %v2477 = vpow.pop %v2476
        %v2478 = vmul.f32 %v2456, 1.442695
        %v2479 = vpow.pop %v2478
        %v2480 = vmul.f32 %v2457, 1.442695
        %v2481 = vpow.pop %v2480
        %v2482 = vmul.f32 %v2458, 1.442695
        %v2483 = vpow.pop %v2482
        %v2484 = vmul.f32 %v2459, 1.442695
        %v2485 = vpow.pop %v2484
        %v2486 = vmul.f32 %v2460, 1.442695
        %v2487 = vpow.pop %v2486
        %v2488 = vmul.f32 %v2461, 1.442695
        %v2489 = vpow.pop %v2488
        %v2490 = vmul.f32 %v2462, 1.442695
        %v2491 = vpow.pop %v2490
        %v2492 = vmul.f32 %v2463, 1.442695
        %v2493 = vpow.pop %v2492
        %v2494 = vmul.f32 %v2464, 1.442695
        %v2495 = vpow.pop %v2494
        %v2496 = vmul.f32 %v2465, 1.442695
        %v2497 = vpow.pop %v2496
        %2498 = vadd.xlane.f32.xlu0 %v2467
        %v2499 = vpop.xlane.xlu0 %2498
        %2500 = vadd.xlane.f32.xlu0 %v2469
        %v2501 = vpop.xlane.xlu0 %2500
        %2502 = vadd.xlane.f32.xlu0 %v2471
        %v2503 = vpop.xlane.xlu0 %2502
        %2504 = vadd.xlane.f32.xlu0 %v2473
        %v2505 = vpop.xlane.xlu0 %2504
        %2506 = vadd.xlane.f32.xlu0 %v2475
        %v2507 = vpop.xlane.xlu0 %2506
        %2508 = vadd.xlane.f32.xlu0 %v2477
        %v2509 = vpop.xlane.xlu0 %2508
        %2510 = vadd.xlane.f32.xlu0 %v2479
        %v2511 = vpop.xlane.xlu0 %2510
        %2512 = vadd.xlane.f32.xlu0 %v2481
        %v2513 = vpop.xlane.xlu0 %2512
        %2514 = vadd.xlane.f32.xlu0 %v2483
        %v2515 = vpop.xlane.xlu0 %2514
        %2516 = vadd.xlane.f32.xlu0 %v2485
        %v2517 = vpop.xlane.xlu0 %2516
        %2518 = vadd.xlane.f32.xlu0 %v2487
        %v2519 = vpop.xlane.xlu0 %2518
        %2520 = vadd.xlane.f32.xlu0 %v2489
        %v2521 = vpop.xlane.xlu0 %2520
        %2522 = vadd.xlane.f32.xlu0 %v2491
        %v2523 = vpop.xlane.xlu0 %2522
        %2524 = vadd.xlane.f32.xlu0 %v2493
        %v2525 = vpop.xlane.xlu0 %2524
        %2526 = vadd.xlane.f32.xlu0 %v2495
        %v2527 = vpop.xlane.xlu0 %2526
        %2528 = vadd.xlane.f32.xlu0 %v2497
        %v2529 = vpop.xlane.xlu0 %2528
        %v2530 = vrcp.pop %v2499
        %v2531 = vrcp.pop %v2501
        %v2532 = vrcp.pop %v2503
        %v2533 = vrcp.pop %v2505
        %v2534 = vrcp.pop %v2507
        %v2535 = vrcp.pop %v2509
        %v2536 = vrcp.pop %v2511
        %v2537 = vrcp.pop %v2513
        %v2538 = vrcp.pop %v2515
        %v2539 = vrcp.pop %v2517
        %v2540 = vrcp.pop %v2519
        %v2541 = vrcp.pop %v2521
        %v2542 = vrcp.pop %v2523
        %v2543 = vrcp.pop %v2525
        %v2544 = vrcp.pop %v2527
        %v2545 = vrcp.pop %v2529
        %v2546 = vmul.f32 %v2467, %v2530
        %v2547 = vmul.f32 %v2469, %v2531
        %v2548 = vmul.f32 %v2471, %v2532
        %v2549 = vmul.f32 %v2473, %v2533
        %v2550 = vmul.f32 %v2475, %v2534
        %v2551 = vmul.f32 %v2477, %v2535
        %v2552 = vmul.f32 %v2479, %v2536
        %v2553 = vmul.f32 %v2481, %v2537
        %v2554 = vmul.f32 %v2483, %v2538
        %v2555 = vmul.f32 %v2485, %v2539
        %v2556 = vmul.f32 %v2487, %v2540
        %v2557 = vmul.f32 %v2489, %v2541
        %v2558 = vmul.f32 %v2491, %v2542
        %v2559 = vmul.f32 %v2493, %v2543
        %v2560 = vmul.f32 %v2495, %v2544
        %v2561 = vmul.f32 %v2497, %v2545
        %2562 = vrot.lane.b32.xlu0 %v759, 32
        %v2563 = vpop.permute.xlu0 %2562
        %2564 = vrot.lane.b32.xlu0 %v762, 32
        %v2565 = vpop.permute.xlu0 %2564
        %2566 = vrot.lane.b32.xlu0 %v765, 32
        %v2567 = vpop.permute.xlu0 %2566
        %2568 = vrot.lane.b32.xlu0 %v768, 32
        %v2569 = vpop.permute.xlu0 %2568
        %2570 = vrot.lane.b32.xlu0 %v771, 32
        %v2571 = vpop.permute.xlu0 %2570
        %2572 = vrot.lane.b32.xlu0 %v774, 32
        %v2573 = vpop.permute.xlu0 %2572
        %2574 = vrot.lane.b32.xlu0 %v777, 32
        %v2575 = vpop.permute.xlu0 %2574
        %2576 = vrot.lane.b32.xlu0 %v780, 32
        %v2577 = vpop.permute.xlu0 %2576
        %2578 = vrot.lane.b32.xlu0 %v783, 32
        %v2579 = vpop.permute.xlu0 %2578
        %2580 = vrot.lane.b32.xlu0 %v786, 32
        %v2581 = vpop.permute.xlu0 %2580
        %2582 = vrot.lane.b32.xlu0 %v789, 32
        %v2583 = vpop.permute.xlu0 %2582
        %2584 = vrot.lane.b32.xlu0 %v792, 32
        %v2585 = vpop.permute.xlu0 %2584
        %2586 = vrot.lane.b32.xlu0 %v795, 32
        %v2587 = vpop.permute.xlu0 %2586
        %2588 = vrot.lane.b32.xlu0 %v798, 32
        %v2589 = vpop.permute.xlu0 %2588
        %2590 = vrot.lane.b32.xlu0 %v801, 32
        %v2591 = vpop.permute.xlu0 %2590
        %2592 = vrot.lane.b32.xlu0 %v804, 32
        %v2593 = vpop.permute.xlu0 %2592
        %2610 = vmatpush.msra.mxu0 %v2593
        %2611 = vmatpush.msra.mxu0 %v2591
        %2612 = vmatpush.msra.mxu0 %v2589
        %2613 = vmatpush.msra.mxu0 %v2587
        %2614 = vmatpush.msra.mxu0 %v2585
        %2615 = vmatpush.msra.mxu0 %v2583
        %2616 = vmatpush.msra.mxu0 %v2581
        %2617 = vmatpush.msra.mxu0 %v2579
        %2618 = vmatpush.msra.mxu0 %v2577
        %2619 = vmatpush.msra.mxu0 %v2575
        %2620 = vmatpush.msra.mxu0 %v2573
        %2621 = vmatpush.msra.mxu0 %v2571
        %2622 = vmatpush.msra.mxu0 %v2569
        %2623 = vmatpush.msra.mxu0 %v2567
        %2624 = vmatpush.msra.mxu0 %v2565
        %2625 = vmatpush.msra.mxu0 %v2563
        %2626 = vmatmul.f32.gmra.mxu0 %v2546
        %v2627 = vpop.f32.mrf.mxu0
        %v2628 = vadd.f32 0.0, %v2627
        %2629 = vmatmul.f32.gmra.mxu0 %v2547
        %v2630 = vpop.f32.mrf.mxu0
        %v2631 = vadd.f32 0.0, %v2630
        %2632 = vmatmul.f32.gmra.mxu0 %v2548
        %v2633 = vpop.f32.mrf.mxu0
        %v2634 = vadd.f32 0.0, %v2633
        %2635 = vmatmul.f32.gmra.mxu0 %v2549
        %v2636 = vpop.f32.mrf.mxu0
        %v2637 = vadd.f32 0.0, %v2636
        %2638 = vmatmul.f32.gmra.mxu0 %v2550
        %v2639 = vpop.f32.mrf.mxu0
        %v2640 = vadd.f32 0.0, %v2639
        %2641 = vmatmul.f32.gmra.mxu0 %v2551
        %v2642 = vpop.f32.mrf.mxu0
        %v2643 = vadd.f32 0.0, %v2642
        %2644 = vmatmul.f32.gmra.mxu0 %v2552
        %v2645 = vpop.f32.mrf.mxu0
        %v2646 = vadd.f32 0.0, %v2645
        %2647 = vmatmul.f32.gmra.mxu0 %v2553
        %v2648 = vpop.f32.mrf.mxu0
        %v2649 = vadd.f32 0.0, %v2648
        %2650 = vmatmul.f32.gmra.mxu0 %v2554
        %v2651 = vpop.f32.mrf.mxu0
        %v2652 = vadd.f32 0.0, %v2651
        %2653 = vmatmul.f32.gmra.mxu0 %v2555
        %v2654 = vpop.f32.mrf.mxu0
        %v2655 = vadd.f32 0.0, %v2654
        %2656 = vmatmul.f32.gmra.mxu0 %v2556
        %v2657 = vpop.f32.mrf.mxu0
        %v2658 = vadd.f32 0.0, %v2657
        %2659 = vmatmul.f32.gmra.mxu0 %v2557
        %v2660 = vpop.f32.mrf.mxu0
        %v2661 = vadd.f32 0.0, %v2660
        %2662 = vmatmul.f32.gmra.mxu0 %v2558
        %v2663 = vpop.f32.mrf.mxu0
        %v2664 = vadd.f32 0.0, %v2663
        %2665 = vmatmul.f32.gmra.mxu0 %v2559
        %v2666 = vpop.f32.mrf.mxu0
        %v2667 = vadd.f32 0.0, %v2666
        %2668 = vmatmul.f32.gmra.mxu0 %v2560
        %v2669 = vpop.f32.mrf.mxu0
        %v2670 = vadd.f32 0.0, %v2669
        %2671 = vmatmul.f32.gmra.mxu0 %v2561
        %v2672 = vpop.f32.mrf.mxu0
        %v2673 = vadd.f32 0.0, %v2672
        %2674 = vdwg.mxu0
        %2691 = vrot.lane.b32.xlu0 %v1664, 32
        %v2692 = vpop.permute.xlu0 %2691
        %2693 = vrot.lane.b32.xlu0 %v1667, 32
        %v2694 = vpop.permute.xlu0 %2693
        %2695 = vrot.lane.b32.xlu0 %v1670, 32
        %v2696 = vpop.permute.xlu0 %2695
        %2697 = vrot.lane.b32.xlu0 %v1673, 32
        %v2698 = vpop.permute.xlu0 %2697
        %2699 = vrot.lane.b32.xlu0 %v1676, 32
        %v2700 = vpop.permute.xlu0 %2699
        %2701 = vrot.lane.b32.xlu0 %v1679, 32
        %v2702 = vpop.permute.xlu0 %2701
        %2703 = vrot.lane.b32.xlu0 %v1682, 32
        %v2704 = vpop.permute.xlu0 %2703
        %2705 = vrot.lane.b32.xlu0 %v1685, 32
        %v2706 = vpop.permute.xlu0 %2705
        %2707 = vrot.lane.b32.xlu0 %v1688, 32
        %v2708 = vpop.permute.xlu0 %2707
        %2709 = vrot.lane.b32.xlu0 %v1691, 32
        %v2710 = vpop.permute.xlu0 %2709
        %2711 = vrot.lane.b32.xlu0 %v1694, 32
        %v2712 = vpop.permute.xlu0 %2711
        %2713 = vrot.lane.b32.xlu0 %v1697, 32
        %v2714 = vpop.permute.xlu0 %2713
        %2715 = vrot.lane.b32.xlu0 %v1700, 32
        %v2716 = vpop.permute.xlu0 %2715
        %2717 = vrot.lane.b32.xlu0 %v1703, 32
        %v2718 = vpop.permute.xlu0 %2717
        %2719 = vrot.lane.b32.xlu0 %v1706, 32
        %v2720 = vpop.permute.xlu0 %2719
        %2721 = vrot.lane.b32.xlu0 %v1709, 32
        %v2722 = vpop.permute.xlu0 %2721
        %2755 = vrot.lane.b32.xlu0 %v2146, 64
        %v2756 = vpop.permute.xlu0 %2755
        %2757 = vrot.lane.b32.xlu0 %v2149, 64
        %v2758 = vpop.permute.xlu0 %2757
        %2759 = vrot.lane.b32.xlu0 %v2152, 64
        %v2760 = vpop.permute.xlu0 %2759
        %2761 = vrot.lane.b32.xlu0 %v2155, 64
        %v2762 = vpop.permute.xlu0 %2761
        %2763 = vrot.lane.b32.xlu0 %v2158, 64
        %v2764 = vpop.permute.xlu0 %2763
        %2765 = vrot.lane.b32.xlu0 %v2161, 64
        %v2766 = vpop.permute.xlu0 %2765
        %2767 = vrot.lane.b32.xlu0 %v2164, 64
        %v2768 = vpop.permute.xlu0 %2767
        %2769 = vrot.lane.b32.xlu0 %v2167, 64
        %v2770 = vpop.permute.xlu0 %2769
        %2771 = vrot.lane.b32.xlu0 %v2170, 64
        %v2772 = vpop.permute.xlu0 %2771
        %2773 = vrot.lane.b32.xlu0 %v2173, 64
        %v2774 = vpop.permute.xlu0 %2773
        %2775 = vrot.lane.b32.xlu0 %v2176, 64
        %v2776 = vpop.permute.xlu0 %2775
        %2777 = vrot.lane.b32.xlu0 %v2179, 64
        %v2778 = vpop.permute.xlu0 %2777
        %2779 = vrot.lane.b32.xlu0 %v2182, 64
        %v2780 = vpop.permute.xlu0 %2779
        %2781 = vrot.lane.b32.xlu0 %v2185, 64
        %v2782 = vpop.permute.xlu0 %2781
        %2783 = vrot.lane.b32.xlu0 %v2188, 64
        %v2784 = vpop.permute.xlu0 %2783
        %2785 = vrot.lane.b32.xlu0 %v2191, 64
        %v2786 = vpop.permute.xlu0 %2785
        %2819 = vrot.lane.b32.xlu0 %v2628, 96
        %v2820 = vpop.permute.xlu0 %2819
        %2821 = vrot.lane.b32.xlu0 %v2631, 96
        %v2822 = vpop.permute.xlu0 %2821
        %2823 = vrot.lane.b32.xlu0 %v2634, 96
        %v2824 = vpop.permute.xlu0 %2823
        %2825 = vrot.lane.b32.xlu0 %v2637, 96
        %v2826 = vpop.permute.xlu0 %2825
        %2827 = vrot.lane.b32.xlu0 %v2640, 96
        %v2828 = vpop.permute.xlu0 %2827
        %2829 = vrot.lane.b32.xlu0 %v2643, 96
        %v2830 = vpop.permute.xlu0 %2829
        %2831 = vrot.lane.b32.xlu0 %v2646, 96
        %v2832 = vpop.permute.xlu0 %2831
        %2833 = vrot.lane.b32.xlu0 %v2649, 96
        %v2834 = vpop.permute.xlu0 %2833
        %2835 = vrot.lane.b32.xlu0 %v2652, 96
        %v2836 = vpop.permute.xlu0 %2835
        %2837 = vrot.lane.b32.xlu0 %v2655, 96
        %v2838 = vpop.permute.xlu0 %2837
        %2839 = vrot.lane.b32.xlu0 %v2658, 96
        %v2840 = vpop.permute.xlu0 %2839
        %2841 = vrot.lane.b32.xlu0 %v2661, 96
        %v2842 = vpop.permute.xlu0 %2841
        %2843 = vrot.lane.b32.xlu0 %v2664, 96
        %v2844 = vpop.permute.xlu0 %2843
        %2845 = vrot.lane.b32.xlu0 %v2667, 96
        %v2846 = vpop.permute.xlu0 %2845
        %2847 = vrot.lane.b32.xlu0 %v2670, 96
        %v2848 = vpop.permute.xlu0 %2847
        %2849 = vrot.lane.b32.xlu0 %v2673, 96
        %v2850 = vpop.permute.xlu0 %2849
        %v2867 = vsel %vm807, %v1166, %v2692
        %v2868 = vsel %vm807, %v1169, %v2694
        %v2869 = vsel %vm807, %v1172, %v2696
        %v2870 = vsel %vm807, %v1175, %v2698
        %v2871 = vsel %vm807, %v1178, %v2700
        %v2872 = vsel %vm807, %v1181, %v2702
        %v2873 = vsel %vm807, %v1184, %v2704
        %v2874 = vsel %vm807, %v1187, %v2706
        %v2875 = vsel %vm807, %v1190, %v2708
        %v2876 = vsel %vm807, %v1193, %v2710
        %v2877 = vsel %vm807, %v1196, %v2712
        %v2878 = vsel %vm807, %v1199, %v2714
        %v2879 = vsel %vm807, %v1202, %v2716
        %v2880 = vsel %vm807, %v1205, %v2718
        %v2881 = vsel %vm807, %v1208, %v2720
        %v2882 = vsel %vm807, %v1211, %v2722
        %vm2883 = vcmask 523264
        %v2884 = vsel %vm2883, %v2867, %v2756
        %v2885 = vsel %vm2883, %v2868, %v2758
        %v2886 = vsel %vm2883, %v2869, %v2760
        %v2887 = vsel %vm2883, %v2870, %v2762
        %v2888 = vsel %vm2883, %v2871, %v2764
        %v2889 = vsel %vm2883, %v2872, %v2766
        %v2890 = vsel %vm2883, %v2873, %v2768
        %v2891 = vsel %vm2883, %v2874, %v2770
        %v2892 = vsel %vm2883, %v2875, %v2772
        %v2893 = vsel %vm2883, %v2876, %v2774
        %v2894 = vsel %vm2883, %v2877, %v2776
        %v2895 = vsel %vm2883, %v2878, %v2778
        %v2896 = vsel %vm2883, %v2879, %v2780
        %v2897 = vsel %vm2883, %v2880, %v2782
        %v2898 = vsel %vm2883, %v2881, %v2784
        %v2899 = vsel %vm2883, %v2882, %v2786
        %vm2900 = vcmask 785408
        %v2901 = vsel %vm2900, %v2884, %v2820
        %v2902 = vsel %vm2900, %v2885, %v2822
        %v2903 = vsel %vm2900, %v2886, %v2824
        %v2904 = vsel %vm2900, %v2887, %v2826
        %v2905 = vsel %vm2900, %v2888, %v2828
        %v2906 = vsel %vm2900, %v2889, %v2830
        %v2907 = vsel %vm2900, %v2890, %v2832
        %v2908 = vsel %vm2900, %v2891, %v2834
        %v2909 = vsel %vm2900, %v2892, %v2836
        %v2910 = vsel %vm2900, %v2893, %v2838
        %v2911 = vsel %vm2900, %v2894, %v2840
        %v2912 = vsel %vm2900, %v2895, %v2842
        %v2913 = vsel %vm2900, %v2896, %v2844
        %v2914 = vsel %vm2900, %v2897, %v2846
        %v2915 = vsel %vm2900, %v2898, %v2848
        %v2916 = vsel %vm2900, %v2899, %v2850
        %v2917 = vld [vmem:[#allocation11] sm:$0xff]
        %v2918 = vld [vmem:[#allocation11 + $0x8] sm:$0xff]
        %v2919 = vld [vmem:[#allocation11 + $0x10] sm:$0xff]
        %v2920 = vld [vmem:[#allocation11 + $0x18] sm:$0xff]
        %v2921 = vld [vmem:[#allocation11 + $0x20] sm:$0xff]
        %v2922 = vld [vmem:[#allocation11 + $0x28] sm:$0xff]
        %v2923 = vld [vmem:[#allocation11 + $0x30] sm:$0xff]
        %v2924 = vld [vmem:[#allocation11 + $0x38] sm:$0xff]
        %v2925 = vld [vmem:[#allocation11 + $0x40] sm:$0xff]
        %v2926 = vld [vmem:[#allocation11 + $0x48] sm:$0xff]
        %v2927 = vld [vmem:[#allocation11 + $0x50] sm:$0xff]
        %v2928 = vld [vmem:[#allocation11 + $0x58] sm:$0xff]
        %v2929 = vld [vmem:[#allocation11 + $0x60] sm:$0xff]
        %v2930 = vld [vmem:[#allocation11 + $0x68] sm:$0xff]
        %v2931 = vld [vmem:[#allocation11 + $0x70] sm:$0xff]
        %v2932 = vld [vmem:[#allocation11 + $0x78] sm:$0xff]
        %v2933 = vld [vmem:[%s9] sm:$0x1]
        %v2935 = vperm.slane %v2933, 0
        %2937 = vmatpush.msra.mxu0 %v2932
        %2938 = vmatpush.msra.mxu0 %v2931
        %2939 = vmatpush.msra.mxu0 %v2930
        %2940 = vmatpush.msra.mxu0 %v2929
        %2941 = vmatpush.msra.mxu0 %v2928
        %2942 = vmatpush.msra.mxu0 %v2927
        %2943 = vmatpush.msra.mxu0 %v2926
        %2944 = vmatpush.msra.mxu0 %v2925
        %2945 = vmatpush.msra.mxu0 %v2924
        %2946 = vmatpush.msra.mxu0 %v2923
        %2947 = vmatpush.msra.mxu0 %v2922
        %2948 = vmatpush.msra.mxu0 %v2921
        %2949 = vmatpush.msra.mxu0 %v2920
        %2950 = vmatpush.msra.mxu0 %v2919
        %2951 = vmatpush.msra.mxu0 %v2918
        %2952 = vmatpush.msra.mxu0 %v2917
        %2953 = vmatmul.f32.gmra.mxu0 %v2901
        %v2954 = vpop.f32.mrf.mxu0
        %v2955 = vadd.f32 %v2935, %v2954
        %2956 = vmatmul.f32.gmra.mxu0 %v2902
        %v2957 = vpop.f32.mrf.mxu0
        %v2958 = vadd.f32 %v2935, %v2957
        %2959 = vmatmul.f32.gmra.mxu0 %v2903
        %v2960 = vpop.f32.mrf.mxu0
        %v2961 = vadd.f32 %v2935, %v2960
        %2962 = vmatmul.f32.gmra.mxu0 %v2904
        %v2963 = vpop.f32.mrf.mxu0
        %v2964 = vadd.f32 %v2935, %v2963
        %2965 = vmatmul.f32.gmra.mxu0 %v2905
        %v2966 = vpop.f32.mrf.mxu0
        %v2967 = vadd.f32 %v2935, %v2966
        %2968 = vmatmul.f32.gmra.mxu0 %v2906
        %v2969 = vpop.f32.mrf.mxu0
        %v2970 = vadd.f32 %v2935, %v2969
        %2971 = vmatmul.f32.gmra.mxu0 %v2907
        %v2972 = vpop.f32.mrf.mxu0
        %v2973 = vadd.f32 %v2935, %v2972
        %2974 = vmatmul.f32.gmra.mxu0 %v2908
        %v2975 = vpop.f32.mrf.mxu0
        %v2976 = vadd.f32 %v2935, %v2975
        %2977 = vmatmul.f32.gmra.mxu0 %v2909
        %v2978 = vpop.f32.mrf.mxu0
        %v2979 = vadd.f32 %v2935, %v2978
        %2980 = vmatmul.f32.gmra.mxu0 %v2910
        %v2981 = vpop.f32.mrf.mxu0
        %v2982 = vadd.f32 %v2935, %v2981
        %2983 = vmatmul.f32.gmra.mxu0 %v2911
        %v2984 = vpop.f32.mrf.mxu0
        %v2985 = vadd.f32 %v2935, %v2984
        %2986 = vmatmul.f32.gmra.mxu0 %v2912
        %v2987 = vpop.f32.mrf.mxu0
        %v2988 = vadd.f32 %v2935, %v2987
        %2989 = vmatmul.f32.gmra.mxu0 %v2913
        %v2990 = vpop.f32.mrf.mxu0
        %v2991 = vadd.f32 %v2935, %v2990
        %2992 = vmatmul.f32.gmra.mxu0 %v2914
        %v2993 = vpop.f32.mrf.mxu0
        %v2994 = vadd.f32 %v2935, %v2993
        %2995 = vmatmul.f32.gmra.mxu0 %v2915
        %v2996 = vpop.f32.mrf.mxu0
        %v2997 = vadd.f32 %v2935, %v2996
        %2998 = vmatmul.f32.gmra.mxu0 %v2916
        %v2999 = vpop.f32.mrf.mxu0
        %v3000 = vadd.f32 %v2935, %v2999
        %3001 = vdwg.mxu0
        %v3002 = vadd.f32 %v2955, %v535
        %v3003 = vadd.f32 %v2958, %v536
        %v3004 = vadd.f32 %v2961, %v537
        %v3005 = vadd.f32 %v2964, %v538
        %v3006 = vadd.f32 %v2967, %v539
        %v3007 = vadd.f32 %v2970, %v540
        %v3008 = vadd.f32 %v2973, %v541
        %v3009 = vadd.f32 %v2976, %v542
        %v3010 = vadd.f32 %v2979, %v543
        %v3011 = vadd.f32 %v2982, %v544
        %v3012 = vadd.f32 %v2985, %v545
        %v3013 = vadd.f32 %v2988, %v546
        %v3014 = vadd.f32 %v2991, %v547
        %v3015 = vadd.f32 %v2994, %v548
        %v3016 = vadd.f32 %v2997, %v549
        %v3017 = vadd.f32 %v3000, %v550
        %3018 = vadd.xlane.f32.xlu0 %v3002
        %v3019 = vpop.xlane.xlu0 %3018
        %3020 = vadd.xlane.f32.xlu0 %v3003
        %v3021 = vpop.xlane.xlu0 %3020
        %3022 = vadd.xlane.f32.xlu0 %v3004
        %v3023 = vpop.xlane.xlu0 %3022
        %3024 = vadd.xlane.f32.xlu0 %v3005
        %v3025 = vpop.xlane.xlu0 %3024
        %3026 = vadd.xlane.f32.xlu0 %v3006
        %v3027 = vpop.xlane.xlu0 %3026
        %3028 = vadd.xlane.f32.xlu0 %v3007
        %v3029 = vpop.xlane.xlu0 %3028
        %3030 = vadd.xlane.f32.xlu0 %v3008
        %v3031 = vpop.xlane.xlu0 %3030
        %3032 = vadd.xlane.f32.xlu0 %v3009
        %v3033 = vpop.xlane.xlu0 %3032
        %3034 = vadd.xlane.f32.xlu0 %v3010
        %v3035 = vpop.xlane.xlu0 %3034
        %3036 = vadd.xlane.f32.xlu0 %v3011
        %v3037 = vpop.xlane.xlu0 %3036
        %3038 = vadd.xlane.f32.xlu0 %v3012
        %v3039 = vpop.xlane.xlu0 %3038
        %3040 = vadd.xlane.f32.xlu0 %v3013
        %v3041 = vpop.xlane.xlu0 %3040
        %3042 = vadd.xlane.f32.xlu0 %v3014
        %v3043 = vpop.xlane.xlu0 %3042
        %3044 = vadd.xlane.f32.xlu0 %v3015
        %v3045 = vpop.xlane.xlu0 %3044
        %3046 = vadd.xlane.f32.xlu0 %v3016
        %v3047 = vpop.xlane.xlu0 %3046
        %3048 = vadd.xlane.f32.xlu0 %v3017
        %v3049 = vpop.xlane.xlu0 %3048
        %v3050 = vrcp.pop 128.0
        %v3051 = vmul.f32 128.0, %v3050
        %v3052 = vsub.f32 1.0, %v3051
        %v3053 = vmul.f32 %v3050, %v3052
        %v3054 = vadd.f32 %v3050, %v3053
        %vm3055 = vweird.f32 %v3050
        %v3056 = vsel %vm3055, %v3050, %v3054
        %v3057 = vmul.f32 %v3019, %v3056
        %v3058 = vmul.f32 %v3021, %v3056
        %v3059 = vmul.f32 %v3023, %v3056
        %v3060 = vmul.f32 %v3025, %v3056
        %v3061 = vmul.f32 %v3027, %v3056
        %v3062 = vmul.f32 %v3029, %v3056
        %v3063 = vmul.f32 %v3031, %v3056
        %v3064 = vmul.f32 %v3033, %v3056
        %v3065 = vmul.f32 %v3035, %v3056
        %v3066 = vmul.f32 %v3037, %v3056
        %v3067 = vmul.f32 %v3039, %v3056
        %v3068 = vmul.f32 %v3041, %v3056
        %v3069 = vmul.f32 %v3043, %v3056
        %v3070 = vmul.f32 %v3045, %v3056
        %v3071 = vmul.f32 %v3047, %v3056
        %v3072 = vmul.f32 %v3049, %v3056
        %v3073 = vsub.f32 %v3002, %v3057
        %v3074 = vsub.f32 %v3003, %v3058
        %v3075 = vsub.f32 %v3004, %v3059
        %v3076 = vsub.f32 %v3005, %v3060
        %v3077 = vsub.f32 %v3006, %v3061
        %v3078 = vsub.f32 %v3007, %v3062
        %v3079 = vsub.f32 %v3008, %v3063
        %v3080 = vsub.f32 %v3009, %v3064
        %v3081 = vsub.f32 %v3010, %v3065
        %v3082 = vsub.f32 %v3011, %v3066
        %v3083 = vsub.f32 %v3012, %v3067
        %v3084 = vsub.f32 %v3013, %v3068
        %v3085 = vsub.f32 %v3014, %v3069
        %v3086 = vsub.f32 %v3015, %v3070
        %v3087 = vsub.f32 %v3016, %v3071
        %v3088 = vsub.f32 %v3017, %v3072
        %v3089 = vmul.f32 %v3073, %v3073
        %v3090 = vmul.f32 %v3074, %v3074
        %v3091 = vmul.f32 %v3075, %v3075
        %v3092 = vmul.f32 %v3076, %v3076
        %v3093 = vmul.f32 %v3077, %v3077
        %v3094 = vmul.f32 %v3078, %v3078
        %v3095 = vmul.f32 %v3079, %v3079
        %v3096 = vmul.f32 %v3080, %v3080
        %v3097 = vmul.f32 %v3081, %v3081
        %v3098 = vmul.f32 %v3082, %v3082
        %v3099 = vmul.f32 %v3083, %v3083
        %v3100 = vmul.f32 %v3084, %v3084
        %v3101 = vmul.f32 %v3085, %v3085
        %v3102 = vmul.f32 %v3086, %v3086
        %v3103 = vmul.f32 %v3087, %v3087
        %v3104 = vmul.f32 %v3088, %v3088
        %3105 = vadd.xlane.f32.xlu0 %v3089
        %v3106 = vpop.xlane.xlu0 %3105
        %3107 = vadd.xlane.f32.xlu0 %v3090
        %v3108 = vpop.xlane.xlu0 %3107
        %3109 = vadd.xlane.f32.xlu0 %v3091
        %v3110 = vpop.xlane.xlu0 %3109
        %3111 = vadd.xlane.f32.xlu0 %v3092
        %v3112 = vpop.xlane.xlu0 %3111
        %3113 = vadd.xlane.f32.xlu0 %v3093
        %v3114 = vpop.xlane.xlu0 %3113
        %3115 = vadd.xlane.f32.xlu0 %v3094
        %v3116 = vpop.xlane.xlu0 %3115
        %3117 = vadd.xlane.f32.xlu0 %v3095
        %v3118 = vpop.xlane.xlu0 %3117
        %3119 = vadd.xlane.f32.xlu0 %v3096
        %v3120 = vpop.xlane.xlu0 %3119
        %3121 = vadd.xlane.f32.xlu0 %v3097
        %v3122 = vpop.xlane.xlu0 %3121
        %3123 = vadd.xlane.f32.xlu0 %v3098
        %v3124 = vpop.xlane.xlu0 %3123
        %3125 = vadd.xlane.f32.xlu0 %v3099
        %v3126 = vpop.xlane.xlu0 %3125
        %3127 = vadd.xlane.f32.xlu0 %v3100
        %v3128 = vpop.xlane.xlu0 %3127
        %3129 = vadd.xlane.f32.xlu0 %v3101
        %v3130 = vpop.xlane.xlu0 %3129
        %3131 = vadd.xlane.f32.xlu0 %v3102
        %v3132 = vpop.xlane.xlu0 %3131
        %3133 = vadd.xlane.f32.xlu0 %v3103
        %v3134 = vpop.xlane.xlu0 %3133
        %3135 = vadd.xlane.f32.xlu0 %v3104
        %v3136 = vpop.xlane.xlu0 %3135
        %v3137 = vmul.f32 %v3106, %v3056
        %v3138 = vmul.f32 %v3108, %v3056
        %v3139 = vmul.f32 %v3110, %v3056
        %v3140 = vmul.f32 %v3112, %v3056
        %v3141 = vmul.f32 %v3114, %v3056
        %v3142 = vmul.f32 %v3116, %v3056
        %v3143 = vmul.f32 %v3118, %v3056
        %v3144 = vmul.f32 %v3120, %v3056
        %v3145 = vmul.f32 %v3122, %v3056
        %v3146 = vmul.f32 %v3124, %v3056
        %v3147 = vmul.f32 %v3126, %v3056
        %v3148 = vmul.f32 %v3128, %v3056
        %v3149 = vmul.f32 %v3130, %v3056
        %v3150 = vmul.f32 %v3132, %v3056
        %v3151 = vmul.f32 %v3134, %v3056
        %v3152 = vmul.f32 %v3136, %v3056
        %v3153 = vadd.f32 %v3137, 1e-05
        %v3154 = vadd.f32 %v3138, 1e-05
        %v3155 = vadd.f32 %v3139, 1e-05
        %v3156 = vadd.f32 %v3140, 1e-05
        %v3157 = vadd.f32 %v3141, 1e-05
        %v3158 = vadd.f32 %v3142, 1e-05
        %v3159 = vadd.f32 %v3143, 1e-05
        %v3160 = vadd.f32 %v3144, 1e-05
        %v3161 = vadd.f32 %v3145, 1e-05
        %v3162 = vadd.f32 %v3146, 1e-05
        %v3163 = vadd.f32 %v3147, 1e-05
        %v3164 = vadd.f32 %v3148, 1e-05
        %v3165 = vadd.f32 %v3149, 1e-05
        %v3166 = vadd.f32 %v3150, 1e-05
        %v3167 = vadd.f32 %v3151, 1e-05
        %v3168 = vadd.f32 %v3152, 1e-05
        %v3169 = vrsqrt.pop %v3153
        %v3170 = vmul.f32 %v3169, %v3153
        %v3171 = vmul.f32 %v3170, %v3169
        %v3172 = vmul.f32 0.5, %v3171
        %v3173 = vsub.f32 1.5, %v3172
        %v3174 = vmul.f32 %v3169, %v3173
        %vm3175 = vweird.f32 %v3153
        %vm3176 = vweird.f32 %v3169
        %vm3177 = vmor %vm3175, %vm3176
        %v3178 = vsel %vm3177, %v3169, %v3174
        %v3179 = vrsqrt.pop %v3154
        %v3180 = vmul.f32 %v3179, %v3154
        %v3181 = vmul.f32 %v3180, %v3179
        %v3182 = vmul.f32 0.5, %v3181
        %v3183 = vsub.f32 1.5, %v3182
        %v3184 = vmul.f32 %v3179, %v3183
        %vm3185 = vweird.f32 %v3154
        %vm3186 = vweird.f32 %v3179
        %vm3187 = vmor %vm3185, %vm3186
        %v3188 = vsel %vm3187, %v3179, %v3184
        %v3189 = vrsqrt.pop %v3155
        %v3190 = vmul.f32 %v3189, %v3155
        %v3191 = vmul.f32 %v3190, %v3189
        %v3192 = vmul.f32 0.5, %v3191
        %v3193 = vsub.f32 1.5, %v3192
        %v3194 = vmul.f32 %v3189, %v3193
        %vm3195 = vweird.f32 %v3155
        %vm3196 = vweird.f32 %v3189
        %vm3197 = vmor %vm3195, %vm3196
        %v3198 = vsel %vm3197, %v3189, %v3194
        %v3199 = vrsqrt.pop %v3156
        %v3200 = vmul.f32 %v3199, %v3156
        %v3201 = vmul.f32 %v3200, %v3199
        %v3202 = vmul.f32 0.5, %v3201
        %v3203 = vsub.f32 1.5, %v3202
        %v3204 = vmul.f32 %v3199, %v3203
        %vm3205 = vweird.f32 %v3156
        %vm3206 = vweird.f32 %v3199
        %vm3207 = vmor %vm3205, %vm3206
        %v3208 = vsel %vm3207, %v3199, %v3204
        %v3209 = vrsqrt.pop %v3157
        %v3210 = vmul.f32 %v3209, %v3157
        %v3211 = vmul.f32 %v3210, %v3209
        %v3212 = vmul.f32 0.5, %v3211
        %v3213 = vsub.f32 1.5, %v3212
        %v3214 = vmul.f32 %v3209, %v3213
        %vm3215 = vweird.f32 %v3157
        %vm3216 = vweird.f32 %v3209
        %vm3217 = vmor %vm3215, %vm3216
        %v3218 = vsel %vm3217, %v3209, %v3214
        %v3219 = vrsqrt.pop %v3158
        %v3220 = vmul.f32 %v3219, %v3158
        %v3221 = vmul.f32 %v3220, %v3219
        %v3222 = vmul.f32 0.5, %v3221
        %v3223 = vsub.f32 1.5, %v3222
        %v3224 = vmul.f32 %v3219, %v3223
        %vm3225 = vweird.f32 %v3158
        %vm3226 = vweird.f32 %v3219
        %vm3227 = vmor %vm3225, %vm3226
        %v3228 = vsel %vm3227, %v3219, %v3224
        %v3229 = vrsqrt.pop %v3159
        %v3230 = vmul.f32 %v3229, %v3159
        %v3231 = vmul.f32 %v3230, %v3229
        %v3232 = vmul.f32 0.5, %v3231
        %v3233 = vsub.f32 1.5, %v3232
        %v3234 = vmul.f32 %v3229, %v3233
        %vm3235 = vweird.f32 %v3159
        %vm3236 = vweird.f32 %v3229
        %vm3237 = vmor %vm3235, %vm3236
        %v3238 = vsel %vm3237, %v3229, %v3234
        %v3239 = vrsqrt.pop %v3160
        %v3240 = vmul.f32 %v3239, %v3160
        %v3241 = vmul.f32 %v3240, %v3239
        %v3242 = vmul.f32 0.5, %v3241
        %v3243 = vsub.f32 1.5, %v3242
        %v3244 = vmul.f32 %v3239, %v3243
        %vm3245 = vweird.f32 %v3160
        %vm3246 = vweird.f32 %v3239
        %vm3247 = vmor %vm3245, %vm3246
        %v3248 = vsel %vm3247, %v3239, %v3244
        %v3249 = vrsqrt.pop %v3161
        %v3250 = vmul.f32 %v3249, %v3161
        %v3251 = vmul.f32 %v3250, %v3249
        %v3252 = vmul.f32 0.5, %v3251
        %v3253 = vsub.f32 1.5, %v3252
        %v3254 = vmul.f32 %v3249, %v3253
        %vm3255 = vweird.f32 %v3161
        %vm3256 = vweird.f32 %v3249
        %vm3257 = vmor %vm3255, %vm3256
        %v3258 = vsel %vm3257, %v3249, %v3254
        %v3259 = vrsqrt.pop %v3162
        %v3260 = vmul.f32 %v3259, %v3162
        %v3261 = vmul.f32 %v3260, %v3259
        %v3262 = vmul.f32 0.5, %v3261
        %v3263 = vsub.f32 1.5, %v3262
        %v3264 = vmul.f32 %v3259, %v3263
        %vm3265 = vweird.f32 %v3162
        %vm3266 = vweird.f32 %v3259
        %vm3267 = vmor %vm3265, %vm3266
        %v3268 = vsel %vm3267, %v3259, %v3264
        %v3269 = vrsqrt.pop %v3163
        %v3270 = vmul.f32 %v3269, %v3163
        %v3271 = vmul.f32 %v3270, %v3269
        %v3272 = vmul.f32 0.5, %v3271
        %v3273 = vsub.f32 1.5, %v3272
        %v3274 = vmul.f32 %v3269, %v3273
        %vm3275 = vweird.f32 %v3163
        %vm3276 = vweird.f32 %v3269
        %vm3277 = vmor %vm3275, %vm3276
        %v3278 = vsel %vm3277, %v3269, %v3274
        %v3279 = vrsqrt.pop %v3164
        %v3280 = vmul.f32 %v3279, %v3164
        %v3281 = vmul.f32 %v3280, %v3279
        %v3282 = vmul.f32 0.5, %v3281
        %v3283 = vsub.f32 1.5, %v3282
        %v3284 = vmul.f32 %v3279, %v3283
        %vm3285 = vweird.f32 %v3164
        %vm3286 = vweird.f32 %v3279
        %vm3287 = vmor %vm3285, %vm3286
        %v3288 = vsel %vm3287, %v3279, %v3284
        %v3289 = vrsqrt.pop %v3165
        %v3290 = vmul.f32 %v3289, %v3165
        %v3291 = vmul.f32 %v3290, %v3289
        %v3292 = vmul.f32 0.5, %v3291
        %v3293 = vsub.f32 1.5, %v3292
        %v3294 = vmul.f32 %v3289, %v3293
        %vm3295 = vweird.f32 %v3165
        %vm3296 = vweird.f32 %v3289
        %vm3297 = vmor %vm3295, %vm3296
        %v3298 = vsel %vm3297, %v3289, %v3294
        %v3299 = vrsqrt.pop %v3166
        %v3300 = vmul.f32 %v3299, %v3166
        %v3301 = vmul.f32 %v3300, %v3299
        %v3302 = vmul.f32 0.5, %v3301
        %v3303 = vsub.f32 1.5, %v3302
        %v3304 = vmul.f32 %v3299, %v3303
        %vm3305 = vweird.f32 %v3166
        %vm3306 = vweird.f32 %v3299
        %vm3307 = vmor %vm3305, %vm3306
        %v3308 = vsel %vm3307, %v3299, %v3304
        %v3309 = vrsqrt.pop %v3167
        %v3310 = vmul.f32 %v3309, %v3167
        %v3311 = vmul.f32 %v3310, %v3309
        %v3312 = vmul.f32 0.5, %v3311
        %v3313 = vsub.f32 1.5, %v3312
        %v3314 = vmul.f32 %v3309, %v3313
        %vm3315 = vweird.f32 %v3167
        %vm3316 = vweird.f32 %v3309
        %vm3317 = vmor %vm3315, %vm3316
        %v3318 = vsel %vm3317, %v3309, %v3314
        %v3319 = vrsqrt.pop %v3168
        %v3320 = vmul.f32 %v3319, %v3168
        %v3321 = vmul.f32 %v3320, %v3319
        %v3322 = vmul.f32 0.5, %v3321
        %v3323 = vsub.f32 1.5, %v3322
        %v3324 = vmul.f32 %v3319, %v3323
        %vm3325 = vweird.f32 %v3168
        %vm3326 = vweird.f32 %v3319
        %vm3327 = vmor %vm3325, %vm3326
        %v3328 = vsel %vm3327, %v3319, %v3324
        %v3329 = vmul.f32 %v3073, %v3178
        %v3330 = vmul.f32 %v3074, %v3188
        %v3331 = vmul.f32 %v3075, %v3198
        %v3332 = vmul.f32 %v3076, %v3208
        %v3333 = vmul.f32 %v3077, %v3218
        %v3334 = vmul.f32 %v3078, %v3228
        %v3335 = vmul.f32 %v3079, %v3238
        %v3336 = vmul.f32 %v3080, %v3248
        %v3337 = vmul.f32 %v3081, %v3258
        %v3338 = vmul.f32 %v3082, %v3268
        %v3339 = vmul.f32 %v3083, %v3278
        %v3340 = vmul.f32 %v3084, %v3288
        %v3341 = vmul.f32 %v3085, %v3298
        %v3342 = vmul.f32 %v3086, %v3308
        %v3343 = vmul.f32 %v3087, %v3318
        %v3344 = vmul.f32 %v3088, %v3328
        %v3345 = vld [vmem:[%s10] sm:$0x1]
        %v3347 = vperm.slane %v3345, 0
        %v3349 = vmul.f32 %v3329, %v3347
        %v3350 = vmul.f32 %v3330, %v3347
        %v3351 = vmul.f32 %v3331, %v3347
        %v3352 = vmul.f32 %v3332, %v3347
        %v3353 = vmul.f32 %v3333, %v3347
        %v3354 = vmul.f32 %v3334, %v3347
        %v3355 = vmul.f32 %v3335, %v3347
        %v3356 = vmul.f32 %v3336, %v3347
        %v3357 = vmul.f32 %v3337, %v3347
        %v3358 = vmul.f32 %v3338, %v3347
        %v3359 = vmul.f32 %v3339, %v3347
        %v3360 = vmul.f32 %v3340, %v3347
        %v3361 = vmul.f32 %v3341, %v3347
        %v3362 = vmul.f32 %v3342, %v3347
        %v3363 = vmul.f32 %v3343, %v3347
        %v3364 = vmul.f32 %v3344, %v3347
        %v3365 = vld [vmem:[%s11] sm:$0x1]
        %v3367 = vperm.slane %v3365, 0
        %v3369 = vadd.f32 %v3349, %v3367
        %v3370 = vadd.f32 %v3350, %v3367
        %v3371 = vadd.f32 %v3351, %v3367
        %v3372 = vadd.f32 %v3352, %v3367
        %v3373 = vadd.f32 %v3353, %v3367
        %v3374 = vadd.f32 %v3354, %v3367
        %v3375 = vadd.f32 %v3355, %v3367
        %v3376 = vadd.f32 %v3356, %v3367
        %v3377 = vadd.f32 %v3357, %v3367
        %v3378 = vadd.f32 %v3358, %v3367
        %v3379 = vadd.f32 %v3359, %v3367
        %v3380 = vadd.f32 %v3360, %v3367
        %v3381 = vadd.f32 %v3361, %v3367
        %v3382 = vadd.f32 %v3362, %v3367
        %v3383 = vadd.f32 %v3363, %v3367
        %v3384 = vadd.f32 %v3364, %v3367
        %3385 = vst [vmem:[%s534] sm:$0xff] %v3369
        %3386 = vst [vmem:[%s534 + $0x8] sm:$0xff] %v3370
        %3387 = vst [vmem:[%s534 + $0x10] sm:$0xff] %v3371
        %3388 = vst [vmem:[%s534 + $0x18] sm:$0xff] %v3372
        %3389 = vst [vmem:[%s534 + $0x20] sm:$0xff] %v3373
        %3390 = vst [vmem:[%s534 + $0x28] sm:$0xff] %v3374
        %3391 = vst [vmem:[%s534 + $0x30] sm:$0xff] %v3375
        %3392 = vst [vmem:[%s534 + $0x38] sm:$0xff] %v3376
        %3393 = vst [vmem:[%s534 + $0x40] sm:$0xff] %v3377
        %3394 = vst [vmem:[%s534 + $0x48] sm:$0xff] %v3378
        %3395 = vst [vmem:[%s534 + $0x50] sm:$0xff] %v3379
        %3396 = vst [vmem:[%s534 + $0x58] sm:$0xff] %v3380
        %3397 = vst [vmem:[%s534 + $0x60] sm:$0xff] %v3381
        %3398 = vst [vmem:[%s534 + $0x68] sm:$0xff] %v3382
        %3399 = vst [vmem:[%s534 + $0x70] sm:$0xff] %v3383
        %3400 = vst [vmem:[%s534 + $0x78] sm:$0xff] %v3384
        %s3401 = sand.u32 %s304, 1
        %s3402 = scalar_lea.sflag [#allocation4], %s3401
        %s3403 = sand.u32 %s304, 1
        %s3404 = smul.addr %s3403, 128
        %s3405 = scalar_lea.vmem [#allocation13], %s3404
        // Predicated region
        $region93: #{tpu_custom_call.1} parent=67 // pred_check
          %p3406 = pneg %p314
        $region94: #{tpu_custom_call.1} parent=67 // pred_check_branch
          %3408 = sbr.rel (%p3406) target = $region96
        $region95: #{tpu_custom_call.1} parent=67 // pred_region
          %3410 = vsyncadd %s3402, 0
          %s3411 = smul.addr %s34, 16
          %s3412 = smul.addr %s3411, 8
          %s3413 = scalar_lea.hbm %s12, %s3412
          %s3414 = sshll.u32 %s3405, 4
          %s3415 = int_to_ptr.vmem [resolvable:$true] %s3414
          %s3416 = sshll.u32 %s3413, 4
          %s3417 = int_to_ptr.hbm [resolvable:$true] %s3416
          %3422 = dma.vmem_to_hbm [thread:$0]  %s3415, 2048, %s3417, %s3402, 128, 128, 8
        $region96: #{tpu_custom_call.1} parent=67 // pred_fallthru
          _
      $region68: #{tpu_custom_call.1} parent=5 // pred_fallthru
        _
      %p3423 = scmp.le.s32.totalorder 2, %s29
      // Predicated region
      $region97: #{tpu_custom_call.1} parent=5 // pred_check
        %p3424 = pneg %p3423
      $region98: #{tpu_custom_call.1} parent=5 // pred_check_branch
        %3426 = sbr.rel (%p3424) target = $region100
      $region99: #{tpu_custom_call.1} parent=5 // pred_region
        %s3427 = ssub.s32 %s29, 2
        // Predicated region
        $region101: #{tpu_custom_call.1} parent=99 // pred_check
          %p3428 = pneg %p320
        $region102: #{tpu_custom_call.1} parent=99 // pred_check_branch
          %3430 = sbr.rel (%p3428) target = $region104
        $region103: #{tpu_custom_call.1} parent=99 // pred_region
          %s3431 = sand.u32 %s305, 1
          %s3432 = scalar_lea.sflag [#allocation4], %s3431
          %s3433 = sand.u32 %s305, 1
          %s3434 = smul.addr %s3433, 128
          %s3435 = scalar_lea.vmem [#allocation13], %s3434
          %3437 = dma.done %s3432, 2048
        $region104: #{tpu_custom_call.1} parent=99 // pred_fallthru
          _
      $region100: #{tpu_custom_call.1} parent=5 // pred_fallthru
        _
    $region6: #{tpu_custom_call.1} parent=1 // loop_footer
      %s33 = sadd.s32 1, %s29
    $region7: #{tpu_custom_call.1} parent=1 // loop_footer_branch
      %28 = sbr.rel target = $region3
    $region8: #{tpu_custom_call.1} parent=1 // loop_exit
      _
    %3438 = vsyncpa [#allocation3], 1
    %s3439 = scalar_lea.sflag [#allocation3], 1
    %3440 = vsyncpa %s3439, 1
    %3441 = vsyncpa [#allocation6], 1
    %s3442 = scalar_lea.sflag [#allocation6], 1
    %3443 = vsyncpa %s3442, 1
    %3444 = vsyncpa [#allocation9], 1
    %3445 = vsyncpa [#allocation12], 1
    %3446 = vsyncpa [#allocation4], 1
    %s3447 = scalar_lea.sflag [#allocation4], 1
    %3448 = vsyncpa %s3447, 1

</llo_original>
